<compile_context>
chip_gen: v6e
topology: v6e:2x2x1
jax: 0.10.0
libtpu: 0.0.40
codegen_flags: <defaults>
</compile_context>

<pallas_src>
import functools

import jax
import jax.numpy as jnp
from jax import lax
from jax.experimental import pallas as pl
from jax.experimental.pallas import tpu as pltpu

EPS = 1.1920928955078125e-07  # torch.finfo(torch.float32).eps (F.rms_norm default)
ATTN_SCALE = 0.12
NEG_BIG = -1e30               # large finite negative (avoids -inf NaN corner cases)
VMEM_LIMIT = 64 * 1024 * 1024


def _rms_norm(v):
    return v * lax.rsqrt(jnp.mean(v * v, axis=-1, keepdims=True) + EPS)


def _swap_halves(u):
    # [u1, u2] -> [u2, u1] along the last dim (static slices + concat; portable
    # replacement for a half-width roll).
    d = u.shape[-1]
    return jnp.concatenate([u[:, d // 2:], u[:, :d // 2]], axis=-1)


# --------------------------------------------------------------------------- #
# Kernel 1: residual mix + rms_norm + QKV + per-head (rms_norm, rotary) + v mix
# --------------------------------------------------------------------------- #
def _prep_kernel(*refs, num_heads, head_dim, has_v1):
    if has_v1:
        (scal_ref, x_ref, x0_ref, v1_ref, cosf_ref, sins_ref, qkvT_ref,
         xmix_ref, q_out, k_out, vmix_out) = refs
    else:
        (scal_ref, x_ref, x0_ref, cosf_ref, sins_ref, qkvT_ref,
         xmix_ref, q_out, k_out, vmix_out) = refs
        v1_ref = None

    H, Dh = num_heads, head_dim
    HDh = H * Dh
    f32, bf16 = jnp.float32, jnp.bfloat16

    lam0 = scal_ref[0]
    lam1 = scal_ref[1]
    lamb = scal_ref[2]

    # x = lambdas[0] * x + lambdas[1] * x0   (residual path kept in f32)
    x = lam0 * x_ref[...].astype(f32) + lam1 * x0_ref[...].astype(f32)
    xmix_ref[...] = x
    xn = _rms_norm(x)

    # QKV projection: bf16 operands on the MXU, f32 accumulation.
    qkv = jnp.dot(xn.astype(bf16), qkvT_ref[...],
                  preferred_element_type=f32)            # (tq, 3*H*Dh)

    cosf = cosf_ref[...]   # (tq, Dh) = [cos, cos]
    sins = sins_ref[...]   # (tq, Dh) = [sin, -sin]

    def rope(u):
        return u * cosf + _swap_halves(u) * sins

    # H is small and this loop runs once per token tile (not per KV step), so
    # static unrolling keeps vreg pressure modest.  The attention hot loop is
    # fully head-batched (no per-head Python loop there).
    for h in range(H):
        lo, hi = h * Dh, (h + 1) * Dh
        q_h = rope(_rms_norm(qkv[:, lo:hi]))
        k_h = rope(_rms_norm(qkv[:, HDh + lo:HDh + hi]))
        v_h = qkv[:, 2 * HDh + lo:2 * HDh + hi]
        q_out[h] = q_h.astype(bf16)
        k_out[h] = k_h.astype(bf16)
        if has_v1:
            v_h = (1.0 - lamb) * v_h + lamb * v1_ref[:, lo:hi].astype(f32)
        # v1 is None  ->  v_mix = (1-l)*v + l*v = v, nothing to mix.
        vmix_out[h] = v_h.astype(bf16)


# --------------------------------------------------------------------------- #
# Kernel 2: flash attention (causal) + fused output proj + residual + MLP
# --------------------------------------------------------------------------- #
def _attn_mlp_kernel(xmix_ref, q_ref, k_ref, v_ref, projT_ref, fcT_ref, mlpT_ref,
                     x_out_ref, acc_sc, m_sc, l_sc, *, num_heads, tq, tk):
    H = num_heads
    qi = pl.program_id(0)
    kj = pl.program_id(1)
    f32, bf16 = jnp.float32, jnp.bfloat16

    @pl.when(kj == 0)
    def _init():
        acc_sc[...] = jnp.zeros_like(acc_sc)
        m_sc[...] = jnp.full_like(m_sc, NEG_BIG)
        l_sc[...] = jnp.zeros_like(l_sc)

    # KV tiles entirely above the causal diagonal contribute nothing; their
    # index_maps are clamped to the diagonal so they also cost no DMA.
    @pl.when(kj * tk <= qi * tq + (tq - 1))
    def _compute():
        q = q_ref[...]                       # (H, tq, Dh) bf16
        k = k_ref[...]                       # (H, tk, Dh) bf16
        s = jnp.einsum("hqd,hkd->hqk", q, k,
                       preferred_element_type=f32) * ATTN_SCALE

        # Tile-local causal mask (small iotas only).
        row = qi * tq + lax.broadcasted_iota(jnp.int32, (tq, tk), 0)
        col = kj * tk + lax.broadcasted_iota(jnp.int32, (tq, tk), 1)
        s = jnp.where((row >= col)[None], s, NEG_BIG)

        m_prev = m_sc[...]                   # (H, tq, 1)
        l_prev = l_sc[...]
        m_new = jnp.maximum(m_prev, jnp.max(s, axis=-1, keepdims=True))
        alpha = jnp.exp(m_prev - m_new)
        p = jnp.exp(s - m_new)
        l_sc[...] = alpha * l_prev + jnp.sum(p, axis=-1, keepdims=True)
        acc_sc[...] = alpha * acc_sc[...] + jnp.einsum(
            "hqk,hkd->hqd", p.astype(bf16), v_ref[...],
            preferred_element_type=f32)
        m_sc[...] = m_new

    @pl.when(kj == pl.num_programs(1) - 1)
    def _finalize():
        # Normalize the head-batched accumulator (one full-ref divide).
        ctx = (acc_sc[...] / l_sc[...]).astype(bf16)           # (H, tq, Dh)

        # Output projection: sum over heads of (tq, Dh) @ (Dh, D).  Runs once
        # per q tile, so the small per-head loop is off the hot path.
        x = xmix_ref[...].astype(f32)
        for h in range(H):
            x = x + jnp.dot(ctx[h], projT_ref[h], preferred_element_type=f32)

        # MLP: relu(rms_norm(x) @ W_fc^T)^2 @ W_proj^T   (bf16 MXU, f32 math)
        xn2 = _rms_norm(x)
        hmid = jnp.dot(xn2.astype(bf16), fcT_ref[...], preferred_element_type=f32)
        hmid = jnp.maximum(hmid, 0.0)
        hmid = hmid * hmid
        x_out_ref[...] = x + jnp.dot(hmid.astype(bf16), mlpT_ref[...],
                                     preferred_element_type=f32)


# --------------------------------------------------------------------------- #
# One-time weight / rotary-table preparation (hoisted out of the forward path)
# --------------------------------------------------------------------------- #
def prepare_weights(params, num_heads, head_dim, max_T):
    H, Dh = num_heads, head_dim
    HDh = H * Dh
    D = params["qkv_w"].shape[-1]
    bf16, f32 = jnp.bfloat16, jnp.float32

    cos = params["cos"][:max_T].astype(f32)                    # (T, Dh//2)
    sin = params["sin"][:max_T].astype(f32)
    return dict(
        qkv_wT=params["qkv_w"].reshape(3 * HDh, D).T.astype(bf16),   # (D, 3*H*Dh)
        projT=params["c_proj_w"].T.reshape(H, Dh, D).astype(bf16),   # (H, Dh, D)
        fcT=params["fc_w"].T.astype(bf16),                           # (D, 4D)
        mlpT=params["mlp_proj_w"].T.astype(bf16),                    # (4D, D)
        cosf=jnp.concatenate([cos, cos], axis=-1),                   # (T, Dh)
        sins=jnp.concatenate([sin, -sin], axis=-1),                  # (T, Dh)
        scalars=jnp.array([params["lambdas"][0], params["lambdas"][1],
                           params["lamb"]], f32),
    )


# --------------------------------------------------------------------------- #
# Wrapper
# --------------------------------------------------------------------------- #
def block_forward(x, v1, x0, wp, num_heads, head_dim=128, tq=256, tk=256):
    """x, x0: (1, T, D); v1: (1, T, H, Dh) or None.  wp: prepare_weights(...).

    Returns (x_out, v1_out)."""
    B, T, D = x.shape
    assert B == 1, "Must use batch size = 1 (mirrors the FlexAttention constraint)"
    H, Dh = num_heads, head_dim
    HDh = H * Dh
    tq = min(tq, T)
    tk = min(tk, T)
    assert T % tq == 0 and T % tk == 0, "T must be divisible by the tile sizes"

    f32, bf16 = jnp.float32, jnp.bfloat16
    has_v1 = v1 is not None
    n_q, n_kv = T // tq, T // tk

    # ---------------- Kernel 1: prep (grid over token tiles) ---------------- #
    in_specs = [pl.BlockSpec((tq, D), lambda i, s: (i, 0)),          # x
                pl.BlockSpec((tq, D), lambda i, s: (i, 0))]          # x0
    inputs = [x[0], x0[0]]
    if has_v1:
        in_specs.append(pl.BlockSpec((tq, HDh), lambda i, s: (i, 0)))
        inputs.append(v1.reshape(T, HDh))
    in_specs += [pl.BlockSpec((tq, Dh), lambda i, s: (i, 0)),        # cosf
                 pl.BlockSpec((tq, Dh), lambda i, s: (i, 0)),        # sins
                 pl.BlockSpec((D, 3 * HDh), lambda i, s: (0, 0))]    # qkv_wT (resident)
    inputs += [wp["cosf"][:T], wp["sins"][:T], wp["qkv_wT"]]

    out_shapes = (jax.ShapeDtypeStruct((T, D), f32),       # x_mix (residual, f32)
                  jax.ShapeDtypeStruct((H, T, Dh), bf16),  # q (rot), head-batched
                  jax.ShapeDtypeStruct((H, T, Dh), bf16),  # k (rot)
                  jax.ShapeDtypeStruct((H, T, Dh), bf16))  # v_mix
    out_specs = (pl.BlockSpec((tq, D), lambda i, s: (i, 0)),
                 pl.BlockSpec((H, tq, Dh), lambda i, s: (0, i, 0)),
                 pl.BlockSpec((H, tq, Dh), lambda i, s: (0, i, 0)),
                 pl.BlockSpec((H, tq, Dh), lambda i, s: (0, i, 0)))

    x_mix, q_rot, k_rot, v_mix = pl.pallas_call(
        functools.partial(_prep_kernel, num_heads=H, head_dim=Dh, has_v1=has_v1),
        out_shape=out_shapes,
        grid_spec=pltpu.PrefetchScalarGridSpec(
            num_scalar_prefetch=1,                 # lambdas/lamb scalars -> SMEM
            grid=(n_q,),
            in_specs=in_specs,
            out_specs=list(out_specs)),
        compiler_params=pltpu.CompilerParams(
            dimension_semantics=("parallel",),
            vmem_limit_bytes=VMEM_LIMIT),
    )(wp["scalars"], *inputs)

    if has_v1:
        v1_out = v1                                   # pure pass-through, no copy
    else:
        # First block: v1 := v (== v_mix here).  Emitted in bf16; the cheap
        # transpose runs only once per model forward (first block).
        v1_out = jnp.transpose(v_mix, (1, 0, 2)).reshape(1, T, H, Dh)

    # ------------- Kernel 2: flash attention + proj + MLP ------------------- #
    # Clamp K/V tile indices to the causal diagonal: steps above the diagonal
    # re-use the already-resident block instead of DMAing a tile that pl.when
    # then skips (~2x cut in K/V HBM traffic).
    def kv_idx(qi, kj):
        return jnp.minimum(kj, (qi * tq + tq - 1) // tk)

    x_out = pl.pallas_call(
        functools.partial(_attn_mlp_kernel, num_heads=H, tq=tq, tk=tk),
        out_shape=jax.ShapeDtypeStruct((T, D), f32),
        grid_spec=pltpu.PrefetchScalarGridSpec(
            num_scalar_prefetch=0,
            grid=(n_q, n_kv),
            in_specs=[
                pl.BlockSpec((tq, D), lambda qi, kj: (qi, 0)),           # x_mix
                pl.BlockSpec((H, tq, Dh), lambda qi, kj: (0, qi, 0)),    # q tile
                pl.BlockSpec((H, tk, Dh),
                             lambda qi, kj: (0, kv_idx(qi, kj), 0)),     # k tile
                pl.BlockSpec((H, tk, Dh),
                             lambda qi, kj: (0, kv_idx(qi, kj), 0)),     # v tile
                pl.BlockSpec((H, Dh, D), lambda qi, kj: (0, 0, 0)),      # attn proj
                pl.BlockSpec((D, 4 * D), lambda qi, kj: (0, 0)),         # fc
                pl.BlockSpec((4 * D, D), lambda qi, kj: (0, 0)),         # mlp proj
            ],
            out_specs=pl.BlockSpec((tq, D), lambda qi, kj: (qi, 0)),
            scratch_shapes=[pltpu.VMEM((H, tq, Dh), f32),   # attention accumulator
                            pltpu.VMEM((H, tq, 1), f32),    # running max (batched)
                            pltpu.VMEM((H, tq, 1), f32)]),  # running sum (batched)
        compiler_params=pltpu.CompilerParams(
            dimension_semantics=("parallel", "arbitrary"),
            vmem_limit_bytes=VMEM_LIMIT),
    )(x_mix, q_rot, k_rot, v_mix, wp["projT"], wp["fcT"], wp["mlpT"])

    return x_out[None], v1_out


# --------------------------------------------------------------------------- #
# Synthetic parameters + pure-JAX reference
# --------------------------------------------------------------------------- #
def init_params(key, dim, num_heads, max_seq_len, head_dim=128):
    """Deterministic synthetic parameters with the shapes from Block.__init__.

    NOTE: train_gpt.py zero-initializes both c_proj weights; here they are given
    small nonzero values so the full compute path is exercised.
    """
    hdim = num_heads * head_dim
    k0, k1, k2, k3 = jax.random.split(key, 4)

    def uniform_w(k, out_f, in_f):
        bound = (3.0 ** 0.5) * 0.5 * in_f ** -0.5
        return jax.random.uniform(k, (out_f, in_f), jnp.float32, -bound, bound)

    bound_qkv = (3.0 ** 0.5) * 0.5 * dim ** -0.5
    qkv_w = jax.random.uniform(k0, (3, hdim, dim), jnp.float32, -bound_qkv, bound_qkv)
    c_proj_w = uniform_w(k1, dim, hdim)
    fc_w = uniform_w(k2, 4 * dim, dim)
    mlp_proj_w = uniform_w(k3, dim, 4 * dim)

    # Rotary buffers (same construction as the Rotary module).
    af = (1.0 / 1024.0) ** jnp.linspace(0.0, 1.0, head_dim // 4)
    af = jnp.concatenate([af, jnp.zeros(head_dim // 4, jnp.float32)]).astype(jnp.float32)
    t = jnp.arange(max_seq_len, dtype=jnp.float32)
    theta = t[:, None] * af[None, :]

    return dict(qkv_w=qkv_w, c_proj_w=c_proj_w, fc_w=fc_w, mlp_proj_w=mlp_proj_w,
                lamb=jnp.float32(0.5), lambdas=jnp.array([1.0, 0.0], jnp.float32),
                cos=jnp.cos(theta), sin=jnp.sin(theta))


def block_forward_ref(x, v1, x0, params, num_heads, head_dim=128):
    """Pure-JAX f32 reference mirroring the PyTorch forward (causal mask)."""
    B, T, D = x.shape
    H, Dh = num_heads, head_dim
    lam0, lam1 = params["lambdas"][0], params["lambdas"][1]
    lamb = params["lamb"]

    x = lam0 * x + lam1 * x0
    xn = _rms_norm(x)
    qkv = xn @ params["qkv_w"].reshape(3 * H * Dh, D).T
    qkv = qkv.reshape(B, T, 3 * H, Dh)
    q, k, v = qkv[:, :, :H], qkv[:, :, H:2 * H], qkv[:, :, 2 * H:]
    q, k = _rms_norm(q), _rms_norm(k)

    cos = params["cos"][:T][None, :, None, :]
    sin = params["sin"][:T][None, :, None, :]

    def rot(u):
        u1, u2 = u[..., :Dh // 2], u[..., Dh // 2:]
        return jnp.concatenate([u1 * cos + u2 * sin, -u1 * sin + u2 * cos], -1)

    q, k = rot(q), rot(k)

    v1e = v if v1 is None else v1.reshape(B, T, H, Dh)
    vm = (1.0 - lamb) * v + lamb * v1e

    s = jnp.einsum("bthd,bshd->bhts", q, k) * ATTN_SCALE
    mask = jnp.tril(jnp.ones((T, T), bool))
    s = jnp.where(mask, s, -jnp.inf)
    p = jax.nn.softmax(s, axis=-1)
    y = jnp.einsum("bhts,bshd->bthd", p, vm).reshape(B, T, H * Dh)
    y = y @ params["c_proj_w"].T

    x = x + y
    xn2 = _rms_norm(x)
    hmid = jnp.maximum(xn2 @ params["fc_w"].T, 0.0) ** 2
    x = x + hmid @ params["mlp_proj_w"].T
    return x, v1e


if __name__ == "__main__":
    dim, num_heads, head_dim = 128, 2, 128       # head_dim=128 is fixed by the module default
    T, max_seq_len = 512, 512                    # 2x2 tile grid exercises the causal clamp
    key = jax.random.PRNGKey(0)
    kp, kx, kv, k0 = jax.random.split(key, 4)

    params = init_params(kp, dim, num_heads, max_seq_len, head_dim)
    wp = prepare_weights(params, num_heads, head_dim, T)
    x = jax.random.normal(kx, (1, T, dim), jnp.float32)
    x0 = jax.random.normal(k0, (1, T, dim), jnp.float32)
    v1 = jax.random.normal(kv, (1, T, num_heads, head_dim), jnp.float32)

    def rel_err(a, b):
        a = jnp.asarray(a, jnp.float32)
        b = jnp.asarray(b, jnp.float32)
        return float(jnp.max(jnp.abs(a - b)) / (1.0 + jnp.max(jnp.abs(b))))

    # Path 1: v1 provided (later block).
    out_x, out_v1 = block_forward(x, v1, x0, wp, num_heads, head_dim)
    jax.block_until_ready((out_x, out_v1))
    ref_x, ref_v1 = block_forward_ref(x, v1, x0, params, num_heads, head_dim)
    assert out_x.shape == (1, T, dim)
    assert out_v1.shape == (1, T, num_heads, head_dim)
    assert rel_err(out_x, ref_x) < 4e-2, "x mismatch vs reference (v1 given)"
    assert rel_err(out_v1, ref_v1) < 1e-6, "v1 mismatch vs reference (v1 given)"

    # Path 2: v1 is None (first block).
    out_x2, out_v12 = block_forward(x, None, x0, wp, num_heads, head_dim)
    jax.block_until_ready((out_x2, out_v12))
    ref_x2, ref_v12 = block_forward_ref(x, None, x0, params, num_heads, head_dim)
    assert out_x2.shape == (1, T, dim)
    assert out_v12.shape == (1, T, num_heads, head_dim)
    assert rel_err(out_x2, ref_x2) < 4e-2, "x mismatch vs reference (v1=None)"
    assert rel_err(out_v12, ref_v12) < 2e-2, "v1 mismatch vs reference (v1=None)"

    print("KERNEL_OK")
</pallas_src>

<mosaic_0001>
module attributes {stable_mosaic.version = 11 : i64} {
  func.func @_prep_kernel(%arg0: i32, %arg1: memref<3xf32, #tpu.memory_space<smem>>, %arg2: memref<256x128xf32, #tpu.memory_space<vmem>>, %arg3: memref<256x128xf32, #tpu.memory_space<vmem>>, %arg4: memref<256x256xf32, #tpu.memory_space<vmem>>, %arg5: memref<256x128xf32, #tpu.memory_space<vmem>>, %arg6: memref<256x128xf32, #tpu.memory_space<vmem>>, %arg7: memref<128x768xbf16, #tpu.memory_space<vmem>>, %arg8: memref<256x128xf32, #tpu.memory_space<vmem>>, %arg9: memref<2x256x128xbf16, #tpu.memory_space<vmem>>, %arg10: memref<2x256x128xbf16, #tpu.memory_space<vmem>>, %arg11: memref<2x256x128xbf16, #tpu.memory_space<vmem>>) attributes {dimension_semantics = [#tpu.dimension_semantics<parallel>], iteration_bounds = array<i64: 2>, scalar_prefetch = 1 : i64, scratch_operands = 0 : i64, tpu.core_type = #tpu.core_type<tc>, window_params = [{transform_indices = @transform_0, window_bounds = array<i64: 256, 128>}, {transform_indices = @transform_1, window_bounds = array<i64: 256, 128>}, {transform_indices = @transform_2, window_bounds = array<i64: 256, 256>}, {transform_indices = @transform_3, window_bounds = array<i64: 256, 128>}, {transform_indices = @transform_4, window_bounds = array<i64: 256, 128>}, {pipeline_mode = #tpu.pipeline_mode<synchronous>, transform_indices = @transform_5, window_bounds = array<i64: 128, 768>}, {transform_indices = @transform_6, window_bounds = array<i64: 256, 128>}, {transform_indices = @transform_7, window_bounds = array<i64: 2, 256, 128>}, {transform_indices = @transform_8, window_bounds = array<i64: 2, 256, 128>}, {transform_indices = @transform_9, window_bounds = array<i64: 2, 256, 128>}]} {
    %c0 = arith.constant 0 : index
    %0 = memref.load %arg1[%c0] : memref<3xf32, #tpu.memory_space<smem>>
    %c1 = arith.constant 1 : index
    %1 = memref.load %arg1[%c1] : memref<3xf32, #tpu.memory_space<smem>>
    %c2 = arith.constant 2 : index
    %2 = memref.load %arg1[%c2] : memref<3xf32, #tpu.memory_space<smem>>
    %c0_0 = arith.constant 0 : index
    %c0_1 = arith.constant 0 : index
    %3 = vector.load %arg2[%c0_0, %c0_1] : memref<256x128xf32, #tpu.memory_space<vmem>>, vector<256x128xf32>
    %4 = vector.broadcast %0 : f32 to vector<256x128xf32>
    %5 = arith.mulf %4, %3 : vector<256x128xf32>
    %c0_2 = arith.constant 0 : index
    %c0_3 = arith.constant 0 : index
    %6 = vector.load %arg3[%c0_2, %c0_3] : memref<256x128xf32, #tpu.memory_space<vmem>>, vector<256x128xf32>
    %7 = vector.broadcast %1 : f32 to vector<256x128xf32>
    %8 = arith.mulf %7, %6 : vector<256x128xf32>
    %9 = arith.addf %5, %8 : vector<256x128xf32>
    %c0_4 = arith.constant 0 : index
    %c0_5 = arith.constant 0 : index
    %10 = vector.load %arg8[%c0_4, %c0_5] : memref<256x128xf32, #tpu.memory_space<vmem>>, vector<256x128xf32>
    tpu.vector_store %arg8[%c0_4, %c0_5], %9 {strides = array<i32>} : memref<256x128xf32, #tpu.memory_space<vmem>>, vector<256x128xf32>,
    %11 = arith.mulf %9, %9 : vector<256x128xf32>
    %cst = arith.constant dense<0.000000e+00> : vector<256xf32>
    %12 = vector.multi_reduction <add>, %11, %cst [1] : vector<256x128xf32> to vector<256xf32>
    %13 = vector.shape_cast %12 : vector<256xf32> to vector<256x1xf32>
    %cst_6 = arith.constant 1.280000e+02 : f32
    %14 = vector.broadcast %cst_6 : f32 to vector<256x1xf32>
    %15 = arith.divf %13, %14 : vector<256x1xf32>
    %cst_7 = arith.constant 1.1920929E-7 : f32
    %16 = vector.broadcast %cst_7 : f32 to vector<256x1xf32>
    %17 = arith.addf %15, %16 : vector<256x1xf32>
    %18 = math.rsqrt %17 : vector<256x1xf32>
    %19 = vector.broadcast %18 : vector<256x1xf32> to vector<256x128xf32>
    %20 = arith.mulf %9, %19 : vector<256x128xf32>
    %21 = arith.truncf %20 : vector<256x128xf32> to vector<256x128xbf16>
    %c0_8 = arith.constant 0 : index
    %c0_9 = arith.constant 0 : index
    %22 = vector.load %arg7[%c0_8, %c0_9] : memref<128x768xbf16, #tpu.memory_space<vmem>>, vector<128x768xbf16>
    %cst_10 = arith.constant dense<0.000000e+00> : vector<256x768xf32>
    %23 = tpu.matmul %21, %22, %cst_10 {dimension_numbers = #tpu.dot_dimension_numbers<[1], [0], [0], [1], [0, 0, 1, 1], [], []>} : vector<256x128xbf16>, vector<128x768xbf16>, vector<256x768xf32> -> vector<256x768xf32>
    %c0_11 = arith.constant 0 : index
    %c0_12 = arith.constant 0 : index
    %24 = vector.load %arg5[%c0_11, %c0_12] : memref<256x128xf32, #tpu.memory_space<vmem>>, vector<256x128xf32>
    %c0_13 = arith.constant 0 : index
    %c0_14 = arith.constant 0 : index
    %25 = vector.load %arg6[%c0_13, %c0_14] : memref<256x128xf32, #tpu.memory_space<vmem>>, vector<256x128xf32>
    %26 = vector.extract_strided_slice %23 {offsets = [0, 0], sizes = [256, 128], strides = [1, 1]} : vector<256x768xf32> to vector<256x128xf32>
    %27 = arith.mulf %26, %26 : vector<256x128xf32>
    %cst_15 = arith.constant dense<0.000000e+00> : vector<256xf32>
    %28 = vector.multi_reduction <add>, %27, %cst_15 [1] : vector<256x128xf32> to vector<256xf32>
    %29 = vector.shape_cast %28 : vector<256xf32> to vector<256x1xf32>
    %cst_16 = arith.constant 1.280000e+02 : f32
    %30 = vector.broadcast %cst_16 : f32 to vector<256x1xf32>
    %31 = arith.divf %29, %30 : vector<256x1xf32>
    %cst_17 = arith.constant 1.1920929E-7 : f32
    %32 = vector.broadcast %cst_17 : f32 to vector<256x1xf32>
    %33 = arith.addf %31, %32 : vector<256x1xf32>
    %34 = math.rsqrt %33 : vector<256x1xf32>
    %35 = vector.broadcast %34 : vector<256x1xf32> to vector<256x128xf32>
    %36 = arith.mulf %26, %35 : vector<256x128xf32>
    %37 = arith.mulf %36, %24 : vector<256x128xf32>
    %38 = vector.extract_strided_slice %36 {offsets = [0, 64], sizes = [256, 64], strides = [1, 1]} : vector<256x128xf32> to vector<256x64xf32>
    %39 = vector.extract_strided_slice %36 {offsets = [0, 0], sizes = [256, 64], strides = [1, 1]} : vector<256x128xf32> to vector<256x64xf32>
    %40 = tpu.concatenate %38, %39 in 1 : vector<256x64xf32>, vector<256x64xf32> -> vector<256x128xf32>
    %41 = arith.mulf %40, %25 : vector<256x128xf32>
    %42 = arith.addf %37, %41 : vector<256x128xf32>
    %43 = vector.extract_strided_slice %23 {offsets = [0, 256], sizes = [256, 128], strides = [1, 1]} : vector<256x768xf32> to vector<256x128xf32>
    %44 = arith.mulf %43, %43 : vector<256x128xf32>
    %cst_18 = arith.constant dense<0.000000e+00> : vector<256xf32>
    %45 = vector.multi_reduction <add>, %44, %cst_18 [1] : vector<256x128xf32> to vector<256xf32>
    %46 = vector.shape_cast %45 : vector<256xf32> to vector<256x1xf32>
    %cst_19 = arith.constant 1.280000e+02 : f32
    %47 = vector.broadcast %cst_19 : f32 to vector<256x1xf32>
    %48 = arith.divf %46, %47 : vector<256x1xf32>
    %cst_20 = arith.constant 1.1920929E-7 : f32
    %49 = vector.broadcast %cst_20 : f32 to vector<256x1xf32>
    %50 = arith.addf %48, %49 : vector<256x1xf32>
    %51 = math.rsqrt %50 : vector<256x1xf32>
    %52 = vector.broadcast %51 : vector<256x1xf32> to vector<256x128xf32>
    %53 = arith.mulf %43, %52 : vector<256x128xf32>
    %54 = arith.mulf %53, %24 : vector<256x128xf32>
    %55 = vector.extract_strided_slice %53 {offsets = [0, 64], sizes = [256, 64], strides = [1, 1]} : vector<256x128xf32> to vector<256x64xf32>
    %56 = vector.extract_strided_slice %53 {offsets = [0, 0], sizes = [256, 64], strides = [1, 1]} : vector<256x128xf32> to vector<256x64xf32>
    %57 = tpu.concatenate %55, %56 in 1 : vector<256x64xf32>, vector<256x64xf32> -> vector<256x128xf32>
    %58 = arith.mulf %57, %25 : vector<256x128xf32>
    %59 = arith.addf %54, %58 : vector<256x128xf32>
    %60 = vector.extract_strided_slice %23 {offsets = [0, 512], sizes = [256, 128], strides = [1, 1]} : vector<256x768xf32> to vector<256x128xf32>
    %61 = arith.truncf %42 : vector<256x128xf32> to vector<256x128xbf16>
    %c0_21 = arith.constant 0 : index
    %c0_22 = arith.constant 0 : index
    %c0_23 = arith.constant 0 : index
    %62 = vector.load %arg9[%c0_21, %c0_22, %c0_23] : memref<2x256x128xbf16, #tpu.memory_space<vmem>>, vector<1x256x128xbf16>
    %63 = vector.shape_cast %62 : vector<1x256x128xbf16> to vector<256x128xbf16>
    %64 = vector.shape_cast %61 : vector<256x128xbf16> to vector<1x256x128xbf16>
    tpu.vector_store %arg9[%c0_21, %c0_22, %c0_23], %64 {strides = array<i32>} : memref<2x256x128xbf16, #tpu.memory_space<vmem>>, vector<1x256x128xbf16>,
    %65 = arith.truncf %59 : vector<256x128xf32> to vector<256x128xbf16>
    %c0_24 = arith.constant 0 : index
    %c0_25 = arith.constant 0 : index
    %c0_26 = arith.constant 0 : index
    %66 = vector.load %arg10[%c0_24, %c0_25, %c0_26] : memref<2x256x128xbf16, #tpu.memory_space<vmem>>, vector<1x256x128xbf16>
    %67 = vector.shape_cast %66 : vector<1x256x128xbf16> to vector<256x128xbf16>
    %68 = vector.shape_cast %65 : vector<256x128xbf16> to vector<1x256x128xbf16>
    tpu.vector_store %arg10[%c0_24, %c0_25, %c0_26], %68 {strides = array<i32>} : memref<2x256x128xbf16, #tpu.memory_space<vmem>>, vector<1x256x128xbf16>,
    %cst_27 = arith.constant 1.000000e+00 : f32
    %69 = arith.subf %cst_27, %2 : f32
    %70 = vector.broadcast %69 : f32 to vector<256x128xf32>
    %71 = arith.mulf %70, %60 : vector<256x128xf32>
    %c0_28 = arith.constant 0 : index
    %c0_29 = arith.constant 0 : index
    %72 = vector.load %arg4[%c0_28, %c0_29] : memref<256x256xf32, #tpu.memory_space<vmem>>, vector<256x128xf32>
    %73 = vector.broadcast %2 : f32 to vector<256x128xf32>
    %74 = arith.mulf %73, %72 : vector<256x128xf32>
    %75 = arith.addf %71, %74 : vector<256x128xf32>
    %76 = arith.truncf %75 : vector<256x128xf32> to vector<256x128xbf16>
    %c0_30 = arith.constant 0 : index
    %c0_31 = arith.constant 0 : index
    %c0_32 = arith.constant 0 : index
    %77 = vector.load %arg11[%c0_30, %c0_31, %c0_32] : memref<2x256x128xbf16, #tpu.memory_space<vmem>>, vector<1x256x128xbf16>
    %78 = vector.shape_cast %77 : vector<1x256x128xbf16> to vector<256x128xbf16>
    %79 = vector.shape_cast %76 : vector<256x128xbf16> to vector<1x256x128xbf16>
    tpu.vector_store %arg11[%c0_30, %c0_31, %c0_32], %79 {strides = array<i32>} : memref<2x256x128xbf16, #tpu.memory_space<vmem>>, vector<1x256x128xbf16>,
    %80 = vector.extract_strided_slice %23 {offsets = [0, 128], sizes = [256, 128], strides = [1, 1]} : vector<256x768xf32> to vector<256x128xf32>
    %81 = arith.mulf %80, %80 : vector<256x128xf32>
    %cst_33 = arith.constant dense<0.000000e+00> : vector<256xf32>
    %82 = vector.multi_reduction <add>, %81, %cst_33 [1] : vector<256x128xf32> to vector<256xf32>
    %83 = vector.shape_cast %82 : vector<256xf32> to vector<256x1xf32>
    %cst_34 = arith.constant 1.280000e+02 : f32
    %84 = vector.broadcast %cst_34 : f32 to vector<256x1xf32>
    %85 = arith.divf %83, %84 : vector<256x1xf32>
    %cst_35 = arith.constant 1.1920929E-7 : f32
    %86 = vector.broadcast %cst_35 : f32 to vector<256x1xf32>
    %87 = arith.addf %85, %86 : vector<256x1xf32>
    %88 = math.rsqrt %87 : vector<256x1xf32>
    %89 = vector.broadcast %88 : vector<256x1xf32> to vector<256x128xf32>
    %90 = arith.mulf %80, %89 : vector<256x128xf32>
    %91 = arith.mulf %90, %24 : vector<256x128xf32>
    %92 = vector.extract_strided_slice %90 {offsets = [0, 64], sizes = [256, 64], strides = [1, 1]} : vector<256x128xf32> to vector<256x64xf32>
    %93 = vector.extract_strided_slice %90 {offsets = [0, 0], sizes = [256, 64], strides = [1, 1]} : vector<256x128xf32> to vector<256x64xf32>
    %94 = tpu.concatenate %92, %93 in 1 : vector<256x64xf32>, vector<256x64xf32> -> vector<256x128xf32>
    %95 = arith.mulf %94, %25 : vector<256x128xf32>
    %96 = arith.addf %91, %95 : vector<256x128xf32>
    %97 = vector.extract_strided_slice %23 {offsets = [0, 384], sizes = [256, 128], strides = [1, 1]} : vector<256x768xf32> to vector<256x128xf32>
    %98 = arith.mulf %97, %97 : vector<256x128xf32>
    %cst_36 = arith.constant dense<0.000000e+00> : vector<256xf32>
    %99 = vector.multi_reduction <add>, %98, %cst_36 [1] : vector<256x128xf32> to vector<256xf32>
    %100 = vector.shape_cast %99 : vector<256xf32> to vector<256x1xf32>
    %cst_37 = arith.constant 1.280000e+02 : f32
    %101 = vector.broadcast %cst_37 : f32 to vector<256x1xf32>
    %102 = arith.divf %100, %101 : vector<256x1xf32>
    %cst_38 = arith.constant 1.1920929E-7 : f32
    %103 = vector.broadcast %cst_38 : f32 to vector<256x1xf32>
    %104 = arith.addf %102, %103 : vector<256x1xf32>
    %105 = math.rsqrt %104 : vector<256x1xf32>
    %106 = vector.broadcast %105 : vector<256x1xf32> to vector<256x128xf32>
    %107 = arith.mulf %97, %106 : vector<256x128xf32>
    %108 = arith.mulf %107, %24 : vector<256x128xf32>
    %109 = vector.extract_strided_slice %107 {offsets = [0, 64], sizes = [256, 64], strides = [1, 1]} : vector<256x128xf32> to vector<256x64xf32>
    %110 = vector.extract_strided_slice %107 {offsets = [0, 0], sizes = [256, 64], strides = [1, 1]} : vector<256x128xf32> to vector<256x64xf32>
    %111 = tpu.concatenate %109, %110 in 1 : vector<256x64xf32>, vector<256x64xf32> -> vector<256x128xf32>
    %112 = arith.mulf %111, %25 : vector<256x128xf32>
    %113 = arith.addf %108, %112 : vector<256x128xf32>
    %114 = vector.extract_strided_slice %23 {offsets = [0, 640], sizes = [256, 128], strides = [1, 1]} : vector<256x768xf32> to vector<256x128xf32>
    %115 = arith.truncf %96 : vector<256x128xf32> to vector<256x128xbf16>
    %c1_39 = arith.constant 1 : index
    %c0_40 = arith.constant 0 : index
    %c0_41 = arith.constant 0 : index
    %116 = vector.load %arg9[%c1_39, %c0_40, %c0_41] : memref<2x256x128xbf16, #tpu.memory_space<vmem>>, vector<1x256x128xbf16>
    %117 = vector.shape_cast %116 : vector<1x256x128xbf16> to vector<256x128xbf16>
    %118 = vector.shape_cast %115 : vector<256x128xbf16> to vector<1x256x128xbf16>
    tpu.vector_store %arg9[%c1_39, %c0_40, %c0_41], %118 {strides = array<i32>} : memref<2x256x128xbf16, #tpu.memory_space<vmem>>, vector<1x256x128xbf16>,
    %119 = arith.truncf %113 : vector<256x128xf32> to vector<256x128xbf16>
    %c1_42 = arith.constant 1 : index
    %c0_43 = arith.constant 0 : index
    %c0_44 = arith.constant 0 : index
    %120 = vector.load %arg10[%c1_42, %c0_43, %c0_44] : memref<2x256x128xbf16, #tpu.memory_space<vmem>>, vector<1x256x128xbf16>
    %121 = vector.shape_cast %120 : vector<1x256x128xbf16> to vector<256x128xbf16>
    %122 = vector.shape_cast %119 : vector<256x128xbf16> to vector<1x256x128xbf16>
    tpu.vector_store %arg10[%c1_42, %c0_43, %c0_44], %122 {strides = array<i32>} : memref<2x256x128xbf16, #tpu.memory_space<vmem>>, vector<1x256x128xbf16>,
    %cst_45 = arith.constant 1.000000e+00 : f32
    %123 = arith.subf %cst_45, %2 : f32
    %124 = vector.broadcast %123 : f32 to vector<256x128xf32>
    %125 = arith.mulf %124, %114 : vector<256x128xf32>
    %c0_46 = arith.constant 0 : index
    %c128 = arith.constant 128 : index
    %126 = vector.load %arg4[%c0_46, %c128] : memref<256x256xf32, #tpu.memory_space<vmem>>, vector<256x128xf32>
    %127 = vector.broadcast %2 : f32 to vector<256x128xf32>
    %128 = arith.mulf %127, %126 : vector<256x128xf32>
    %129 = arith.addf %125, %128 : vector<256x128xf32>
    %130 = arith.truncf %129 : vector<256x128xf32> to vector<256x128xbf16>
    %c1_47 = arith.constant 1 : index
    %c0_48 = arith.constant 0 : index
    %c0_49 = arith.constant 0 : index
    %131 = vector.load %arg11[%c1_47, %c0_48, %c0_49] : memref<2x256x128xbf16, #tpu.memory_space<vmem>>, vector<1x256x128xbf16>
    %132 = vector.shape_cast %131 : vector<1x256x128xbf16> to vector<256x128xbf16>
    %133 = vector.shape_cast %130 : vector<256x128xbf16> to vector<1x256x128xbf16>
    tpu.vector_store %arg11[%c1_47, %c0_48, %c0_49], %133 {strides = array<i32>} : memref<2x256x128xbf16, #tpu.memory_space<vmem>>, vector<1x256x128xbf16>,
    return
  }
  func.func @transform_0(%arg0: i32, %arg1: memref<3xf32, #tpu.memory_space<smem>>) -> (i32, i32) {
    %c0_i32 = arith.constant 0 : i32
    %c0_i32_0 = arith.constant 0 : i32
    return %arg0, %c0_i32 : i32, i32
  }
  func.func @transform_1(%arg0: i32, %arg1: memref<3xf32, #tpu.memory_space<smem>>) -> (i32, i32) {
    %c0_i32 = arith.constant 0 : i32
    %c0_i32_0 = arith.constant 0 : i32
    return %arg0, %c0_i32 : i32, i32
  }
  func.func @transform_2(%arg0: i32, %arg1: memref<3xf32, #tpu.memory_space<smem>>) -> (i32, i32) {
    %c0_i32 = arith.constant 0 : i32
    %c0_i32_0 = arith.constant 0 : i32
    return %arg0, %c0_i32 : i32, i32
  }
  func.func @transform_3(%arg0: i32, %arg1: memref<3xf32, #tpu.memory_space<smem>>) -> (i32, i32) {
    %c0_i32 = arith.constant 0 : i32
    %c0_i32_0 = arith.constant 0 : i32
    return %arg0, %c0_i32 : i32, i32
  }
  func.func @transform_4(%arg0: i32, %arg1: memref<3xf32, #tpu.memory_space<smem>>) -> (i32, i32) {
    %c0_i32 = arith.constant 0 : i32
    %c0_i32_0 = arith.constant 0 : i32
    return %arg0, %c0_i32 : i32, i32
  }
  func.func @transform_5(%arg0: i32, %arg1: memref<3xf32, #tpu.memory_space<smem>>) -> (i32, i32) {
    %c0_i32 = arith.constant 0 : i32
    %c0_i32_0 = arith.constant 0 : i32
    %c0_i32_1 = arith.constant 0 : i32
    return %c0_i32, %c0_i32_0 : i32, i32
  }
  func.func @transform_6(%arg0: i32, %arg1: memref<3xf32, #tpu.memory_space<smem>>) -> (i32, i32) {
    %c0_i32 = arith.constant 0 : i32
    %c0_i32_0 = arith.constant 0 : i32
    return %arg0, %c0_i32 : i32, i32
  }
  func.func @transform_7(%arg0: i32, %arg1: memref<3xf32, #tpu.memory_space<smem>>) -> (i32, i32, i32) {
    %c0_i32 = arith.constant 0 : i32
    %c0_i32_0 = arith.constant 0 : i32
    %c0_i32_1 = arith.constant 0 : i32
    return %c0_i32, %arg0, %c0_i32_0 : i32, i32, i32
  }
  func.func @transform_8(%arg0: i32, %arg1: memref<3xf32, #tpu.memory_space<smem>>) -> (i32, i32, i32) {
    %c0_i32 = arith.constant 0 : i32
    %c0_i32_0 = arith.constant 0 : i32
    %c0_i32_1 = arith.constant 0 : i32
    return %c0_i32, %arg0, %c0_i32_0 : i32, i32, i32
  }
  func.func @transform_9(%arg0: i32, %arg1: memref<3xf32, #tpu.memory_space<smem>>) -> (i32, i32, i32) {
    %c0_i32 = arith.constant 0 : i32
    %c0_i32_0 = arith.constant 0 : i32
    %c0_i32_1 = arith.constant 0 : i32
    return %c0_i32, %arg0, %c0_i32_0 : i32, i32, i32
  }
}

</mosaic_0001>

<llo_original>
// kernel: tpu_custom_call.1
$region0: #{tpu_custom_call.1}
  #allocation0 [shape = 'u32[]', space=smem, size = 0x4, offset = 0x4, fixed_abs, tag = 'smem constant byte address 0x4 - core index']
  #allocation1 [shape = 'u32[144,128]{1,0:T(1,128)}', space=vmem, size = 0x12000, scoped, tag = 'internal scratch']
  #allocation2 [shape = 's32[1]{0}', space=sflag, size = 0x4, scoped, tag = 'scoped memory for tpu_custom_call.1']
  #allocation3 [shape = 'u8[512]{0}', space=smem, size = 0x200, scoped, tag = 'prefetched SMEM operand 0']
  #allocation21 [shape = 's32[]', space=sflag, size = 0x4, offset = 0, fixed_abs, tag = 'sflag constant byte address 0x0 - dummy sync flag']
  #allocation23 [shape = 's32[]', space=sflag, size = 0x4, offset = 0, fixed_abs, tag = 'sflag constant byte address 0x0 - dummy sync flag']
  #allocation25 [shape = 's32[]', space=sflag, size = 0x4, offset = 0, fixed_abs, tag = 'sflag constant byte address 0x0 - dummy sync flag']
  %s0 = inlined_call_operand.hbm [shape: f32[3], index: 0, kind: input, shape index: {}]
  %s1 = inlined_call_operand.hbm [shape: f32[512,128], index: 1, kind: input, shape index: {}]
  %s2 = inlined_call_operand.hbm [shape: f32[512,128], index: 2, kind: input, shape index: {}]
  %s3 = inlined_call_operand.hbm [shape: f32[512,256], index: 3, kind: input, shape index: {}]
  %s4 = inlined_call_operand.hbm [shape: f32[512,128], index: 4, kind: input, shape index: {}]
  %s5 = inlined_call_operand.hbm [shape: f32[512,128], index: 5, kind: input, shape index: {}]
  %s6 = inlined_call_operand.hbm [shape: bf16[128,768], index: 6, kind: input, shape index: {}]
  %s7 = inlined_call_operand.hbm [shape: f32[512,128], index: 7, kind: output, shape index: {0}]
  %s8 = inlined_call_operand.hbm [shape: bf16[2,512,128], index: 8, kind: output, shape index: {1}]
  %s9 = inlined_call_operand.hbm [shape: bf16[2,512,128], index: 9, kind: output, shape index: {2}]
  %s10 = inlined_call_operand.hbm [shape: bf16[2,512,128], index: 10, kind: output, shape index: {3}]
  %11 = xla_tuple %s7, %s8, %s9, %s10
  %s12 = sld [smem:[#allocation0]]
  $region105: #{tpu_custom_call.1} parent=0
    _
  %s14 = ssub.s32 1, %s12
  %s15 = scalar_select 0, %s14, %s12
  %17 = dma.hbm_to_smem %s0, 16, [#allocation3], [#allocation2]
  %18 = dma.done [#allocation2], 16
  %19 = sfence
  $region1: #{tpu_custom_call.1} parent=0
    #allocation4 [shape = 'u8[262144]{0}', space=vmem, size = 0x40000, scoped, tag = 'input window, operand 1']
    #allocation5 [shape = 's32[2]{0}', space=sflag, size = 0x8, scoped, tag = 'scoped memory for tpu_custom_call.1']
    #allocation6 [shape = 's32[2]{0}', space=sflag, size = 0x8, scoped, tag = 'scoped memory for tpu_custom_call.1']
    #allocation7 [shape = 'u8[262144]{0}', space=vmem, size = 0x40000, scoped, tag = 'input window, operand 2']
    #allocation8 [shape = 's32[2]{0}', space=sflag, size = 0x8, scoped, tag = 'scoped memory for tpu_custom_call.1']
    #allocation9 [shape = 'u8[524288]{0}', space=vmem, size = 0x80000, scoped, tag = 'input window, operand 3']
    #allocation10 [shape = 'u8[262144]{0}', space=vmem, size = 0x40000, scoped, tag = 'input window, operand 4']
    #allocation11 [shape = 's32[2]{0}', space=sflag, size = 0x8, scoped, tag = 'scoped memory for tpu_custom_call.1']
    #allocation12 [shape = 'u8[262144]{0}', space=vmem, size = 0x40000, scoped, tag = 'input window, operand 5']
    #allocation13 [shape = 'u8[196608]{0}', space=vmem, size = 0x30000, scoped, tag = 'input window, operand 6, single buffered']
    #allocation14 [shape = 's32[1]{0}', space=sflag, size = 0x4, scoped, tag = 'scoped memory for tpu_custom_call.1']
    #allocation15 [shape = 'u8[262144]{0}', space=vmem, size = 0x40000, scoped, tag = 'output window, operand 0']
    #allocation16 [shape = 'u8[262144]{0}', space=vmem, size = 0x40000, scoped, tag = 'output window, operand 1']
    #allocation17 [shape = 's32[2]{0}', space=sflag, size = 0x8, scoped, tag = 'scoped memory for tpu_custom_call.1']
    #allocation18 [shape = 'u8[262144]{0}', space=vmem, size = 0x40000, scoped, tag = 'output window, operand 2']
    #allocation19 [shape = 'u8[262144]{0}', space=vmem, size = 0x40000, scoped, tag = 'output window, operand 3']
    #allocation20 [shape = 's32[2]{0}', space=sflag, size = 0x8, scoped, tag = 'scoped memory for tpu_custom_call.1']
    %20 = vsyncpa [#allocation5], 0
    %s21 = scalar_lea.sflag [#allocation5], 1
    %22 = vsyncpa %s21, 0
    %23 = vsyncpa [#allocation8], 0
    %s24 = scalar_lea.sflag [#allocation8], 1
    %25 = vsyncpa %s24, 0
    %26 = vsyncpa [#allocation11], 0
    %s27 = scalar_lea.sflag [#allocation11], 1
    %28 = vsyncpa %s27, 0
    %29 = vsyncpa [#allocation14], 0
    %30 = vsyncpa [#allocation6], 0
    %s31 = scalar_lea.sflag [#allocation6], 1
    %32 = vsyncpa %s31, 0
    %33 = vsyncpa [#allocation17], 0
    %s34 = scalar_lea.sflag [#allocation17], 1
    %35 = vsyncpa %s34, 0
    %36 = vsyncpa [#allocation20], 0
    %s37 = scalar_lea.sflag [#allocation20], 1
    %38 = vsyncpa %s37, 0
    loop: start=0, step=1, limit=4
    $region2: #{tpu_custom_call.1} parent=1 // loop_pre_header
      _
    $region3: #{tpu_custom_call.1} parent=1 // loop_header
      %s40 = sphi 0, %s44
      %p41 = scmp.ge.s32.totalorder %s40, 4
      %s50 = sphi 0, %s52
      %s53 = sphi 0, %s50
      %s54 = sphi 0, %s53
      %s70 = sphi 0, %s54
      %s76 = sphi 0, %s78
      %s79 = sphi 0, %s76
      %s80 = sphi 0, %s79
      %s96 = sphi 0, %s80
      %s102 = sphi 0, %s104
      %s105 = sphi 0, %s102
      %s106 = sphi 0, %s105
      %s122 = sphi 0, %s106
      %s128 = sphi 0, %s130
      %s131 = sphi 0, %s128
      %s132 = sphi 0, %s131
      %s148 = sphi 0, %s132
      %s154 = sphi 0, %s156
      %s157 = sphi 0, %s154
      %s158 = sphi 0, %s157
      %s174 = sphi 0, %s158
      %s178 = sphi 0, %s178
      %s180 = sphi 0, %s178
      %s181 = sphi 0, %s180
      %s195 = sphi 0, %s181
      %s201 = sphi 0, %s203
      %s204 = sphi 0, %s201
      %s205 = sphi 0, %s204
      %s221 = sphi 0, %s205
      %s227 = sphi 0, %s229
      %s230 = sphi 0, %s227
      %s231 = sphi 0, %s230
      %s247 = sphi 0, %s231
      %s253 = sphi 0, %s255
      %s256 = sphi 0, %s253
      %s257 = sphi 0, %s256
      %s273 = sphi 0, %s257
      %s279 = sphi 0, %s281
      %s282 = sphi 0, %s279
      %s283 = sphi 0, %s282
      %s299 = sphi 0, %s283
    $region4: #{tpu_custom_call.1} parent=1 // loop_header_branch
      %43 = sbr.rel (%p41) target = $region8
    $region5: #{tpu_custom_call.1} parent=1 // loop_body
      %s45 = ssub.s32 %s40, 1
      %s46 = ssub.s32 %s40, 2
      %s47 = sadd.s32 %s40, 1
      %s48 = ssub.s32 %s40, %s47
      %p49 = scmp.eq.s32.totalorder %s48, 0
      %s51 = sadd.s32 %s50, 1
      %s52 = scalar_select %p49, %s50, %s51
      %p55 = pneg %p49
      %p56 = scmp.eq.s32.totalorder %s40, 1
      %p57 = por %p55, %p56
      %p58 = scmp.ne.s32.totalorder %s50, %s53
      %p59 = scmp.eq.s32.totalorder %s40, 0
      %p60 = por %p58, %p59
      %p61 = scmp.ne.s32.totalorder %s50, %s53
      %p62 = scmp.eq.s32.totalorder %s45, 1
      %p63 = por %p61, %p62
      %p64 = scmp.ne.s32.totalorder %s53, %s54
      %p65 = scmp.eq.s32.totalorder %s45, 0
      %p66 = por %p64, %p65
      %p67 = scmp.ne.s32.totalorder %s53, %s54
      %p68 = scmp.eq.s32.totalorder %s46, 1
      %p69 = por %p67, %p68
      %p71 = scmp.ne.s32.totalorder %s54, %s70
      %p72 = scmp.eq.s32.totalorder %s46, 0
      %p73 = por %p71, %p72
      %s74 = ssub.s32 %s40, %s47
      %p75 = scmp.eq.s32.totalorder %s74, 0
      %s77 = sadd.s32 %s76, 1
      %s78 = scalar_select %p75, %s76, %s77
      %p81 = pneg %p75
      %p82 = scmp.eq.s32.totalorder %s40, 1
      %p83 = por %p81, %p82
      %p84 = scmp.ne.s32.totalorder %s76, %s79
      %p85 = scmp.eq.s32.totalorder %s40, 0
      %p86 = por %p84, %p85
      %p87 = scmp.ne.s32.totalorder %s76, %s79
      %p88 = scmp.eq.s32.totalorder %s45, 1
      %p89 = por %p87, %p88
      %p90 = scmp.ne.s32.totalorder %s79, %s80
      %p91 = scmp.eq.s32.totalorder %s45, 0
      %p92 = por %p90, %p91
      %p93 = scmp.ne.s32.totalorder %s79, %s80
      %p94 = scmp.eq.s32.totalorder %s46, 1
      %p95 = por %p93, %p94
      %p97 = scmp.ne.s32.totalorder %s80, %s96
      %p98 = scmp.eq.s32.totalorder %s46, 0
      %p99 = por %p97, %p98
      %s100 = ssub.s32 %s40, %s47
      %p101 = scmp.eq.s32.totalorder %s100, 0
      %s103 = sadd.s32 %s102, 1
      %s104 = scalar_select %p101, %s102, %s103
      %p107 = pneg %p101
      %p108 = scmp.eq.s32.totalorder %s40, 1
      %p109 = por %p107, %p108
      %p110 = scmp.ne.s32.totalorder %s102, %s105
      %p111 = scmp.eq.s32.totalorder %s40, 0
      %p112 = por %p110, %p111
      %p113 = scmp.ne.s32.totalorder %s102, %s105
      %p114 = scmp.eq.s32.totalorder %s45, 1
      %p115 = por %p113, %p114
      %p116 = scmp.ne.s32.totalorder %s105, %s106
      %p117 = scmp.eq.s32.totalorder %s45, 0
      %p118 = por %p116, %p117
      %p119 = scmp.ne.s32.totalorder %s105, %s106
      %p120 = scmp.eq.s32.totalorder %s46, 1
      %p121 = por %p119, %p120
      %p123 = scmp.ne.s32.totalorder %s106, %s122
      %p124 = scmp.eq.s32.totalorder %s46, 0
      %p125 = por %p123, %p124
      %s126 = ssub.s32 %s40, %s47
      %p127 = scmp.eq.s32.totalorder %s126, 0
      %s129 = sadd.s32 %s128, 1
      %s130 = scalar_select %p127, %s128, %s129
      %p133 = pneg %p127
      %p134 = scmp.eq.s32.totalorder %s40, 1
      %p135 = por %p133, %p134
      %p136 = scmp.ne.s32.totalorder %s128, %s131
      %p137 = scmp.eq.s32.totalorder %s40, 0
      %p138 = por %p136, %p137
      %p139 = scmp.ne.s32.totalorder %s128, %s131
      %p140 = scmp.eq.s32.totalorder %s45, 1
      %p141 = por %p139, %p140
      %p142 = scmp.ne.s32.totalorder %s131, %s132
      %p143 = scmp.eq.s32.totalorder %s45, 0
      %p144 = por %p142, %p143
      %p145 = scmp.ne.s32.totalorder %s131, %s132
      %p146 = scmp.eq.s32.totalorder %s46, 1
      %p147 = por %p145, %p146
      %p149 = scmp.ne.s32.totalorder %s132, %s148
      %p150 = scmp.eq.s32.totalorder %s46, 0
      %p151 = por %p149, %p150
      %s152 = ssub.s32 %s40, %s47
      %p153 = scmp.eq.s32.totalorder %s152, 0
      %s155 = sadd.s32 %s154, 1
      %s156 = scalar_select %p153, %s154, %s155
      %p159 = pneg %p153
      %p160 = scmp.eq.s32.totalorder %s40, 1
      %p161 = por %p159, %p160
      %p162 = scmp.ne.s32.totalorder %s154, %s157
      %p163 = scmp.eq.s32.totalorder %s40, 0
      %p164 = por %p162, %p163
      %p165 = scmp.ne.s32.totalorder %s154, %s157
      %p166 = scmp.eq.s32.totalorder %s45, 1
      %p167 = por %p165, %p166
      %p168 = scmp.ne.s32.totalorder %s157, %s158
      %p169 = scmp.eq.s32.totalorder %s45, 0
      %p170 = por %p168, %p169
      %p171 = scmp.ne.s32.totalorder %s157, %s158
      %p172 = scmp.eq.s32.totalorder %s46, 1
      %p173 = por %p171, %p172
      %p175 = scmp.ne.s32.totalorder %s158, %s174
      %p176 = scmp.eq.s32.totalorder %s46, 0
      %p177 = por %p175, %p176
      %s179 = sadd.s32 %s178, 1
      %p182 = scmp.eq.s32.totalorder %s40, 1
      %p183 = scmp.ne.s32.totalorder %s178, %s180
      %p184 = scmp.eq.s32.totalorder %s40, 0
      %p185 = por %p183, %p184
      %p186 = scmp.ne.s32.totalorder %s178, %s180
      %p187 = scmp.eq.s32.totalorder %s45, 1
      %p188 = por %p186, %p187
      %p189 = scmp.ne.s32.totalorder %s180, %s181
      %p190 = scmp.eq.s32.totalorder %s45, 0
      %p191 = por %p189, %p190
      %p192 = scmp.ne.s32.totalorder %s180, %s181
      %p193 = scmp.eq.s32.totalorder %s46, 1
      %p194 = por %p192, %p193
      %p196 = scmp.ne.s32.totalorder %s181, %s195
      %p197 = scmp.eq.s32.totalorder %s46, 0
      %p198 = por %p196, %p197
      %s199 = ssub.s32 %s40, %s47
      %p200 = scmp.eq.s32.totalorder %s199, 0
      %s202 = sadd.s32 %s201, 1
      %s203 = scalar_select %p200, %s201, %s202
      %p206 = pneg %p200
      %p207 = scmp.eq.s32.totalorder %s40, 1
      %p208 = por %p206, %p207
      %p209 = scmp.ne.s32.totalorder %s201, %s204
      %p210 = scmp.eq.s32.totalorder %s40, 0
      %p211 = por %p209, %p210
      %p212 = scmp.ne.s32.totalorder %s201, %s204
      %p213 = scmp.eq.s32.totalorder %s45, 1
      %p214 = por %p212, %p213
      %p215 = scmp.ne.s32.totalorder %s204, %s205
      %p216 = scmp.eq.s32.totalorder %s45, 0
      %p217 = por %p215, %p216
      %p218 = scmp.ne.s32.totalorder %s204, %s205
      %p219 = scmp.eq.s32.totalorder %s46, 1
      %p220 = por %p218, %p219
      %p222 = scmp.ne.s32.totalorder %s205, %s221
      %p223 = scmp.eq.s32.totalorder %s46, 0
      %p224 = por %p222, %p223
      %s225 = ssub.s32 %s40, %s47
      %p226 = scmp.eq.s32.totalorder %s225, 0
      %s228 = sadd.s32 %s227, 1
      %s229 = scalar_select %p226, %s227, %s228
      %p232 = pneg %p226
      %p233 = scmp.eq.s32.totalorder %s40, 1
      %p234 = por %p232, %p233
      %p235 = scmp.ne.s32.totalorder %s227, %s230
      %p236 = scmp.eq.s32.totalorder %s40, 0
      %p237 = por %p235, %p236
      %p238 = scmp.ne.s32.totalorder %s227, %s230
      %p239 = scmp.eq.s32.totalorder %s45, 1
      %p240 = por %p238, %p239
      %p241 = scmp.ne.s32.totalorder %s230, %s231
      %p242 = scmp.eq.s32.totalorder %s45, 0
      %p243 = por %p241, %p242
      %p244 = scmp.ne.s32.totalorder %s230, %s231
      %p245 = scmp.eq.s32.totalorder %s46, 1
      %p246 = por %p244, %p245
      %p248 = scmp.ne.s32.totalorder %s231, %s247
      %p249 = scmp.eq.s32.totalorder %s46, 0
      %p250 = por %p248, %p249
      %s251 = ssub.s32 %s40, %s47
      %p252 = scmp.eq.s32.totalorder %s251, 0
      %s254 = sadd.s32 %s253, 1
      %s255 = scalar_select %p252, %s253, %s254
      %p258 = pneg %p252
      %p259 = scmp.eq.s32.totalorder %s40, 1
      %p260 = por %p258, %p259
      %p261 = scmp.ne.s32.totalorder %s253, %s256
      %p262 = scmp.eq.s32.totalorder %s40, 0
      %p263 = por %p261, %p262
      %p264 = scmp.ne.s32.totalorder %s253, %s256
      %p265 = scmp.eq.s32.totalorder %s45, 1
      %p266 = por %p264, %p265
      %p267 = scmp.ne.s32.totalorder %s256, %s257
      %p268 = scmp.eq.s32.totalorder %s45, 0
      %p269 = por %p267, %p268
      %p270 = scmp.ne.s32.totalorder %s256, %s257
      %p271 = scmp.eq.s32.totalorder %s46, 1
      %p272 = por %p270, %p271
      %p274 = scmp.ne.s32.totalorder %s257, %s273
      %p275 = scmp.eq.s32.totalorder %s46, 0
      %p276 = por %p274, %p275
      %s277 = ssub.s32 %s40, %s47
      %p278 = scmp.eq.s32.totalorder %s277, 0
      %s280 = sadd.s32 %s279, 1
      %s281 = scalar_select %p278, %s279, %s280
      %p284 = pneg %p278
      %p285 = scmp.eq.s32.totalorder %s40, 1
      %p286 = por %p284, %p285
      %p287 = scmp.ne.s32.totalorder %s279, %s282
      %p288 = scmp.eq.s32.totalorder %s40, 0
      %p289 = por %p287, %p288
      %p290 = scmp.ne.s32.totalorder %s279, %s282
      %p291 = scmp.eq.s32.totalorder %s45, 1
      %p292 = por %p290, %p291
      %p293 = scmp.ne.s32.totalorder %s282, %s283
      %p294 = scmp.eq.s32.totalorder %s45, 0
      %p295 = por %p293, %p294
      %p296 = scmp.ne.s32.totalorder %s282, %s283
      %p297 = scmp.eq.s32.totalorder %s46, 1
      %p298 = por %p296, %p297
      %p300 = scmp.ne.s32.totalorder %s283, %s299
      %p301 = scmp.eq.s32.totalorder %s46, 0
      %p302 = por %p300, %p301
      %p303 = scmp.le.s32.totalorder 1, %s40
      %p304 = scmp.lt.s32.totalorder %s40, 3
      %p305 = pnand %p303, %p304
      %p306 = pneg %p305
      // Predicated region
      $region9: #{tpu_custom_call.1} parent=5 // pred_check
        _
      $region10: #{tpu_custom_call.1} parent=5 // pred_check_branch
        %308 = sbr.rel (%p305) target = $region12
      $region11: #{tpu_custom_call.1} parent=5 // pred_region
        %s309 = ssub.s32 %s40, 1
        // Predicated region
        $region13: #{tpu_custom_call.1} parent=11 // pred_check
          %p310 = pneg %p191
        $region14: #{tpu_custom_call.1} parent=11 // pred_check_branch
          %312 = sbr.rel (%p310) target = $region16
        $region15: #{tpu_custom_call.1} parent=11 // pred_region
          %s314 = ssub.s32 6144, 6144
          %315 = vsyncadd [#allocation14], %s314
          %s316 = sshll.u32 [#allocation13], 4
          %s317 = int_to_ptr.vmem [resolvable:$true] %s316
          %322 = dma.hbm_to_vmem [thread:$0]  %s6, 6144, %s317, [#allocation14], 384, 384, 24
        $region16: #{tpu_custom_call.1} parent=11 // pred_fallthru
          _
      $region12: #{tpu_custom_call.1} parent=5 // pred_fallthru
        _
      %p323 = scmp.lt.s32.totalorder %s40, 2
      // Predicated region
      $region17: #{tpu_custom_call.1} parent=5 // pred_check
        %p324 = pneg %p323
      $region18: #{tpu_custom_call.1} parent=5 // pred_check_branch
        %326 = sbr.rel (%p324) target = $region20
      $region19: #{tpu_custom_call.1} parent=5 // pred_region
        // Predicated region
        $region21: #{tpu_custom_call.1} parent=19 // pred_check
          %p327 = pneg %p60
        $region22: #{tpu_custom_call.1} parent=19 // pred_check_branch
          %329 = sbr.rel (%p327) target = $region24
        $region23: #{tpu_custom_call.1} parent=19 // pred_region
          %s330 = sand.u32 %s50, 1
          %s331 = scalar_lea.sflag [#allocation5], %s330
          %s332 = sand.u32 %s50, 1
          %s333 = smul.addr %s332, 256
          %s334 = scalar_lea.vmem [#allocation4], %s333
          %s335 = smul.u32 32, %s40
          %s337 = ssub.s32 4096, 4096
          %338 = vsyncadd %s331, %s337
          %s339 = smul.addr %s335, 128
          %s340 = scalar_lea.hbm %s1, %s339
          %s341 = sshll.u32 %s334, 4
          %s342 = int_to_ptr.vmem [resolvable:$true] %s341
          %347 = dma.hbm_to_vmem [thread:$0]  %s340, 4096, %s342, %s331, 128, 128, 8
        $region24: #{tpu_custom_call.1} parent=19 // pred_fallthru
          _
        // Predicated region
        $region25: #{tpu_custom_call.1} parent=19 // pred_check
          %p348 = pneg %p86
        $region26: #{tpu_custom_call.1} parent=19 // pred_check_branch
          %350 = sbr.rel (%p348) target = $region28
        $region27: #{tpu_custom_call.1} parent=19 // pred_region
          %s351 = sand.u32 %s40, 1
          %s352 = scalar_lea.sflag [#allocation8], %s351
          %s353 = sand.u32 %s76, 1
          %s354 = smul.addr %s353, 256
          %s355 = scalar_lea.vmem [#allocation7], %s354
          %s356 = smul.u32 32, %s40
          %s358 = ssub.s32 4096, 4096
          %359 = vsyncadd %s352, %s358
          %s360 = smul.addr %s356, 128
          %s361 = scalar_lea.hbm %s2, %s360
          %s362 = sshll.u32 %s355, 4
          %s363 = int_to_ptr.vmem [resolvable:$true] %s362
          %368 = dma.hbm_to_vmem [thread:$0]  %s361, 4096, %s363, %s352, 128, 128, 8
        $region28: #{tpu_custom_call.1} parent=19 // pred_fallthru
          _
        // Predicated region
        $region29: #{tpu_custom_call.1} parent=19 // pred_check
          %p369 = pneg %p112
        $region30: #{tpu_custom_call.1} parent=19 // pred_check_branch
          %371 = sbr.rel (%p369) target = $region32
        $region31: #{tpu_custom_call.1} parent=19 // pred_region
          %s372 = sand.u32 %s40, 1
          %s373 = scalar_lea.sflag [#allocation8], %s372
          %s374 = sand.u32 %s102, 1
          %s375 = smul.addr %s374, 512
          %s376 = scalar_lea.vmem [#allocation9], %s375
          %s377 = smul.u32 32, %s40
          %s379 = ssub.s32 8192, 8192
          %380 = vsyncadd %s373, %s379
          %s381 = smul.addr %s377, 2
          %s382 = smul.addr %s381, 128
          %s383 = scalar_lea.hbm %s3, %s382
          %s384 = sshll.u32 %s376, 4
          %s385 = int_to_ptr.vmem [resolvable:$true] %s384
          %390 = dma.hbm_to_vmem [thread:$0]  %s383, 8192, %s385, %s373, 256, 256, 16
        $region32: #{tpu_custom_call.1} parent=19 // pred_fallthru
          _
        // Predicated region
        $region33: #{tpu_custom_call.1} parent=19 // pred_check
          %p391 = pneg %p138
        $region34: #{tpu_custom_call.1} parent=19 // pred_check_branch
          %393 = sbr.rel (%p391) target = $region36
        $region35: #{tpu_custom_call.1} parent=19 // pred_region
          %s394 = sand.u32 %s40, 1
          %s395 = scalar_lea.sflag [#allocation11], %s394
          %s396 = sand.u32 %s128, 1
          %s397 = smul.addr %s396, 256
          %s398 = scalar_lea.vmem [#allocation10], %s397
          %s399 = smul.u32 32, %s40
          %s401 = ssub.s32 4096, 4096
          %402 = vsyncadd %s395, %s401
          %s403 = smul.addr %s399, 128
          %s404 = scalar_lea.hbm %s4, %s403
          %s405 = sshll.u32 %s398, 4
          %s406 = int_to_ptr.vmem [resolvable:$true] %s405
          %411 = dma.hbm_to_vmem [thread:$0]  %s404, 4096, %s406, %s395, 128, 128, 8
        $region36: #{tpu_custom_call.1} parent=19 // pred_fallthru
          _
        // Predicated region
        $region37: #{tpu_custom_call.1} parent=19 // pred_check
          %p412 = pneg %p164
        $region38: #{tpu_custom_call.1} parent=19 // pred_check_branch
          %414 = sbr.rel (%p412) target = $region40
        $region39: #{tpu_custom_call.1} parent=19 // pred_region
          %s415 = sand.u32 %s40, 1
          %s416 = scalar_lea.sflag [#allocation11], %s415
          %s417 = sand.u32 %s154, 1
          %s418 = smul.addr %s417, 256
          %s419 = scalar_lea.vmem [#allocation12], %s418
          %s420 = smul.u32 32, %s40
          %s422 = ssub.s32 4096, 4096
          %423 = vsyncadd %s416, %s422
          %s424 = smul.addr %s420, 128
          %s425 = scalar_lea.hbm %s5, %s424
          %s426 = sshll.u32 %s419, 4
          %s427 = int_to_ptr.vmem [resolvable:$true] %s426
          %432 = dma.hbm_to_vmem [thread:$0]  %s425, 4096, %s427, %s416, 128, 128, 8
        $region40: #{tpu_custom_call.1} parent=19 // pred_fallthru
          _
      $region20: #{tpu_custom_call.1} parent=5 // pred_fallthru
        _
      %p433 = scmp.le.s32.totalorder 1, %s40
      %p434 = scmp.lt.s32.totalorder %s40, 3
      %p435 = pnand %p433, %p434
      %p436 = pneg %p435
      // Predicated region
      $region41: #{tpu_custom_call.1} parent=5 // pred_check
        _
      $region42: #{tpu_custom_call.1} parent=5 // pred_check_branch
        %438 = sbr.rel (%p435) target = $region44
      $region43: #{tpu_custom_call.1} parent=5 // pred_region
        %s439 = ssub.s32 %s40, 1
        %s440 = sand.u32 %s53, 1
        %s441 = scalar_lea.sflag [#allocation5], %s440
        %s442 = sand.u32 %s53, 1
        %s443 = smul.addr %s442, 256
        %s444 = scalar_lea.vmem [#allocation4], %s443
        // Predicated region
        $region45: #{tpu_custom_call.1} parent=43 // pred_check
          %p445 = pneg %p66
        $region46: #{tpu_custom_call.1} parent=43 // pred_check_branch
          %447 = sbr.rel (%p445) target = $region48
        $region47: #{tpu_custom_call.1} parent=43 // pred_region
          %448 = dma.done %s441, 4096
        $region48: #{tpu_custom_call.1} parent=43 // pred_fallthru
          _
        %s449 = sand.u32 %s45, 1
        %s450 = scalar_lea.sflag [#allocation8], %s449
        %s451 = sand.u32 %s79, 1
        %s452 = smul.addr %s451, 256
        %s453 = scalar_lea.vmem [#allocation7], %s452
        // Predicated region
        $region49: #{tpu_custom_call.1} parent=43 // pred_check
          %p454 = pneg %p92
        $region50: #{tpu_custom_call.1} parent=43 // pred_check_branch
          %456 = sbr.rel (%p454) target = $region52
        $region51: #{tpu_custom_call.1} parent=43 // pred_region
          %457 = dma.done %s450, 4096
        $region52: #{tpu_custom_call.1} parent=43 // pred_fallthru
          _
        %s458 = sand.u32 %s45, 1
        %s459 = scalar_lea.sflag [#allocation8], %s458
        %s460 = sand.u32 %s105, 1
        %s461 = smul.addr %s460, 512
        %s462 = scalar_lea.vmem [#allocation9], %s461
        // Predicated region
        $region53: #{tpu_custom_call.1} parent=43 // pred_check
          %p463 = pneg %p118
        $region54: #{tpu_custom_call.1} parent=43 // pred_check_branch
          %465 = sbr.rel (%p463) target = $region56
        $region55: #{tpu_custom_call.1} parent=43 // pred_region
          %466 = dma.done %s459, 8192
        $region56: #{tpu_custom_call.1} parent=43 // pred_fallthru
          _
        %s467 = sand.u32 %s45, 1
        %s468 = scalar_lea.sflag [#allocation11], %s467
        %s469 = sand.u32 %s131, 1
        %s470 = smul.addr %s469, 256
        %s471 = scalar_lea.vmem [#allocation10], %s470
        // Predicated region
        $region57: #{tpu_custom_call.1} parent=43 // pred_check
          %p472 = pneg %p144
        $region58: #{tpu_custom_call.1} parent=43 // pred_check_branch
          %474 = sbr.rel (%p472) target = $region60
        $region59: #{tpu_custom_call.1} parent=43 // pred_region
          %475 = dma.done %s468, 4096
        $region60: #{tpu_custom_call.1} parent=43 // pred_fallthru
          _
        %s476 = sand.u32 %s45, 1
        %s477 = scalar_lea.sflag [#allocation11], %s476
        %s478 = sand.u32 %s157, 1
        %s479 = smul.addr %s478, 256
        %s480 = scalar_lea.vmem [#allocation12], %s479
        // Predicated region
        $region61: #{tpu_custom_call.1} parent=43 // pred_check
          %p481 = pneg %p170
        $region62: #{tpu_custom_call.1} parent=43 // pred_check_branch
          %483 = sbr.rel (%p481) target = $region64
        $region63: #{tpu_custom_call.1} parent=43 // pred_region
          %484 = dma.done %s477, 4096
        $region64: #{tpu_custom_call.1} parent=43 // pred_fallthru
          _
        // Predicated region
        $region65: #{tpu_custom_call.1} parent=43 // pred_check
          %p485 = pneg %p191
        $region66: #{tpu_custom_call.1} parent=43 // pred_check_branch
          %487 = sbr.rel (%p485) target = $region68
        $region67: #{tpu_custom_call.1} parent=43 // pred_region
          %488 = dma.done [#allocation14], 6144
        $region68: #{tpu_custom_call.1} parent=43 // pred_fallthru
          _
        %s489 = sand.u32 %s53, 1
        %s490 = scalar_lea.sflag [#allocation5], %s489
        %s491 = sand.u32 %s53, 1
        %s492 = smul.addr %s491, 256
        %s493 = scalar_lea.vmem [#allocation4], %s492
        %p494 = pneg %p66
        %p495 = pneg %p63
        %s496 = sand.u32 %s45, 1
        %s497 = scalar_lea.sflag [#allocation8], %s496
        %s498 = sand.u32 %s79, 1
        %s499 = smul.addr %s498, 256
        %s500 = scalar_lea.vmem [#allocation7], %s499
        %p501 = pneg %p92
        %p502 = pneg %p89
        %s503 = sand.u32 %s45, 1
        %s504 = scalar_lea.sflag [#allocation8], %s503
        %s505 = sand.u32 %s105, 1
        %s506 = smul.addr %s505, 512
        %s507 = scalar_lea.vmem [#allocation9], %s506
        %p508 = pneg %p118
        %p509 = pneg %p115
        %s510 = sand.u32 %s45, 1
        %s511 = scalar_lea.sflag [#allocation11], %s510
        %s512 = sand.u32 %s131, 1
        %s513 = smul.addr %s512, 256
        %s514 = scalar_lea.vmem [#allocation10], %s513
        %p515 = pneg %p144
        %p516 = pneg %p141
        %s517 = sand.u32 %s45, 1
        %s518 = scalar_lea.sflag [#allocation11], %s517
        %s519 = sand.u32 %s157, 1
        %s520 = smul.addr %s519, 256
        %s521 = scalar_lea.vmem [#allocation12], %s520
        %p522 = pneg %p170
        %p523 = pneg %p167
        %p524 = pneg %p191
        %p525 = pneg %p188
        %p526 = pneg %p217
        %p527 = pneg %p214
        %s528 = sand.u32 %s204, 1
        %s529 = scalar_lea.sflag [#allocation6], %s528
        %s530 = sand.u32 %s204, 1
        %s531 = smul.addr %s530, 256
        %s532 = scalar_lea.vmem [#allocation15], %s531
        %p533 = pneg %p243
        %p534 = pneg %p240
        %s535 = sand.u32 %s45, 1
        %s536 = scalar_lea.sflag [#allocation17], %s535
        %s537 = sand.u32 %s230, 1
        %s538 = smul.addr %s537, 256
        %s539 = scalar_lea.vmem [#allocation16], %s538
        %p540 = pneg %p269
        %p541 = pneg %p266
        %s542 = sand.u32 %s45, 1
        %s543 = scalar_lea.sflag [#allocation17], %s542
        %s544 = sand.u32 %s256, 1
        %s545 = smul.addr %s544, 256
        %s546 = scalar_lea.vmem [#allocation18], %s545
        %p547 = pneg %p295
        %p548 = pneg %p292
        %s549 = sand.u32 %s282, 1
        %s550 = scalar_lea.sflag [#allocation20], %s549
        %s551 = sand.u32 %s282, 1
        %s552 = smul.addr %s551, 256
        %s553 = scalar_lea.vmem [#allocation19], %s552
        %s554 = smul.u32 32, %s45
        %s555 = smul.u32 32, %s45
        %s556 = smul.u32 32, %s45
        %s557 = smul.u32 32, %s45
        %s558 = smul.u32 32, %s45
        %s559 = smul.u32 32, %s45
        %s560 = smul.u32 32, %s45
        %s561 = smul.u32 32, %s45
        %s562 = smul.u32 32, %s45
        %s564 = sld [smem:[#allocation3]]
        %s565 = sld [smem:[#allocation3 + $0x1]]
        %s566 = sld [smem:[#allocation3 + $0x2]]
        %v567 = vld [vmem:[%s444] sm:$0xff]
        %v568 = vld [vmem:[%s444 + $0x8] sm:$0xff]
        %v569 = vld [vmem:[%s444 + $0x10] sm:$0xff]
        %v570 = vld [vmem:[%s444 + $0x18] sm:$0xff]
        %v571 = vld [vmem:[%s444 + $0x20] sm:$0xff]
        %v572 = vld [vmem:[%s444 + $0x28] sm:$0xff]
        %v573 = vld [vmem:[%s444 + $0x30] sm:$0xff]
        %v574 = vld [vmem:[%s444 + $0x38] sm:$0xff]
        %v575 = vld [vmem:[%s444 + $0x40] sm:$0xff]
        %v576 = vld [vmem:[%s444 + $0x48] sm:$0xff]
        %v577 = vld [vmem:[%s444 + $0x50] sm:$0xff]
        %v578 = vld [vmem:[%s444 + $0x58] sm:$0xff]
        %v579 = vld [vmem:[%s444 + $0x60] sm:$0xff]
        %v580 = vld [vmem:[%s444 + $0x68] sm:$0xff]
        %v581 = vld [vmem:[%s444 + $0x70] sm:$0xff]
        %v582 = vld [vmem:[%s444 + $0x78] sm:$0xff]
        %v583 = vld [vmem:[%s444 + $0x80] sm:$0xff]
        %v584 = vld [vmem:[%s444 + $0x88] sm:$0xff]
        %v585 = vld [vmem:[%s444 + $0x90] sm:$0xff]
        %v586 = vld [vmem:[%s444 + $0x98] sm:$0xff]
        %v587 = vld [vmem:[%s444 + $0xa0] sm:$0xff]
        %v588 = vld [vmem:[%s444 + $0xa8] sm:$0xff]
        %v589 = vld [vmem:[%s444 + $0xb0] sm:$0xff]
        %v590 = vld [vmem:[%s444 + $0xb8] sm:$0xff]
        %v591 = vld [vmem:[%s444 + $0xc0] sm:$0xff]
        %v592 = vld [vmem:[%s444 + $0xc8] sm:$0xff]
        %v593 = vld [vmem:[%s444 + $0xd0] sm:$0xff]
        %v594 = vld [vmem:[%s444 + $0xd8] sm:$0xff]
        %v595 = vld [vmem:[%s444 + $0xe0] sm:$0xff]
        %v596 = vld [vmem:[%s444 + $0xe8] sm:$0xff]
        %v597 = vld [vmem:[%s444 + $0xf0] sm:$0xff]
        %v598 = vld [vmem:[%s444 + $0xf8] sm:$0xff]
        %v599 = vstv %s564
        %v600 = vmul.f32 %v599, %v567
        %v601 = vmul.f32 %v599, %v568
        %v602 = vmul.f32 %v599, %v569
        %v603 = vmul.f32 %v599, %v570
        %v604 = vmul.f32 %v599, %v571
        %v605 = vmul.f32 %v599, %v572
        %v606 = vmul.f32 %v599, %v573
        %v607 = vmul.f32 %v599, %v574
        %v608 = vmul.f32 %v599, %v575
        %v609 = vmul.f32 %v599, %v576
        %v610 = vmul.f32 %v599, %v577
        %v611 = vmul.f32 %v599, %v578
        %v612 = vmul.f32 %v599, %v579
        %v613 = vmul.f32 %v599, %v580
        %v614 = vmul.f32 %v599, %v581
        %v615 = vmul.f32 %v599, %v582
        %v616 = vmul.f32 %v599, %v583
        %v617 = vmul.f32 %v599, %v584
        %v618 = vmul.f32 %v599, %v585
        %v619 = vmul.f32 %v599, %v586
        %v620 = vmul.f32 %v599, %v587
        %v621 = vmul.f32 %v599, %v588
        %v622 = vmul.f32 %v599, %v589
        %v623 = vmul.f32 %v599, %v590
        %v624 = vmul.f32 %v599, %v591
        %v625 = vmul.f32 %v599, %v592
        %v626 = vmul.f32 %v599, %v593
        %v627 = vmul.f32 %v599, %v594
        %v628 = vmul.f32 %v599, %v595
        %v629 = vmul.f32 %v599, %v596
        %v630 = vmul.f32 %v599, %v597
        %v631 = vmul.f32 %v599, %v598
        %v632 = vld [vmem:[%s453] sm:$0xff]
        %v633 = vld [vmem:[%s453 + $0x8] sm:$0xff]
        %v634 = vld [vmem:[%s453 + $0x10] sm:$0xff]
        %v635 = vld [vmem:[%s453 + $0x18] sm:$0xff]
        %v636 = vld [vmem:[%s453 + $0x20] sm:$0xff]
        %v637 = vld [vmem:[%s453 + $0x28] sm:$0xff]
        %v638 = vld [vmem:[%s453 + $0x30] sm:$0xff]
        %v639 = vld [vmem:[%s453 + $0x38] sm:$0xff]
        %v640 = vld [vmem:[%s453 + $0x40] sm:$0xff]
        %v641 = vld [vmem:[%s453 + $0x48] sm:$0xff]
        %v642 = vld [vmem:[%s453 + $0x50] sm:$0xff]
        %v643 = vld [vmem:[%s453 + $0x58] sm:$0xff]
        %v644 = vld [vmem:[%s453 + $0x60] sm:$0xff]
        %v645 = vld [vmem:[%s453 + $0x68] sm:$0xff]
        %v646 = vld [vmem:[%s453 + $0x70] sm:$0xff]
        %v647 = vld [vmem:[%s453 + $0x78] sm:$0xff]
        %v648 = vld [vmem:[%s453 + $0x80] sm:$0xff]
        %v649 = vld [vmem:[%s453 + $0x88] sm:$0xff]
        %v650 = vld [vmem:[%s453 + $0x90] sm:$0xff]
        %v651 = vld [vmem:[%s453 + $0x98] sm:$0xff]
        %v652 = vld [vmem:[%s453 + $0xa0] sm:$0xff]
        %v653 = vld [vmem:[%s453 + $0xa8] sm:$0xff]
        %v654 = vld [vmem:[%s453 + $0xb0] sm:$0xff]
        %v655 = vld [vmem:[%s453 + $0xb8] sm:$0xff]
        %v656 = vld [vmem:[%s453 + $0xc0] sm:$0xff]
        %v657 = vld [vmem:[%s453 + $0xc8] sm:$0xff]
        %v658 = vld [vmem:[%s453 + $0xd0] sm:$0xff]
        %v659 = vld [vmem:[%s453 + $0xd8] sm:$0xff]
        %v660 = vld [vmem:[%s453 + $0xe0] sm:$0xff]
        %v661 = vld [vmem:[%s453 + $0xe8] sm:$0xff]
        %v662 = vld [vmem:[%s453 + $0xf0] sm:$0xff]
        %v663 = vld [vmem:[%s453 + $0xf8] sm:$0xff]
        %v664 = vstv %s565
        %v665 = vmul.f32 %v664, %v632
        %v666 = vmul.f32 %v664, %v633
        %v667 = vmul.f32 %v664, %v634
        %v668 = vmul.f32 %v664, %v635
        %v669 = vmul.f32 %v664, %v636
        %v670 = vmul.f32 %v664, %v637
        %v671 = vmul.f32 %v664, %v638
        %v672 = vmul.f32 %v664, %v639
        %v673 = vmul.f32 %v664, %v640
        %v674 = vmul.f32 %v664, %v641
        %v675 = vmul.f32 %v664, %v642
        %v676 = vmul.f32 %v664, %v643
        %v677 = vmul.f32 %v664, %v644
        %v678 = vmul.f32 %v664, %v645
        %v679 = vmul.f32 %v664, %v646
        %v680 = vmul.f32 %v664, %v647
        %v681 = vmul.f32 %v664, %v648
        %v682 = vmul.f32 %v664, %v649
        %v683 = vmul.f32 %v664, %v650
        %v684 = vmul.f32 %v664, %v651
        %v685 = vmul.f32 %v664, %v652
        %v686 = vmul.f32 %v664, %v653
        %v687 = vmul.f32 %v664, %v654
        %v688 = vmul.f32 %v664, %v655
        %v689 = vmul.f32 %v664, %v656
        %v690 = vmul.f32 %v664, %v657
        %v691 = vmul.f32 %v664, %v658
        %v692 = vmul.f32 %v664, %v659
        %v693 = vmul.f32 %v664, %v660
        %v694 = vmul.f32 %v664, %v661
        %v695 = vmul.f32 %v664, %v662
        %v696 = vmul.f32 %v664, %v663
        %v697 = vadd.f32 %v600, %v665
        %v698 = vadd.f32 %v601, %v666
        %v699 = vadd.f32 %v602, %v667
        %v700 = vadd.f32 %v603, %v668
        %v701 = vadd.f32 %v604, %v669
        %v702 = vadd.f32 %v605, %v670
        %v703 = vadd.f32 %v606, %v671
        %v704 = vadd.f32 %v607, %v672
        %v705 = vadd.f32 %v608, %v673
        %v706 = vadd.f32 %v609, %v674
        %v707 = vadd.f32 %v610, %v675
        %v708 = vadd.f32 %v611, %v676
        %v709 = vadd.f32 %v612, %v677
        %v710 = vadd.f32 %v613, %v678
        %v711 = vadd.f32 %v614, %v679
        %v712 = vadd.f32 %v615, %v680
        %v713 = vadd.f32 %v616, %v681
        %v714 = vadd.f32 %v617, %v682
        %v715 = vadd.f32 %v618, %v683
        %v716 = vadd.f32 %v619, %v684
        %v717 = vadd.f32 %v620, %v685
        %v718 = vadd.f32 %v621, %v686
        %v719 = vadd.f32 %v622, %v687
        %v720 = vadd.f32 %v623, %v688
        %v721 = vadd.f32 %v624, %v689
        %v722 = vadd.f32 %v625, %v690
        %v723 = vadd.f32 %v626, %v691
        %v724 = vadd.f32 %v627, %v692
        %v725 = vadd.f32 %v628, %v693
        %v726 = vadd.f32 %v629, %v694
        %v727 = vadd.f32 %v630, %v695
        %v728 = vadd.f32 %v631, %v696
        %729 = vst [vmem:[%s532] sm:$0xff] %v697
        %730 = vst [vmem:[%s532 + $0x8] sm:$0xff] %v698
        %731 = vst [vmem:[%s532 + $0x10] sm:$0xff] %v699
        %732 = vst [vmem:[%s532 + $0x18] sm:$0xff] %v700
        %733 = vst [vmem:[%s532 + $0x20] sm:$0xff] %v701
        %734 = vst [vmem:[%s532 + $0x28] sm:$0xff] %v702
        %735 = vst [vmem:[%s532 + $0x30] sm:$0xff] %v703
        %736 = vst [vmem:[%s532 + $0x38] sm:$0xff] %v704
        %737 = vst [vmem:[%s532 + $0x40] sm:$0xff] %v705
        %738 = vst [vmem:[%s532 + $0x48] sm:$0xff] %v706
        %739 = vst [vmem:[%s532 + $0x50] sm:$0xff] %v707
        %740 = vst [vmem:[%s532 + $0x58] sm:$0xff] %v708
        %741 = vst [vmem:[%s532 + $0x60] sm:$0xff] %v709
        %742 = vst [vmem:[%s532 + $0x68] sm:$0xff] %v710
        %743 = vst [vmem:[%s532 + $0x70] sm:$0xff] %v711
        %744 = vst [vmem:[%s532 + $0x78] sm:$0xff] %v712
        %745 = vst [vmem:[%s532 + $0x80] sm:$0xff] %v713
        %746 = vst [vmem:[%s532 + $0x88] sm:$0xff] %v714
        %747 = vst [vmem:[%s532 + $0x90] sm:$0xff] %v715
        %748 = vst [vmem:[%s532 + $0x98] sm:$0xff] %v716
        %749 = vst [vmem:[%s532 + $0xa0] sm:$0xff] %v717
        %750 = vst [vmem:[%s532 + $0xa8] sm:$0xff] %v718
        %751 = vst [vmem:[%s532 + $0xb0] sm:$0xff] %v719
        %752 = vst [vmem:[%s532 + $0xb8] sm:$0xff] %v720
        %753 = vst [vmem:[%s532 + $0xc0] sm:$0xff] %v721
        %754 = vst [vmem:[%s532 + $0xc8] sm:$0xff] %v722
        %755 = vst [vmem:[%s532 + $0xd0] sm:$0xff] %v723
        %756 = vst [vmem:[%s532 + $0xd8] sm:$0xff] %v724
        %757 = vst [vmem:[%s532 + $0xe0] sm:$0xff] %v725
        %758 = vst [vmem:[%s532 + $0xe8] sm:$0xff] %v726
        %759 = vst [vmem:[%s532 + $0xf0] sm:$0xff] %v727
        %760 = vst [vmem:[%s532 + $0xf8] sm:$0xff] %v728
        %v761 = vmul.f32 %v697, %v697
        %v762 = vmul.f32 %v698, %v698
        %v763 = vmul.f32 %v699, %v699
        %v764 = vmul.f32 %v700, %v700
        %v765 = vmul.f32 %v701, %v701
        %v766 = vmul.f32 %v702, %v702
        %v767 = vmul.f32 %v703, %v703
        %v768 = vmul.f32 %v704, %v704
        %v769 = vmul.f32 %v705, %v705
        %v770 = vmul.f32 %v706, %v706
        %v771 = vmul.f32 %v707, %v707
        %v772 = vmul.f32 %v708, %v708
        %v773 = vmul.f32 %v709, %v709
        %v774 = vmul.f32 %v710, %v710
        %v775 = vmul.f32 %v711, %v711
        %v776 = vmul.f32 %v712, %v712
        %v777 = vmul.f32 %v713, %v713
        %v778 = vmul.f32 %v714, %v714
        %v779 = vmul.f32 %v715, %v715
        %v780 = vmul.f32 %v716, %v716
        %v781 = vmul.f32 %v717, %v717
        %v782 = vmul.f32 %v718, %v718
        %v783 = vmul.f32 %v719, %v719
        %v784 = vmul.f32 %v720, %v720
        %v785 = vmul.f32 %v721, %v721
        %v786 = vmul.f32 %v722, %v722
        %v787 = vmul.f32 %v723, %v723
        %v788 = vmul.f32 %v724, %v724
        %v789 = vmul.f32 %v725, %v725
        %v790 = vmul.f32 %v726, %v726
        %v791 = vmul.f32 %v727, %v727
        %v792 = vmul.f32 %v728, %v728
        %793 = vadd.xlane.f32.xlu0 %v761
        %v794 = vpop.xlane.xlu0 %793
        %795 = vadd.xlane.f32.xlu0 %v762
        %v796 = vpop.xlane.xlu0 %795
        %797 = vadd.xlane.f32.xlu0 %v763
        %v798 = vpop.xlane.xlu0 %797
        %799 = vadd.xlane.f32.xlu0 %v764
        %v800 = vpop.xlane.xlu0 %799
        %801 = vadd.xlane.f32.xlu0 %v765
        %v802 = vpop.xlane.xlu0 %801
        %803 = vadd.xlane.f32.xlu0 %v766
        %v804 = vpop.xlane.xlu0 %803
        %805 = vadd.xlane.f32.xlu0 %v767
        %v806 = vpop.xlane.xlu0 %805
        %807 = vadd.xlane.f32.xlu0 %v768
        %v808 = vpop.xlane.xlu0 %807
        %809 = vadd.xlane.f32.xlu0 %v769
        %v810 = vpop.xlane.xlu0 %809
        %811 = vadd.xlane.f32.xlu0 %v770
        %v812 = vpop.xlane.xlu0 %811
        %813 = vadd.xlane.f32.xlu0 %v771
        %v814 = vpop.xlane.xlu0 %813
        %815 = vadd.xlane.f32.xlu0 %v772
        %v816 = vpop.xlane.xlu0 %815
        %817 = vadd.xlane.f32.xlu0 %v773
        %v818 = vpop.xlane.xlu0 %817
        %819 = vadd.xlane.f32.xlu0 %v774
        %v820 = vpop.xlane.xlu0 %819
        %821 = vadd.xlane.f32.xlu0 %v775
        %v822 = vpop.xlane.xlu0 %821
        %823 = vadd.xlane.f32.xlu0 %v776
        %v824 = vpop.xlane.xlu0 %823
        %825 = vadd.xlane.f32.xlu0 %v777
        %v826 = vpop.xlane.xlu0 %825
        %827 = vadd.xlane.f32.xlu0 %v778
        %v828 = vpop.xlane.xlu0 %827
        %829 = vadd.xlane.f32.xlu0 %v779
        %v830 = vpop.xlane.xlu0 %829
        %831 = vadd.xlane.f32.xlu0 %v780
        %v832 = vpop.xlane.xlu0 %831
        %833 = vadd.xlane.f32.xlu0 %v781
        %v834 = vpop.xlane.xlu0 %833
        %835 = vadd.xlane.f32.xlu0 %v782
        %v836 = vpop.xlane.xlu0 %835
        %837 = vadd.xlane.f32.xlu0 %v783
        %v838 = vpop.xlane.xlu0 %837
        %839 = vadd.xlane.f32.xlu0 %v784
        %v840 = vpop.xlane.xlu0 %839
        %841 = vadd.xlane.f32.xlu0 %v785
        %v842 = vpop.xlane.xlu0 %841
        %843 = vadd.xlane.f32.xlu0 %v786
        %v844 = vpop.xlane.xlu0 %843
        %845 = vadd.xlane.f32.xlu0 %v787
        %v846 = vpop.xlane.xlu0 %845
        %847 = vadd.xlane.f32.xlu0 %v788
        %v848 = vpop.xlane.xlu0 %847
        %849 = vadd.xlane.f32.xlu0 %v789
        %v850 = vpop.xlane.xlu0 %849
        %851 = vadd.xlane.f32.xlu0 %v790
        %v852 = vpop.xlane.xlu0 %851
        %853 = vadd.xlane.f32.xlu0 %v791
        %v854 = vpop.xlane.xlu0 %853
        %855 = vadd.xlane.f32.xlu0 %v792
        %v856 = vpop.xlane.xlu0 %855
        %v857 = vrcp.pop 128.0
        %v858 = vmul.f32 %v794, %v857
        %v859 = vmul.f32 %v796, %v857
        %v860 = vmul.f32 %v798, %v857
        %v861 = vmul.f32 %v800, %v857
        %v862 = vmul.f32 %v802, %v857
        %v863 = vmul.f32 %v804, %v857
        %v864 = vmul.f32 %v806, %v857
        %v865 = vmul.f32 %v808, %v857
        %v866 = vmul.f32 %v810, %v857
        %v867 = vmul.f32 %v812, %v857
        %v868 = vmul.f32 %v814, %v857
        %v869 = vmul.f32 %v816, %v857
        %v870 = vmul.f32 %v818, %v857
        %v871 = vmul.f32 %v820, %v857
        %v872 = vmul.f32 %v822, %v857
        %v873 = vmul.f32 %v824, %v857
        %v874 = vmul.f32 %v826, %v857
        %v875 = vmul.f32 %v828, %v857
        %v876 = vmul.f32 %v830, %v857
        %v877 = vmul.f32 %v832, %v857
        %v878 = vmul.f32 %v834, %v857
        %v879 = vmul.f32 %v836, %v857
        %v880 = vmul.f32 %v838, %v857
        %v881 = vmul.f32 %v840, %v857
        %v882 = vmul.f32 %v842, %v857
        %v883 = vmul.f32 %v844, %v857
        %v884 = vmul.f32 %v846, %v857
        %v885 = vmul.f32 %v848, %v857
        %v886 = vmul.f32 %v850, %v857
        %v887 = vmul.f32 %v852, %v857
        %v888 = vmul.f32 %v854, %v857
        %v889 = vmul.f32 %v856, %v857
        %v890 = vadd.f32 %v858, 1.1920929e-07
        %v891 = vadd.f32 %v859, 1.1920929e-07
        %v892 = vadd.f32 %v860, 1.1920929e-07
        %v893 = vadd.f32 %v861, 1.1920929e-07
        %v894 = vadd.f32 %v862, 1.1920929e-07
        %v895 = vadd.f32 %v863, 1.1920929e-07
        %v896 = vadd.f32 %v864, 1.1920929e-07
        %v897 = vadd.f32 %v865, 1.1920929e-07
        %v898 = vadd.f32 %v866, 1.1920929e-07
        %v899 = vadd.f32 %v867, 1.1920929e-07
        %v900 = vadd.f32 %v868, 1.1920929e-07
        %v901 = vadd.f32 %v869, 1.1920929e-07
        %v902 = vadd.f32 %v870, 1.1920929e-07
        %v903 = vadd.f32 %v871, 1.1920929e-07
        %v904 = vadd.f32 %v872, 1.1920929e-07
        %v905 = vadd.f32 %v873, 1.1920929e-07
        %v906 = vadd.f32 %v874, 1.1920929e-07
        %v907 = vadd.f32 %v875, 1.1920929e-07
        %v908 = vadd.f32 %v876, 1.1920929e-07
        %v909 = vadd.f32 %v877, 1.1920929e-07
        %v910 = vadd.f32 %v878, 1.1920929e-07
        %v911 = vadd.f32 %v879, 1.1920929e-07
        %v912 = vadd.f32 %v880, 1.1920929e-07
        %v913 = vadd.f32 %v881, 1.1920929e-07
        %v914 = vadd.f32 %v882, 1.1920929e-07
        %v915 = vadd.f32 %v883, 1.1920929e-07
        %v916 = vadd.f32 %v884, 1.1920929e-07
        %v917 = vadd.f32 %v885, 1.1920929e-07
        %v918 = vadd.f32 %v886, 1.1920929e-07
        %v919 = vadd.f32 %v887, 1.1920929e-07
        %v920 = vadd.f32 %v888, 1.1920929e-07
        %v921 = vadd.f32 %v889, 1.1920929e-07
        %v922 = vrsqrt.pop %v890
        %v923 = vrsqrt.pop %v891
        %v924 = vrsqrt.pop %v892
        %v925 = vrsqrt.pop %v893
        %v926 = vrsqrt.pop %v894
        %v927 = vrsqrt.pop %v895
        %v928 = vrsqrt.pop %v896
        %v929 = vrsqrt.pop %v897
        %v930 = vrsqrt.pop %v898
        %v931 = vrsqrt.pop %v899
        %v932 = vrsqrt.pop %v900
        %v933 = vrsqrt.pop %v901
        %v934 = vrsqrt.pop %v902
        %v935 = vrsqrt.pop %v903
        %v936 = vrsqrt.pop %v904
        %v937 = vrsqrt.pop %v905
        %v938 = vrsqrt.pop %v906
        %v939 = vrsqrt.pop %v907
        %v940 = vrsqrt.pop %v908
        %v941 = vrsqrt.pop %v909
        %v942 = vrsqrt.pop %v910
        %v943 = vrsqrt.pop %v911
        %v944 = vrsqrt.pop %v912
        %v945 = vrsqrt.pop %v913
        %v946 = vrsqrt.pop %v914
        %v947 = vrsqrt.pop %v915
        %v948 = vrsqrt.pop %v916
        %v949 = vrsqrt.pop %v917
        %v950 = vrsqrt.pop %v918
        %v951 = vrsqrt.pop %v919
        %v952 = vrsqrt.pop %v920
        %v953 = vrsqrt.pop %v921
        %v954 = vmul.f32 %v697, %v922
        %v955 = vmul.f32 %v698, %v923
        %v956 = vmul.f32 %v699, %v924
        %v957 = vmul.f32 %v700, %v925
        %v958 = vmul.f32 %v701, %v926
        %v959 = vmul.f32 %v702, %v927
        %v960 = vmul.f32 %v703, %v928
        %v961 = vmul.f32 %v704, %v929
        %v962 = vmul.f32 %v705, %v930
        %v963 = vmul.f32 %v706, %v931
        %v964 = vmul.f32 %v707, %v932
        %v965 = vmul.f32 %v708, %v933
        %v966 = vmul.f32 %v709, %v934
        %v967 = vmul.f32 %v710, %v935
        %v968 = vmul.f32 %v711, %v936
        %v969 = vmul.f32 %v712, %v937
        %v970 = vmul.f32 %v713, %v938
        %v971 = vmul.f32 %v714, %v939
        %v972 = vmul.f32 %v715, %v940
        %v973 = vmul.f32 %v716, %v941
        %v974 = vmul.f32 %v717, %v942
        %v975 = vmul.f32 %v718, %v943
        %v976 = vmul.f32 %v719, %v944
        %v977 = vmul.f32 %v720, %v945
        %v978 = vmul.f32 %v721, %v946
        %v979 = vmul.f32 %v722, %v947
        %v980 = vmul.f32 %v723, %v948
        %v981 = vmul.f32 %v724, %v949
        %v982 = vmul.f32 %v725, %v950
        %v983 = vmul.f32 %v726, %v951
        %v984 = vmul.f32 %v727, %v952
        %v985 = vmul.f32 %v728, %v953
        %v986 = vpack.c.bf16 %v955, %v954
        %v987 = vpack.c.bf16 %v957, %v956
        %v988 = vpack.c.bf16 %v959, %v958
        %v989 = vpack.c.bf16 %v961, %v960
        %v990 = vpack.c.bf16 %v963, %v962
        %v991 = vpack.c.bf16 %v965, %v964
        %v992 = vpack.c.bf16 %v967, %v966
        %v993 = vpack.c.bf16 %v969, %v968
        %v994 = vpack.c.bf16 %v971, %v970
        %v995 = vpack.c.bf16 %v973, %v972
        %v996 = vpack.c.bf16 %v975, %v974
        %v997 = vpack.c.bf16 %v977, %v976
        %v998 = vpack.c.bf16 %v979, %v978
        %v999 = vpack.c.bf16 %v981, %v980
        %v1000 = vpack.c.bf16 %v983, %v982
        %v1001 = vpack.c.bf16 %v985, %v984
        %v1002 = vld [vmem:[#allocation13] sm:$0xff]
        %v1003 = vld [vmem:[#allocation13 + $0x8] sm:$0xff]
        %v1004 = vld [vmem:[#allocation13 + $0x10] sm:$0xff]
        %v1005 = vld [vmem:[#allocation13 + $0x18] sm:$0xff]
        %v1006 = vld [vmem:[#allocation13 + $0x20] sm:$0xff]
        %v1007 = vld [vmem:[#allocation13 + $0x28] sm:$0xff]
        %v1008 = vld [vmem:[#allocation13 + $0x30] sm:$0xff]
        %v1009 = vld [vmem:[#allocation13 + $0x38] sm:$0xff]
        %v1010 = vld [vmem:[#allocation13 + $0x40] sm:$0xff]
        %v1011 = vld [vmem:[#allocation13 + $0x48] sm:$0xff]
        %v1012 = vld [vmem:[#allocation13 + $0x50] sm:$0xff]
        %v1013 = vld [vmem:[#allocation13 + $0x58] sm:$0xff]
        %v1014 = vld [vmem:[#allocation13 + $0x60] sm:$0xff]
        %v1015 = vld [vmem:[#allocation13 + $0x68] sm:$0xff]
        %v1016 = vld [vmem:[#allocation13 + $0x70] sm:$0xff]
        %v1017 = vld [vmem:[#allocation13 + $0x78] sm:$0xff]
        %v1018 = vld [vmem:[#allocation13 + $0x80] sm:$0xff]
        %v1019 = vld [vmem:[#allocation13 + $0x88] sm:$0xff]
        %v1020 = vld [vmem:[#allocation13 + $0x90] sm:$0xff]
        %v1021 = vld [vmem:[#allocation13 + $0x98] sm:$0xff]
        %v1022 = vld [vmem:[#allocation13 + $0xa0] sm:$0xff]
        %v1023 = vld [vmem:[#allocation13 + $0xa8] sm:$0xff]
        %v1024 = vld [vmem:[#allocation13 + $0xb0] sm:$0xff]
        %v1025 = vld [vmem:[#allocation13 + $0xb8] sm:$0xff]
        %v1026 = vld [vmem:[#allocation13 + $0xc0] sm:$0xff]
        %v1027 = vld [vmem:[#allocation13 + $0xc8] sm:$0xff]
        %v1028 = vld [vmem:[#allocation13 + $0xd0] sm:$0xff]
        %v1029 = vld [vmem:[#allocation13 + $0xd8] sm:$0xff]
        %v1030 = vld [vmem:[#allocation13 + $0xe0] sm:$0xff]
        %v1031 = vld [vmem:[#allocation13 + $0xe8] sm:$0xff]
        %v1032 = vld [vmem:[#allocation13 + $0xf0] sm:$0xff]
        %v1033 = vld [vmem:[#allocation13 + $0xf8] sm:$0xff]
        %v1034 = vld [vmem:[#allocation13 + $0x100] sm:$0xff]
        %v1035 = vld [vmem:[#allocation13 + $0x108] sm:$0xff]
        %v1036 = vld [vmem:[#allocation13 + $0x110] sm:$0xff]
        %v1037 = vld [vmem:[#allocation13 + $0x118] sm:$0xff]
        %v1038 = vld [vmem:[#allocation13 + $0x120] sm:$0xff]
        %v1039 = vld [vmem:[#allocation13 + $0x128] sm:$0xff]
        %v1040 = vld [vmem:[#allocation13 + $0x130] sm:$0xff]
        %v1041 = vld [vmem:[#allocation13 + $0x138] sm:$0xff]
        %v1042 = vld [vmem:[#allocation13 + $0x140] sm:$0xff]
        %v1043 = vld [vmem:[#allocation13 + $0x148] sm:$0xff]
        %v1044 = vld [vmem:[#allocation13 + $0x150] sm:$0xff]
        %v1045 = vld [vmem:[#allocation13 + $0x158] sm:$0xff]
        %v1046 = vld [vmem:[#allocation13 + $0x160] sm:$0xff]
        %v1047 = vld [vmem:[#allocation13 + $0x168] sm:$0xff]
        %v1048 = vld [vmem:[#allocation13 + $0x170] sm:$0xff]
        %v1049 = vld [vmem:[#allocation13 + $0x178] sm:$0xff]
        %v1098 = vunpack.c.l.b16 %v1002
        %v1099 = vunpack.c.h.b16 %v1002
        %v1100 = vunpack.c.l.b16 %v1003
        %v1101 = vunpack.c.h.b16 %v1003
        %v1102 = vunpack.c.l.b16 %v1004
        %v1103 = vunpack.c.h.b16 %v1004
        %v1104 = vunpack.c.l.b16 %v1005
        %v1105 = vunpack.c.h.b16 %v1005
        %v1106 = vunpack.c.l.b16 %v1006
        %v1107 = vunpack.c.h.b16 %v1006
        %v1108 = vunpack.c.l.b16 %v1007
        %v1109 = vunpack.c.h.b16 %v1007
        %v1110 = vunpack.c.l.b16 %v1008
        %v1111 = vunpack.c.h.b16 %v1008
        %v1112 = vunpack.c.l.b16 %v1009
        %v1113 = vunpack.c.h.b16 %v1009
        %v1114 = vunpack.c.l.b16 %v1010
        %v1115 = vunpack.c.h.b16 %v1010
        %v1116 = vunpack.c.l.b16 %v1011
        %v1117 = vunpack.c.h.b16 %v1011
        %v1118 = vunpack.c.l.b16 %v1012
        %v1119 = vunpack.c.h.b16 %v1012
        %v1120 = vunpack.c.l.b16 %v1013
        %v1121 = vunpack.c.h.b16 %v1013
        %v1122 = vunpack.c.l.b16 %v1014
        %v1123 = vunpack.c.h.b16 %v1014
        %v1124 = vunpack.c.l.b16 %v1015
        %v1125 = vunpack.c.h.b16 %v1015
        %v1126 = vunpack.c.l.b16 %v1016
        %v1127 = vunpack.c.h.b16 %v1016
        %v1128 = vunpack.c.l.b16 %v1017
        %v1129 = vunpack.c.h.b16 %v1017
        %v1130 = vunpack.c.l.b16 %v1018
        %v1131 = vunpack.c.h.b16 %v1018
        %v1132 = vunpack.c.l.b16 %v1019
        %v1133 = vunpack.c.h.b16 %v1019
        %v1134 = vunpack.c.l.b16 %v1020
        %v1135 = vunpack.c.h.b16 %v1020
        %v1136 = vunpack.c.l.b16 %v1021
        %v1137 = vunpack.c.h.b16 %v1021
        %v1138 = vunpack.c.l.b16 %v1022
        %v1139 = vunpack.c.h.b16 %v1022
        %v1140 = vunpack.c.l.b16 %v1023
        %v1141 = vunpack.c.h.b16 %v1023
        %v1142 = vunpack.c.l.b16 %v1024
        %v1143 = vunpack.c.h.b16 %v1024
        %v1144 = vunpack.c.l.b16 %v1025
        %v1145 = vunpack.c.h.b16 %v1025
        %v1146 = vunpack.c.l.b16 %v1026
        %v1147 = vunpack.c.h.b16 %v1026
        %v1148 = vunpack.c.l.b16 %v1027
        %v1149 = vunpack.c.h.b16 %v1027
        %v1150 = vunpack.c.l.b16 %v1028
        %v1151 = vunpack.c.h.b16 %v1028
        %v1152 = vunpack.c.l.b16 %v1029
        %v1153 = vunpack.c.h.b16 %v1029
        %v1154 = vunpack.c.l.b16 %v1030
        %v1155 = vunpack.c.h.b16 %v1030
        %v1156 = vunpack.c.l.b16 %v1031
        %v1157 = vunpack.c.h.b16 %v1031
        %v1158 = vunpack.c.l.b16 %v1032
        %v1159 = vunpack.c.h.b16 %v1032
        %v1160 = vunpack.c.l.b16 %v1033
        %v1161 = vunpack.c.h.b16 %v1033
        %v1162 = vunpack.c.l.b16 %v1034
        %v1163 = vunpack.c.h.b16 %v1034
        %v1164 = vunpack.c.l.b16 %v1035
        %v1165 = vunpack.c.h.b16 %v1035
        %v1166 = vunpack.c.l.b16 %v1036
        %v1167 = vunpack.c.h.b16 %v1036
        %v1168 = vunpack.c.l.b16 %v1037
        %v1169 = vunpack.c.h.b16 %v1037
        %v1170 = vunpack.c.l.b16 %v1038
        %v1171 = vunpack.c.h.b16 %v1038
        %v1172 = vunpack.c.l.b16 %v1039
        %v1173 = vunpack.c.h.b16 %v1039
        %v1174 = vunpack.c.l.b16 %v1040
        %v1175 = vunpack.c.h.b16 %v1040
        %v1176 = vunpack.c.l.b16 %v1041
        %v1177 = vunpack.c.h.b16 %v1041
        %v1178 = vunpack.c.l.b16 %v1042
        %v1179 = vunpack.c.h.b16 %v1042
        %v1180 = vunpack.c.l.b16 %v1043
        %v1181 = vunpack.c.h.b16 %v1043
        %v1182 = vunpack.c.l.b16 %v1044
        %v1183 = vunpack.c.h.b16 %v1044
        %v1184 = vunpack.c.l.b16 %v1045
        %v1185 = vunpack.c.h.b16 %v1045
        %v1186 = vunpack.c.l.b16 %v1046
        %v1187 = vunpack.c.h.b16 %v1046
        %v1188 = vunpack.c.l.b16 %v1047
        %v1189 = vunpack.c.h.b16 %v1047
        %v1190 = vunpack.c.l.b16 %v1048
        %v1191 = vunpack.c.h.b16 %v1048
        %v1192 = vunpack.c.l.b16 %v1049
        %v1193 = vunpack.c.h.b16 %v1049
        %v1194 = vpack.c.b16 %v1104, %v1098
        %v1195 = vpack.c.b16 %v1105, %v1099
        %v1196 = vpack.c.b16 %v1106, %v1100
        %v1197 = vpack.c.b16 %v1107, %v1101
        %v1198 = vpack.c.b16 %v1108, %v1102
        %v1199 = vpack.c.b16 %v1109, %v1103
        %v1200 = vpack.c.b16 %v1116, %v1110
        %v1201 = vpack.c.b16 %v1117, %v1111
        %v1202 = vpack.c.b16 %v1118, %v1112
        %v1203 = vpack.c.b16 %v1119, %v1113
        %v1204 = vpack.c.b16 %v1120, %v1114
        %v1205 = vpack.c.b16 %v1121, %v1115
        %v1206 = vpack.c.b16 %v1128, %v1122
        %v1207 = vpack.c.b16 %v1129, %v1123
        %v1208 = vpack.c.b16 %v1130, %v1124
        %v1209 = vpack.c.b16 %v1131, %v1125
        %v1210 = vpack.c.b16 %v1132, %v1126
        %v1211 = vpack.c.b16 %v1133, %v1127
        %v1212 = vpack.c.b16 %v1140, %v1134
        %v1213 = vpack.c.b16 %v1141, %v1135
        %v1214 = vpack.c.b16 %v1142, %v1136
        %v1215 = vpack.c.b16 %v1143, %v1137
        %v1216 = vpack.c.b16 %v1144, %v1138
        %v1217 = vpack.c.b16 %v1145, %v1139
        %v1218 = vpack.c.b16 %v1152, %v1146
        %v1219 = vpack.c.b16 %v1153, %v1147
        %v1220 = vpack.c.b16 %v1154, %v1148
        %v1221 = vpack.c.b16 %v1155, %v1149
        %v1222 = vpack.c.b16 %v1156, %v1150
        %v1223 = vpack.c.b16 %v1157, %v1151
        %v1224 = vpack.c.b16 %v1164, %v1158
        %v1225 = vpack.c.b16 %v1165, %v1159
        %v1226 = vpack.c.b16 %v1166, %v1160
        %v1227 = vpack.c.b16 %v1167, %v1161
        %v1228 = vpack.c.b16 %v1168, %v1162
        %v1229 = vpack.c.b16 %v1169, %v1163
        %v1230 = vpack.c.b16 %v1176, %v1170
        %v1231 = vpack.c.b16 %v1177, %v1171
        %v1232 = vpack.c.b16 %v1178, %v1172
        %v1233 = vpack.c.b16 %v1179, %v1173
        %v1234 = vpack.c.b16 %v1180, %v1174
        %v1235 = vpack.c.b16 %v1181, %v1175
        %v1236 = vpack.c.b16 %v1188, %v1182
        %v1237 = vpack.c.b16 %v1189, %v1183
        %v1238 = vpack.c.b16 %v1190, %v1184
        %v1239 = vpack.c.b16 %v1191, %v1185
        %v1240 = vpack.c.b16 %v1192, %v1186
        %v1241 = vpack.c.b16 %v1193, %v1187
        %1290 = vmatprep.subr.bf16.mxu0 %v1237
        %1291 = vmatpush1.bf16.msra.mxu0 %v1236
        %1292 = vmatprep.subr.bf16.mxu0 %v1231
        %1293 = vmatpush1.bf16.msra.mxu0 %v1230
        %1294 = vmatprep.subr.bf16.mxu0 %v1225
        %1295 = vmatpush1.bf16.msra.mxu0 %v1224
        %1296 = vmatprep.subr.bf16.mxu0 %v1219
        %1297 = vmatpush1.bf16.msra.mxu0 %v1218
        %1298 = vmatprep.subr.bf16.mxu0 %v1213
        %1299 = vmatpush1.bf16.msra.mxu0 %v1212
        %1300 = vmatprep.subr.bf16.mxu0 %v1207
        %1301 = vmatpush1.bf16.msra.mxu0 %v1206
        %1302 = vmatprep.subr.bf16.mxu0 %v1201
        %1303 = vmatpush1.bf16.msra.mxu0 %v1200
        %1304 = vmatprep.subr.bf16.mxu0 %v1195
        %1305 = vmatpush1.bf16.msra.mxu0 %v1194
        %1306 = vmatprep.subr.bf16.mxu0 0
        %1307 = vmatpush2.bf16.msra.mxu0 0
        %1308 = vmatprep.subr.bf16.mxu0 0
        %1309 = vmatpush2.bf16.msra.mxu0 0
        %1310 = vmatprep.subr.bf16.mxu0 0
        %1311 = vmatpush2.bf16.msra.mxu0 0
        %1312 = vmatprep.subr.bf16.mxu0 0
        %1313 = vmatpush2.bf16.msra.mxu0 0
        %1314 = vmatprep.subr.bf16.mxu0 0
        %1315 = vmatpush2.bf16.msra.mxu0 0
        %1316 = vmatprep.subr.bf16.mxu0 0
        %1317 = vmatpush2.bf16.msra.mxu0 0
        %1318 = vmatprep.subr.bf16.mxu0 0
        %1319 = vmatpush2.bf16.msra.mxu0 0
        %1320 = vmatprep.subr.bf16.mxu0 0
        %1321 = vmatpush2.bf16.msra.mxu0 0
        %1322 = vmatprep.mubr.bf16.mxu0 0
        %1323 = vmatmul.mubr.bf16.gmra.mxu0 %v986
        %v1324 = vpop.f32.mrf.mxu0
        %v1325 = vadd.f32 0.0, %v1324
        %v1326 = vpop.f32.mrf.mxu0
        %v1327 = vadd.f32 0.0, %v1326
        %v1328 = vpop.f32.mrf.mxu0
        %v1329 = vadd.f32 0.0, %v1328
        %v1330 = vpop.f32.mrf.mxu0
        %v1331 = vadd.f32 0.0, %v1330
        %1332 = vmatprep.mubr.bf16.mxu0 0
        %1333 = vmatmul.mubr.bf16.gmra.mxu0 %v987
        %v1334 = vpop.f32.mrf.mxu0
        %v1335 = vadd.f32 0.0, %v1334
        %v1336 = vpop.f32.mrf.mxu0
        %v1337 = vadd.f32 0.0, %v1336
        %v1338 = vpop.f32.mrf.mxu0
        %v1339 = vadd.f32 0.0, %v1338
        %v1340 = vpop.f32.mrf.mxu0
        %v1341 = vadd.f32 0.0, %v1340
        %1342 = vmatprep.mubr.bf16.mxu0 0
        %1343 = vmatmul.mubr.bf16.gmra.mxu0 %v988
        %v1344 = vpop.f32.mrf.mxu0
        %v1345 = vadd.f32 0.0, %v1344
        %v1346 = vpop.f32.mrf.mxu0
        %v1347 = vadd.f32 0.0, %v1346
        %v1348 = vpop.f32.mrf.mxu0
        %v1349 = vadd.f32 0.0, %v1348
        %v1350 = vpop.f32.mrf.mxu0
        %v1351 = vadd.f32 0.0, %v1350
        %1352 = vmatprep.mubr.bf16.mxu0 0
        %1353 = vmatmul.mubr.bf16.gmra.mxu0 %v989
        %v1354 = vpop.f32.mrf.mxu0
        %v1355 = vadd.f32 0.0, %v1354
        %v1356 = vpop.f32.mrf.mxu0
        %v1357 = vadd.f32 0.0, %v1356
        %v1358 = vpop.f32.mrf.mxu0
        %v1359 = vadd.f32 0.0, %v1358
        %v1360 = vpop.f32.mrf.mxu0
        %v1361 = vadd.f32 0.0, %v1360
        %1362 = vmatprep.mubr.bf16.mxu0 0
        %1363 = vmatmul.mubr.bf16.gmra.mxu0 %v990
        %v1364 = vpop.f32.mrf.mxu0
        %v1365 = vadd.f32 0.0, %v1364
        %v1366 = vpop.f32.mrf.mxu0
        %v1367 = vadd.f32 0.0, %v1366
        %v1368 = vpop.f32.mrf.mxu0
        %v1369 = vadd.f32 0.0, %v1368
        %v1370 = vpop.f32.mrf.mxu0
        %v1371 = vadd.f32 0.0, %v1370
        %1372 = vmatprep.mubr.bf16.mxu0 0
        %1373 = vmatmul.mubr.bf16.gmra.mxu0 %v991
        %v1374 = vpop.f32.mrf.mxu0
        %v1375 = vadd.f32 0.0, %v1374
        %v1376 = vpop.f32.mrf.mxu0
        %v1377 = vadd.f32 0.0, %v1376
        %v1378 = vpop.f32.mrf.mxu0
        %v1379 = vadd.f32 0.0, %v1378
        %v1380 = vpop.f32.mrf.mxu0
        %v1381 = vadd.f32 0.0, %v1380
        %1382 = vmatprep.mubr.bf16.mxu0 0
        %1383 = vmatmul.mubr.bf16.gmra.mxu0 %v992
        %v1384 = vpop.f32.mrf.mxu0
        %v1385 = vadd.f32 0.0, %v1384
        %v1386 = vpop.f32.mrf.mxu0
        %v1387 = vadd.f32 0.0, %v1386
        %v1388 = vpop.f32.mrf.mxu0
        %v1389 = vadd.f32 0.0, %v1388
        %v1390 = vpop.f32.mrf.mxu0
        %v1391 = vadd.f32 0.0, %v1390
        %1392 = vmatprep.mubr.bf16.mxu0 0
        %1393 = vmatmul.mubr.bf16.gmra.mxu0 %v993
        %v1394 = vpop.f32.mrf.mxu0
        %v1395 = vadd.f32 0.0, %v1394
        %v1396 = vpop.f32.mrf.mxu0
        %v1397 = vadd.f32 0.0, %v1396
        %v1398 = vpop.f32.mrf.mxu0
        %v1399 = vadd.f32 0.0, %v1398
        %v1400 = vpop.f32.mrf.mxu0
        %v1401 = vadd.f32 0.0, %v1400
        %1402 = vmatprep.mubr.bf16.mxu0 0
        %1403 = vmatmul.mubr.bf16.gmra.mxu0 %v994
        %v1404 = vpop.f32.mrf.mxu0
        %v1405 = vadd.f32 0.0, %v1404
        %v1406 = vpop.f32.mrf.mxu0
        %v1407 = vadd.f32 0.0, %v1406
        %v1408 = vpop.f32.mrf.mxu0
        %v1409 = vadd.f32 0.0, %v1408
        %v1410 = vpop.f32.mrf.mxu0
        %v1411 = vadd.f32 0.0, %v1410
        %1412 = vmatprep.mubr.bf16.mxu0 0
        %1413 = vmatmul.mubr.bf16.gmra.mxu0 %v995
        %v1414 = vpop.f32.mrf.mxu0
        %v1415 = vadd.f32 0.0, %v1414
        %v1416 = vpop.f32.mrf.mxu0
        %v1417 = vadd.f32 0.0, %v1416
        %v1418 = vpop.f32.mrf.mxu0
        %v1419 = vadd.f32 0.0, %v1418
        %v1420 = vpop.f32.mrf.mxu0
        %v1421 = vadd.f32 0.0, %v1420
        %1422 = vmatprep.mubr.bf16.mxu0 0
        %1423 = vmatmul.mubr.bf16.gmra.mxu0 %v996
        %v1424 = vpop.f32.mrf.mxu0
        %v1425 = vadd.f32 0.0, %v1424
        %v1426 = vpop.f32.mrf.mxu0
        %v1427 = vadd.f32 0.0, %v1426
        %v1428 = vpop.f32.mrf.mxu0
        %v1429 = vadd.f32 0.0, %v1428
        %v1430 = vpop.f32.mrf.mxu0
        %v1431 = vadd.f32 0.0, %v1430
        %1432 = vmatprep.mubr.bf16.mxu0 0
        %1433 = vmatmul.mubr.bf16.gmra.mxu0 %v997
        %v1434 = vpop.f32.mrf.mxu0
        %v1435 = vadd.f32 0.0, %v1434
        %v1436 = vpop.f32.mrf.mxu0
        %v1437 = vadd.f32 0.0, %v1436
        %v1438 = vpop.f32.mrf.mxu0
        %v1439 = vadd.f32 0.0, %v1438
        %v1440 = vpop.f32.mrf.mxu0
        %v1441 = vadd.f32 0.0, %v1440
        %1442 = vmatprep.mubr.bf16.mxu0 0
        %1443 = vmatmul.mubr.bf16.gmra.mxu0 %v998
        %v1444 = vpop.f32.mrf.mxu0
        %v1445 = vadd.f32 0.0, %v1444
        %v1446 = vpop.f32.mrf.mxu0
        %v1447 = vadd.f32 0.0, %v1446
        %v1448 = vpop.f32.mrf.mxu0
        %v1449 = vadd.f32 0.0, %v1448
        %v1450 = vpop.f32.mrf.mxu0
        %v1451 = vadd.f32 0.0, %v1450
        %1452 = vmatprep.mubr.bf16.mxu0 0
        %1453 = vmatmul.mubr.bf16.gmra.mxu0 %v999
        %v1454 = vpop.f32.mrf.mxu0
        %v1455 = vadd.f32 0.0, %v1454
        %v1456 = vpop.f32.mrf.mxu0
        %v1457 = vadd.f32 0.0, %v1456
        %v1458 = vpop.f32.mrf.mxu0
        %v1459 = vadd.f32 0.0, %v1458
        %v1460 = vpop.f32.mrf.mxu0
        %v1461 = vadd.f32 0.0, %v1460
        %1462 = vmatprep.mubr.bf16.mxu0 0
        %1463 = vmatmul.mubr.bf16.gmra.mxu0 %v1000
        %v1464 = vpop.f32.mrf.mxu0
        %v1465 = vadd.f32 0.0, %v1464
        %v1466 = vpop.f32.mrf.mxu0
        %v1467 = vadd.f32 0.0, %v1466
        %v1468 = vpop.f32.mrf.mxu0
        %v1469 = vadd.f32 0.0, %v1468
        %v1470 = vpop.f32.mrf.mxu0
        %v1471 = vadd.f32 0.0, %v1470
        %1472 = vmatprep.mubr.bf16.mxu0 0
        %1473 = vmatmul.mubr.bf16.gmra.mxu0 %v1001
        %v1474 = vpop.f32.mrf.mxu0
        %v1475 = vadd.f32 0.0, %v1474
        %v1476 = vpop.f32.mrf.mxu0
        %v1477 = vadd.f32 0.0, %v1476
        %v1478 = vpop.f32.mrf.mxu0
        %v1479 = vadd.f32 0.0, %v1478
        %v1480 = vpop.f32.mrf.mxu0
        %v1481 = vadd.f32 0.0, %v1480
        %1482 = vdwg.mxu0
        %1483 = vmatprep.subr.bf16.mxu0 %v1239
        %1484 = vmatpush1.bf16.msra.mxu0 %v1238
        %1485 = vmatprep.subr.bf16.mxu0 %v1233
        %1486 = vmatpush1.bf16.msra.mxu0 %v1232
        %1487 = vmatprep.subr.bf16.mxu0 %v1227
        %1488 = vmatpush1.bf16.msra.mxu0 %v1226
        %1489 = vmatprep.subr.bf16.mxu0 %v1221
        %1490 = vmatpush1.bf16.msra.mxu0 %v1220
        %1491 = vmatprep.subr.bf16.mxu0 %v1215
        %1492 = vmatpush1.bf16.msra.mxu0 %v1214
        %1493 = vmatprep.subr.bf16.mxu0 %v1209
        %1494 = vmatpush1.bf16.msra.mxu0 %v1208
        %1495 = vmatprep.subr.bf16.mxu0 %v1203
        %1496 = vmatpush1.bf16.msra.mxu0 %v1202
        %1497 = vmatprep.subr.bf16.mxu0 %v1197
        %1498 = vmatpush1.bf16.msra.mxu0 %v1196
        %1499 = vmatprep.subr.bf16.mxu0 0
        %1500 = vmatpush2.bf16.msra.mxu0 0
        %1501 = vmatprep.subr.bf16.mxu0 0
        %1502 = vmatpush2.bf16.msra.mxu0 0
        %1503 = vmatprep.subr.bf16.mxu0 0
        %1504 = vmatpush2.bf16.msra.mxu0 0
        %1505 = vmatprep.subr.bf16.mxu0 0
        %1506 = vmatpush2.bf16.msra.mxu0 0
        %1507 = vmatprep.subr.bf16.mxu0 0
        %1508 = vmatpush2.bf16.msra.mxu0 0
        %1509 = vmatprep.subr.bf16.mxu0 0
        %1510 = vmatpush2.bf16.msra.mxu0 0
        %1511 = vmatprep.subr.bf16.mxu0 0
        %1512 = vmatpush2.bf16.msra.mxu0 0
        %1513 = vmatprep.subr.bf16.mxu0 0
        %1514 = vmatpush2.bf16.msra.mxu0 0
        %1515 = vmatprep.mubr.bf16.mxu0 0
        %1516 = vmatmul.mubr.bf16.gmra.mxu0 %v986
        %v1517 = vpop.f32.mrf.mxu0
        %v1518 = vadd.f32 0.0, %v1517
        %v1519 = vpop.f32.mrf.mxu0
        %v1520 = vadd.f32 0.0, %v1519
        %v1521 = vpop.f32.mrf.mxu0
        %v1522 = vadd.f32 0.0, %v1521
        %v1523 = vpop.f32.mrf.mxu0
        %v1524 = vadd.f32 0.0, %v1523
        %1525 = vmatprep.mubr.bf16.mxu0 0
        %1526 = vmatmul.mubr.bf16.gmra.mxu0 %v987
        %v1527 = vpop.f32.mrf.mxu0
        %v1528 = vadd.f32 0.0, %v1527
        %v1529 = vpop.f32.mrf.mxu0
        %v1530 = vadd.f32 0.0, %v1529
        %v1531 = vpop.f32.mrf.mxu0
        %v1532 = vadd.f32 0.0, %v1531
        %v1533 = vpop.f32.mrf.mxu0
        %v1534 = vadd.f32 0.0, %v1533
        %1535 = vmatprep.mubr.bf16.mxu0 0
        %1536 = vmatmul.mubr.bf16.gmra.mxu0 %v988
        %v1537 = vpop.f32.mrf.mxu0
        %v1538 = vadd.f32 0.0, %v1537
        %v1539 = vpop.f32.mrf.mxu0
        %v1540 = vadd.f32 0.0, %v1539
        %v1541 = vpop.f32.mrf.mxu0
        %v1542 = vadd.f32 0.0, %v1541
        %v1543 = vpop.f32.mrf.mxu0
        %v1544 = vadd.f32 0.0, %v1543
        %1545 = vmatprep.mubr.bf16.mxu0 0
        %1546 = vmatmul.mubr.bf16.gmra.mxu0 %v989
        %v1547 = vpop.f32.mrf.mxu0
        %v1548 = vadd.f32 0.0, %v1547
        %v1549 = vpop.f32.mrf.mxu0
        %v1550 = vadd.f32 0.0, %v1549
        %v1551 = vpop.f32.mrf.mxu0
        %v1552 = vadd.f32 0.0, %v1551
        %v1553 = vpop.f32.mrf.mxu0
        %v1554 = vadd.f32 0.0, %v1553
        %1555 = vmatprep.mubr.bf16.mxu0 0
        %1556 = vmatmul.mubr.bf16.gmra.mxu0 %v990
        %v1557 = vpop.f32.mrf.mxu0
        %v1558 = vadd.f32 0.0, %v1557
        %v1559 = vpop.f32.mrf.mxu0
        %v1560 = vadd.f32 0.0, %v1559
        %v1561 = vpop.f32.mrf.mxu0
        %v1562 = vadd.f32 0.0, %v1561
        %v1563 = vpop.f32.mrf.mxu0
        %v1564 = vadd.f32 0.0, %v1563
        %1565 = vmatprep.mubr.bf16.mxu0 0
        %1566 = vmatmul.mubr.bf16.gmra.mxu0 %v991
        %v1567 = vpop.f32.mrf.mxu0
        %v1568 = vadd.f32 0.0, %v1567
        %v1569 = vpop.f32.mrf.mxu0
        %v1570 = vadd.f32 0.0, %v1569
        %v1571 = vpop.f32.mrf.mxu0
        %v1572 = vadd.f32 0.0, %v1571
        %v1573 = vpop.f32.mrf.mxu0
        %v1574 = vadd.f32 0.0, %v1573
        %1575 = vmatprep.mubr.bf16.mxu0 0
        %1576 = vmatmul.mubr.bf16.gmra.mxu0 %v992
        %v1577 = vpop.f32.mrf.mxu0
        %v1578 = vadd.f32 0.0, %v1577
        %v1579 = vpop.f32.mrf.mxu0
        %v1580 = vadd.f32 0.0, %v1579
        %v1581 = vpop.f32.mrf.mxu0
        %v1582 = vadd.f32 0.0, %v1581
        %v1583 = vpop.f32.mrf.mxu0
        %v1584 = vadd.f32 0.0, %v1583
        %1585 = vmatprep.mubr.bf16.mxu0 0
        %1586 = vmatmul.mubr.bf16.gmra.mxu0 %v993
        %v1587 = vpop.f32.mrf.mxu0
        %v1588 = vadd.f32 0.0, %v1587
        %v1589 = vpop.f32.mrf.mxu0
        %v1590 = vadd.f32 0.0, %v1589
        %v1591 = vpop.f32.mrf.mxu0
        %v1592 = vadd.f32 0.0, %v1591
        %v1593 = vpop.f32.mrf.mxu0
        %v1594 = vadd.f32 0.0, %v1593
        %1595 = vmatprep.mubr.bf16.mxu0 0
        %1596 = vmatmul.mubr.bf16.gmra.mxu0 %v994
        %v1597 = vpop.f32.mrf.mxu0
        %v1598 = vadd.f32 0.0, %v1597
        %v1599 = vpop.f32.mrf.mxu0
        %v1600 = vadd.f32 0.0, %v1599
        %v1601 = vpop.f32.mrf.mxu0
        %v1602 = vadd.f32 0.0, %v1601
        %v1603 = vpop.f32.mrf.mxu0
        %v1604 = vadd.f32 0.0, %v1603
        %1605 = vmatprep.mubr.bf16.mxu0 0
        %1606 = vmatmul.mubr.bf16.gmra.mxu0 %v995
        %v1607 = vpop.f32.mrf.mxu0
        %v1608 = vadd.f32 0.0, %v1607
        %v1609 = vpop.f32.mrf.mxu0
        %v1610 = vadd.f32 0.0, %v1609
        %v1611 = vpop.f32.mrf.mxu0
        %v1612 = vadd.f32 0.0, %v1611
        %v1613 = vpop.f32.mrf.mxu0
        %v1614 = vadd.f32 0.0, %v1613
        %1615 = vmatprep.mubr.bf16.mxu0 0
        %1616 = vmatmul.mubr.bf16.gmra.mxu0 %v996
        %v1617 = vpop.f32.mrf.mxu0
        %v1618 = vadd.f32 0.0, %v1617
        %v1619 = vpop.f32.mrf.mxu0
        %v1620 = vadd.f32 0.0, %v1619
        %v1621 = vpop.f32.mrf.mxu0
        %v1622 = vadd.f32 0.0, %v1621
        %v1623 = vpop.f32.mrf.mxu0
        %v1624 = vadd.f32 0.0, %v1623
        %1625 = vmatprep.mubr.bf16.mxu0 0
        %1626 = vmatmul.mubr.bf16.gmra.mxu0 %v997
        %v1627 = vpop.f32.mrf.mxu0
        %v1628 = vadd.f32 0.0, %v1627
        %v1629 = vpop.f32.mrf.mxu0
        %v1630 = vadd.f32 0.0, %v1629
        %v1631 = vpop.f32.mrf.mxu0
        %v1632 = vadd.f32 0.0, %v1631
        %v1633 = vpop.f32.mrf.mxu0
        %v1634 = vadd.f32 0.0, %v1633
        %1635 = vmatprep.mubr.bf16.mxu0 0
        %1636 = vmatmul.mubr.bf16.gmra.mxu0 %v998
        %v1637 = vpop.f32.mrf.mxu0
        %v1638 = vadd.f32 0.0, %v1637
        %v1639 = vpop.f32.mrf.mxu0
        %v1640 = vadd.f32 0.0, %v1639
        %v1641 = vpop.f32.mrf.mxu0
        %v1642 = vadd.f32 0.0, %v1641
        %v1643 = vpop.f32.mrf.mxu0
        %v1644 = vadd.f32 0.0, %v1643
        %1645 = vmatprep.mubr.bf16.mxu0 0
        %1646 = vmatmul.mubr.bf16.gmra.mxu0 %v999
        %v1647 = vpop.f32.mrf.mxu0
        %v1648 = vadd.f32 0.0, %v1647
        %v1649 = vpop.f32.mrf.mxu0
        %v1650 = vadd.f32 0.0, %v1649
        %v1651 = vpop.f32.mrf.mxu0
        %v1652 = vadd.f32 0.0, %v1651
        %v1653 = vpop.f32.mrf.mxu0
        %v1654 = vadd.f32 0.0, %v1653
        %1655 = vmatprep.mubr.bf16.mxu0 0
        %1656 = vmatmul.mubr.bf16.gmra.mxu0 %v1000
        %v1657 = vpop.f32.mrf.mxu0
        %v1658 = vadd.f32 0.0, %v1657
        %v1659 = vpop.f32.mrf.mxu0
        %v1660 = vadd.f32 0.0, %v1659
        %v1661 = vpop.f32.mrf.mxu0
        %v1662 = vadd.f32 0.0, %v1661
        %v1663 = vpop.f32.mrf.mxu0
        %v1664 = vadd.f32 0.0, %v1663
        %1665 = vmatprep.mubr.bf16.mxu0 0
        %1666 = vmatmul.mubr.bf16.gmra.mxu0 %v1001
        %v1667 = vpop.f32.mrf.mxu0
        %v1668 = vadd.f32 0.0, %v1667
        %v1669 = vpop.f32.mrf.mxu0
        %v1670 = vadd.f32 0.0, %v1669
        %v1671 = vpop.f32.mrf.mxu0
        %v1672 = vadd.f32 0.0, %v1671
        %v1673 = vpop.f32.mrf.mxu0
        %v1674 = vadd.f32 0.0, %v1673
        %1675 = vdwg.mxu0
        %1676 = vmatprep.subr.bf16.mxu0 %v1241
        %1677 = vmatpush1.bf16.msra.mxu0 %v1240
        %1678 = vmatprep.subr.bf16.mxu0 %v1235
        %1679 = vmatpush1.bf16.msra.mxu0 %v1234
        %1680 = vmatprep.subr.bf16.mxu0 %v1229
        %1681 = vmatpush1.bf16.msra.mxu0 %v1228
        %1682 = vmatprep.subr.bf16.mxu0 %v1223
        %1683 = vmatpush1.bf16.msra.mxu0 %v1222
        %1684 = vmatprep.subr.bf16.mxu0 %v1217
        %1685 = vmatpush1.bf16.msra.mxu0 %v1216
        %1686 = vmatprep.subr.bf16.mxu0 %v1211
        %1687 = vmatpush1.bf16.msra.mxu0 %v1210
        %1688 = vmatprep.subr.bf16.mxu0 %v1205
        %1689 = vmatpush1.bf16.msra.mxu0 %v1204
        %1690 = vmatprep.subr.bf16.mxu0 %v1199
        %1691 = vmatpush1.bf16.msra.mxu0 %v1198
        %1692 = vmatprep.subr.bf16.mxu0 0
        %1693 = vmatpush2.bf16.msra.mxu0 0
        %1694 = vmatprep.subr.bf16.mxu0 0
        %1695 = vmatpush2.bf16.msra.mxu0 0
        %1696 = vmatprep.subr.bf16.mxu0 0
        %1697 = vmatpush2.bf16.msra.mxu0 0
        %1698 = vmatprep.subr.bf16.mxu0 0
        %1699 = vmatpush2.bf16.msra.mxu0 0
        %1700 = vmatprep.subr.bf16.mxu0 0
        %1701 = vmatpush2.bf16.msra.mxu0 0
        %1702 = vmatprep.subr.bf16.mxu0 0
        %1703 = vmatpush2.bf16.msra.mxu0 0
        %1704 = vmatprep.subr.bf16.mxu0 0
        %1705 = vmatpush2.bf16.msra.mxu0 0
        %1706 = vmatprep.subr.bf16.mxu0 0
        %1707 = vmatpush2.bf16.msra.mxu0 0
        %1708 = vmatprep.mubr.bf16.mxu0 0
        %1709 = vmatmul.mubr.bf16.gmra.mxu0 %v986
        %v1710 = vpop.f32.mrf.mxu0
        %v1711 = vadd.f32 0.0, %v1710
        %v1712 = vpop.f32.mrf.mxu0
        %v1713 = vadd.f32 0.0, %v1712
        %v1714 = vpop.f32.mrf.mxu0
        %v1715 = vadd.f32 0.0, %v1714
        %v1716 = vpop.f32.mrf.mxu0
        %v1717 = vadd.f32 0.0, %v1716
        %1718 = vmatprep.mubr.bf16.mxu0 0
        %1719 = vmatmul.mubr.bf16.gmra.mxu0 %v987
        %v1720 = vpop.f32.mrf.mxu0
        %v1721 = vadd.f32 0.0, %v1720
        %v1722 = vpop.f32.mrf.mxu0
        %v1723 = vadd.f32 0.0, %v1722
        %v1724 = vpop.f32.mrf.mxu0
        %v1725 = vadd.f32 0.0, %v1724
        %v1726 = vpop.f32.mrf.mxu0
        %v1727 = vadd.f32 0.0, %v1726
        %1728 = vmatprep.mubr.bf16.mxu0 0
        %1729 = vmatmul.mubr.bf16.gmra.mxu0 %v988
        %v1730 = vpop.f32.mrf.mxu0
        %v1731 = vadd.f32 0.0, %v1730
        %v1732 = vpop.f32.mrf.mxu0
        %v1733 = vadd.f32 0.0, %v1732
        %v1734 = vpop.f32.mrf.mxu0
        %v1735 = vadd.f32 0.0, %v1734
        %v1736 = vpop.f32.mrf.mxu0
        %v1737 = vadd.f32 0.0, %v1736
        %1738 = vmatprep.mubr.bf16.mxu0 0
        %1739 = vmatmul.mubr.bf16.gmra.mxu0 %v989
        %v1740 = vpop.f32.mrf.mxu0
        %v1741 = vadd.f32 0.0, %v1740
        %v1742 = vpop.f32.mrf.mxu0
        %v1743 = vadd.f32 0.0, %v1742
        %v1744 = vpop.f32.mrf.mxu0
        %v1745 = vadd.f32 0.0, %v1744
        %v1746 = vpop.f32.mrf.mxu0
        %v1747 = vadd.f32 0.0, %v1746
        %1748 = vmatprep.mubr.bf16.mxu0 0
        %1749 = vmatmul.mubr.bf16.gmra.mxu0 %v990
        %v1750 = vpop.f32.mrf.mxu0
        %v1751 = vadd.f32 0.0, %v1750
        %v1752 = vpop.f32.mrf.mxu0
        %v1753 = vadd.f32 0.0, %v1752
        %v1754 = vpop.f32.mrf.mxu0
        %v1755 = vadd.f32 0.0, %v1754
        %v1756 = vpop.f32.mrf.mxu0
        %v1757 = vadd.f32 0.0, %v1756
        %1758 = vmatprep.mubr.bf16.mxu0 0
        %1759 = vmatmul.mubr.bf16.gmra.mxu0 %v991
        %v1760 = vpop.f32.mrf.mxu0
        %v1761 = vadd.f32 0.0, %v1760
        %v1762 = vpop.f32.mrf.mxu0
        %v1763 = vadd.f32 0.0, %v1762
        %v1764 = vpop.f32.mrf.mxu0
        %v1765 = vadd.f32 0.0, %v1764
        %v1766 = vpop.f32.mrf.mxu0
        %v1767 = vadd.f32 0.0, %v1766
        %1768 = vmatprep.mubr.bf16.mxu0 0
        %1769 = vmatmul.mubr.bf16.gmra.mxu0 %v992
        %v1770 = vpop.f32.mrf.mxu0
        %v1771 = vadd.f32 0.0, %v1770
        %v1772 = vpop.f32.mrf.mxu0
        %v1773 = vadd.f32 0.0, %v1772
        %v1774 = vpop.f32.mrf.mxu0
        %v1775 = vadd.f32 0.0, %v1774
        %v1776 = vpop.f32.mrf.mxu0
        %v1777 = vadd.f32 0.0, %v1776
        %1778 = vmatprep.mubr.bf16.mxu0 0
        %1779 = vmatmul.mubr.bf16.gmra.mxu0 %v993
        %v1780 = vpop.f32.mrf.mxu0
        %v1781 = vadd.f32 0.0, %v1780
        %v1782 = vpop.f32.mrf.mxu0
        %v1783 = vadd.f32 0.0, %v1782
        %v1784 = vpop.f32.mrf.mxu0
        %v1785 = vadd.f32 0.0, %v1784
        %v1786 = vpop.f32.mrf.mxu0
        %v1787 = vadd.f32 0.0, %v1786
        %1788 = vmatprep.mubr.bf16.mxu0 0
        %1789 = vmatmul.mubr.bf16.gmra.mxu0 %v994
        %v1790 = vpop.f32.mrf.mxu0
        %v1791 = vadd.f32 0.0, %v1790
        %v1792 = vpop.f32.mrf.mxu0
        %v1793 = vadd.f32 0.0, %v1792
        %v1794 = vpop.f32.mrf.mxu0
        %v1795 = vadd.f32 0.0, %v1794
        %v1796 = vpop.f32.mrf.mxu0
        %v1797 = vadd.f32 0.0, %v1796
        %1798 = vmatprep.mubr.bf16.mxu0 0
        %1799 = vmatmul.mubr.bf16.gmra.mxu0 %v995
        %v1800 = vpop.f32.mrf.mxu0
        %v1801 = vadd.f32 0.0, %v1800
        %v1802 = vpop.f32.mrf.mxu0
        %v1803 = vadd.f32 0.0, %v1802
        %v1804 = vpop.f32.mrf.mxu0
        %v1805 = vadd.f32 0.0, %v1804
        %v1806 = vpop.f32.mrf.mxu0
        %v1807 = vadd.f32 0.0, %v1806
        %1808 = vmatprep.mubr.bf16.mxu0 0
        %1809 = vmatmul.mubr.bf16.gmra.mxu0 %v996
        %v1810 = vpop.f32.mrf.mxu0
        %v1811 = vadd.f32 0.0, %v1810
        %v1812 = vpop.f32.mrf.mxu0
        %v1813 = vadd.f32 0.0, %v1812
        %v1814 = vpop.f32.mrf.mxu0
        %v1815 = vadd.f32 0.0, %v1814
        %v1816 = vpop.f32.mrf.mxu0
        %v1817 = vadd.f32 0.0, %v1816
        %1818 = vmatprep.mubr.bf16.mxu0 0
        %1819 = vmatmul.mubr.bf16.gmra.mxu0 %v997
        %v1820 = vpop.f32.mrf.mxu0
        %v1821 = vadd.f32 0.0, %v1820
        %v1822 = vpop.f32.mrf.mxu0
        %v1823 = vadd.f32 0.0, %v1822
        %v1824 = vpop.f32.mrf.mxu0
        %v1825 = vadd.f32 0.0, %v1824
        %v1826 = vpop.f32.mrf.mxu0
        %v1827 = vadd.f32 0.0, %v1826
        %1828 = vmatprep.mubr.bf16.mxu0 0
        %1829 = vmatmul.mubr.bf16.gmra.mxu0 %v998
        %v1830 = vpop.f32.mrf.mxu0
        %v1831 = vadd.f32 0.0, %v1830
        %v1832 = vpop.f32.mrf.mxu0
        %v1833 = vadd.f32 0.0, %v1832
        %v1834 = vpop.f32.mrf.mxu0
        %v1835 = vadd.f32 0.0, %v1834
        %v1836 = vpop.f32.mrf.mxu0
        %v1837 = vadd.f32 0.0, %v1836
        %1838 = vmatprep.mubr.bf16.mxu0 0
        %1839 = vmatmul.mubr.bf16.gmra.mxu0 %v999
        %v1840 = vpop.f32.mrf.mxu0
        %v1841 = vadd.f32 0.0, %v1840
        %v1842 = vpop.f32.mrf.mxu0
        %v1843 = vadd.f32 0.0, %v1842
        %v1844 = vpop.f32.mrf.mxu0
        %v1845 = vadd.f32 0.0, %v1844
        %v1846 = vpop.f32.mrf.mxu0
        %v1847 = vadd.f32 0.0, %v1846
        %1848 = vmatprep.mubr.bf16.mxu0 0
        %1849 = vmatmul.mubr.bf16.gmra.mxu0 %v1000
        %v1850 = vpop.f32.mrf.mxu0
        %v1851 = vadd.f32 0.0, %v1850
        %v1852 = vpop.f32.mrf.mxu0
        %v1853 = vadd.f32 0.0, %v1852
        %v1854 = vpop.f32.mrf.mxu0
        %v1855 = vadd.f32 0.0, %v1854
        %v1856 = vpop.f32.mrf.mxu0
        %v1857 = vadd.f32 0.0, %v1856
        %1858 = vmatprep.mubr.bf16.mxu0 0
        %1859 = vmatmul.mubr.bf16.gmra.mxu0 %v1001
        %v1860 = vpop.f32.mrf.mxu0
        %v1861 = vadd.f32 0.0, %v1860
        %v1862 = vpop.f32.mrf.mxu0
        %v1863 = vadd.f32 0.0, %v1862
        %v1864 = vpop.f32.mrf.mxu0
        %v1865 = vadd.f32 0.0, %v1864
        %v1866 = vpop.f32.mrf.mxu0
        %v1867 = vadd.f32 0.0, %v1866
        %1868 = vdwg.mxu0
        %v1869 = vld [vmem:[%s471] sm:$0xff]
        %v1870 = vld [vmem:[%s471 + $0x8] sm:$0xff]
        %v1871 = vld [vmem:[%s471 + $0x10] sm:$0xff]
        %v1872 = vld [vmem:[%s471 + $0x18] sm:$0xff]
        %v1873 = vld [vmem:[%s471 + $0x20] sm:$0xff]
        %v1874 = vld [vmem:[%s471 + $0x28] sm:$0xff]
        %v1875 = vld [vmem:[%s471 + $0x30] sm:$0xff]
        %v1876 = vld [vmem:[%s471 + $0x38] sm:$0xff]
        %v1877 = vld [vmem:[%s471 + $0x40] sm:$0xff]
        %v1878 = vld [vmem:[%s471 + $0x48] sm:$0xff]
        %v1879 = vld [vmem:[%s471 + $0x50] sm:$0xff]
        %v1880 = vld [vmem:[%s471 + $0x58] sm:$0xff]
        %v1881 = vld [vmem:[%s471 + $0x60] sm:$0xff]
        %v1882 = vld [vmem:[%s471 + $0x68] sm:$0xff]
        %v1883 = vld [vmem:[%s471 + $0x70] sm:$0xff]
        %v1884 = vld [vmem:[%s471 + $0x78] sm:$0xff]
        %v1885 = vld [vmem:[%s471 + $0x80] sm:$0xff]
        %v1886 = vld [vmem:[%s471 + $0x88] sm:$0xff]
        %v1887 = vld [vmem:[%s471 + $0x90] sm:$0xff]
        %v1888 = vld [vmem:[%s471 + $0x98] sm:$0xff]
        %v1889 = vld [vmem:[%s471 + $0xa0] sm:$0xff]
        %v1890 = vld [vmem:[%s471 + $0xa8] sm:$0xff]
        %v1891 = vld [vmem:[%s471 + $0xb0] sm:$0xff]
        %v1892 = vld [vmem:[%s471 + $0xb8] sm:$0xff]
        %v1893 = vld [vmem:[%s471 + $0xc0] sm:$0xff]
        %v1894 = vld [vmem:[%s471 + $0xc8] sm:$0xff]
        %v1895 = vld [vmem:[%s471 + $0xd0] sm:$0xff]
        %v1896 = vld [vmem:[%s471 + $0xd8] sm:$0xff]
        %v1897 = vld [vmem:[%s471 + $0xe0] sm:$0xff]
        %v1898 = vld [vmem:[%s471 + $0xe8] sm:$0xff]
        %v1899 = vld [vmem:[%s471 + $0xf0] sm:$0xff]
        %v1900 = vld [vmem:[%s471 + $0xf8] sm:$0xff]
        %v1901 = vld [vmem:[%s480] sm:$0xff]
        %v1902 = vld [vmem:[%s480 + $0x8] sm:$0xff]
        %v1903 = vld [vmem:[%s480 + $0x10] sm:$0xff]
        %v1904 = vld [vmem:[%s480 + $0x18] sm:$0xff]
        %v1905 = vld [vmem:[%s480 + $0x20] sm:$0xff]
        %v1906 = vld [vmem:[%s480 + $0x28] sm:$0xff]
        %v1907 = vld [vmem:[%s480 + $0x30] sm:$0xff]
        %v1908 = vld [vmem:[%s480 + $0x38] sm:$0xff]
        %v1909 = vld [vmem:[%s480 + $0x40] sm:$0xff]
        %v1910 = vld [vmem:[%s480 + $0x48] sm:$0xff]
        %v1911 = vld [vmem:[%s480 + $0x50] sm:$0xff]
        %v1912 = vld [vmem:[%s480 + $0x58] sm:$0xff]
        %v1913 = vld [vmem:[%s480 + $0x60] sm:$0xff]
        %v1914 = vld [vmem:[%s480 + $0x68] sm:$0xff]
        %v1915 = vld [vmem:[%s480 + $0x70] sm:$0xff]
        %v1916 = vld [vmem:[%s480 + $0x78] sm:$0xff]
        %v1917 = vld [vmem:[%s480 + $0x80] sm:$0xff]
        %v1918 = vld [vmem:[%s480 + $0x88] sm:$0xff]
        %v1919 = vld [vmem:[%s480 + $0x90] sm:$0xff]
        %v1920 = vld [vmem:[%s480 + $0x98] sm:$0xff]
        %v1921 = vld [vmem:[%s480 + $0xa0] sm:$0xff]
        %v1922 = vld [vmem:[%s480 + $0xa8] sm:$0xff]
        %v1923 = vld [vmem:[%s480 + $0xb0] sm:$0xff]
        %v1924 = vld [vmem:[%s480 + $0xb8] sm:$0xff]
        %v1925 = vld [vmem:[%s480 + $0xc0] sm:$0xff]
        %v1926 = vld [vmem:[%s480 + $0xc8] sm:$0xff]
        %v1927 = vld [vmem:[%s480 + $0xd0] sm:$0xff]
        %v1928 = vld [vmem:[%s480 + $0xd8] sm:$0xff]
        %v1929 = vld [vmem:[%s480 + $0xe0] sm:$0xff]
        %v1930 = vld [vmem:[%s480 + $0xe8] sm:$0xff]
        %v1931 = vld [vmem:[%s480 + $0xf0] sm:$0xff]
        %v1932 = vld [vmem:[%s480 + $0xf8] sm:$0xff]
        %v1933 = vmul.f32 %v1325, %v1325
        %v1934 = vmul.f32 %v1329, %v1329
        %v1935 = vmul.f32 %v1335, %v1335
        %v1936 = vmul.f32 %v1339, %v1339
        %v1937 = vmul.f32 %v1345, %v1345
        %v1938 = vmul.f32 %v1349, %v1349
        %v1939 = vmul.f32 %v1355, %v1355
        %v1940 = vmul.f32 %v1359, %v1359
        %v1941 = vmul.f32 %v1365, %v1365
        %v1942 = vmul.f32 %v1369, %v1369
        %v1943 = vmul.f32 %v1375, %v1375
        %v1944 = vmul.f32 %v1379, %v1379
        %v1945 = vmul.f32 %v1385, %v1385
        %v1946 = vmul.f32 %v1389, %v1389
        %v1947 = vmul.f32 %v1395, %v1395
        %v1948 = vmul.f32 %v1399, %v1399
        %v1949 = vmul.f32 %v1405, %v1405
        %v1950 = vmul.f32 %v1409, %v1409
        %v1951 = vmul.f32 %v1415, %v1415
        %v1952 = vmul.f32 %v1419, %v1419
        %v1953 = vmul.f32 %v1425, %v1425
        %v1954 = vmul.f32 %v1429, %v1429
        %v1955 = vmul.f32 %v1435, %v1435
        %v1956 = vmul.f32 %v1439, %v1439
        %v1957 = vmul.f32 %v1445, %v1445
        %v1958 = vmul.f32 %v1449, %v1449
        %v1959 = vmul.f32 %v1455, %v1455
        %v1960 = vmul.f32 %v1459, %v1459
        %v1961 = vmul.f32 %v1465, %v1465
        %v1962 = vmul.f32 %v1469, %v1469
        %v1963 = vmul.f32 %v1475, %v1475
        %v1964 = vmul.f32 %v1479, %v1479
        %1965 = vadd.xlane.f32.xlu0 %v1933
        %v1966 = vpop.xlane.xlu0 %1965
        %1967 = vadd.xlane.f32.xlu0 %v1934
        %v1968 = vpop.xlane.xlu0 %1967
        %1969 = vadd.xlane.f32.xlu0 %v1935
        %v1970 = vpop.xlane.xlu0 %1969
        %1971 = vadd.xlane.f32.xlu0 %v1936
        %v1972 = vpop.xlane.xlu0 %1971
        %1973 = vadd.xlane.f32.xlu0 %v1937
        %v1974 = vpop.xlane.xlu0 %1973
        %1975 = vadd.xlane.f32.xlu0 %v1938
        %v1976 = vpop.xlane.xlu0 %1975
        %1977 = vadd.xlane.f32.xlu0 %v1939
        %v1978 = vpop.xlane.xlu0 %1977
        %1979 = vadd.xlane.f32.xlu0 %v1940
        %v1980 = vpop.xlane.xlu0 %1979
        %1981 = vadd.xlane.f32.xlu0 %v1941
        %v1982 = vpop.xlane.xlu0 %1981
        %1983 = vadd.xlane.f32.xlu0 %v1942
        %v1984 = vpop.xlane.xlu0 %1983
        %1985 = vadd.xlane.f32.xlu0 %v1943
        %v1986 = vpop.xlane.xlu0 %1985
        %1987 = vadd.xlane.f32.xlu0 %v1944
        %v1988 = vpop.xlane.xlu0 %1987
        %1989 = vadd.xlane.f32.xlu0 %v1945
        %v1990 = vpop.xlane.xlu0 %1989
        %1991 = vadd.xlane.f32.xlu0 %v1946
        %v1992 = vpop.xlane.xlu0 %1991
        %1993 = vadd.xlane.f32.xlu0 %v1947
        %v1994 = vpop.xlane.xlu0 %1993
        %1995 = vadd.xlane.f32.xlu0 %v1948
        %v1996 = vpop.xlane.xlu0 %1995
        %1997 = vadd.xlane.f32.xlu0 %v1949
        %v1998 = vpop.xlane.xlu0 %1997
        %1999 = vadd.xlane.f32.xlu0 %v1950
        %v2000 = vpop.xlane.xlu0 %1999
        %2001 = vadd.xlane.f32.xlu0 %v1951
        %v2002 = vpop.xlane.xlu0 %2001
        %2003 = vadd.xlane.f32.xlu0 %v1952
        %v2004 = vpop.xlane.xlu0 %2003
        %2005 = vadd.xlane.f32.xlu0 %v1953
        %v2006 = vpop.xlane.xlu0 %2005
        %2007 = vadd.xlane.f32.xlu0 %v1954
        %v2008 = vpop.xlane.xlu0 %2007
        %2009 = vadd.xlane.f32.xlu0 %v1955
        %v2010 = vpop.xlane.xlu0 %2009
        %2011 = vadd.xlane.f32.xlu0 %v1956
        %v2012 = vpop.xlane.xlu0 %2011
        %2013 = vadd.xlane.f32.xlu0 %v1957
        %v2014 = vpop.xlane.xlu0 %2013
        %2015 = vadd.xlane.f32.xlu0 %v1958
        %v2016 = vpop.xlane.xlu0 %2015
        %2017 = vadd.xlane.f32.xlu0 %v1959
        %v2018 = vpop.xlane.xlu0 %2017
        %2019 = vadd.xlane.f32.xlu0 %v1960
        %v2020 = vpop.xlane.xlu0 %2019
        %2021 = vadd.xlane.f32.xlu0 %v1961
        %v2022 = vpop.xlane.xlu0 %2021
        %2023 = vadd.xlane.f32.xlu0 %v1962
        %v2024 = vpop.xlane.xlu0 %2023
        %2025 = vadd.xlane.f32.xlu0 %v1963
        %v2026 = vpop.xlane.xlu0 %2025
        %2027 = vadd.xlane.f32.xlu0 %v1964
        %v2028 = vpop.xlane.xlu0 %2027
        %v2029 = vmul.f32 %v1966, %v857
        %v2030 = vmul.f32 %v1968, %v857
        %v2031 = vmul.f32 %v1970, %v857
        %v2032 = vmul.f32 %v1972, %v857
        %v2033 = vmul.f32 %v1974, %v857
        %v2034 = vmul.f32 %v1976, %v857
        %v2035 = vmul.f32 %v1978, %v857
        %v2036 = vmul.f32 %v1980, %v857
        %v2037 = vmul.f32 %v1982, %v857
        %v2038 = vmul.f32 %v1984, %v857
        %v2039 = vmul.f32 %v1986, %v857
        %v2040 = vmul.f32 %v1988, %v857
        %v2041 = vmul.f32 %v1990, %v857
        %v2042 = vmul.f32 %v1992, %v857
        %v2043 = vmul.f32 %v1994, %v857
        %v2044 = vmul.f32 %v1996, %v857
        %v2045 = vmul.f32 %v1998, %v857
        %v2046 = vmul.f32 %v2000, %v857
        %v2047 = vmul.f32 %v2002, %v857
        %v2048 = vmul.f32 %v2004, %v857
        %v2049 = vmul.f32 %v2006, %v857
        %v2050 = vmul.f32 %v2008, %v857
        %v2051 = vmul.f32 %v2010, %v857
        %v2052 = vmul.f32 %v2012, %v857
        %v2053 = vmul.f32 %v2014, %v857
        %v2054 = vmul.f32 %v2016, %v857
        %v2055 = vmul.f32 %v2018, %v857
        %v2056 = vmul.f32 %v2020, %v857
        %v2057 = vmul.f32 %v2022, %v857
        %v2058 = vmul.f32 %v2024, %v857
        %v2059 = vmul.f32 %v2026, %v857
        %v2060 = vmul.f32 %v2028, %v857
        %v2061 = vadd.f32 %v2029, 1.1920929e-07
        %v2062 = vadd.f32 %v2030, 1.1920929e-07
        %v2063 = vadd.f32 %v2031, 1.1920929e-07
        %v2064 = vadd.f32 %v2032, 1.1920929e-07
        %v2065 = vadd.f32 %v2033, 1.1920929e-07
        %v2066 = vadd.f32 %v2034, 1.1920929e-07
        %v2067 = vadd.f32 %v2035, 1.1920929e-07
        %v2068 = vadd.f32 %v2036, 1.1920929e-07
        %v2069 = vadd.f32 %v2037, 1.1920929e-07
        %v2070 = vadd.f32 %v2038, 1.1920929e-07
        %v2071 = vadd.f32 %v2039, 1.1920929e-07
        %v2072 = vadd.f32 %v2040, 1.1920929e-07
        %v2073 = vadd.f32 %v2041, 1.1920929e-07
        %v2074 = vadd.f32 %v2042, 1.1920929e-07
        %v2075 = vadd.f32 %v2043, 1.1920929e-07
        %v2076 = vadd.f32 %v2044, 1.1920929e-07
        %v2077 = vadd.f32 %v2045, 1.1920929e-07
        %v2078 = vadd.f32 %v2046, 1.1920929e-07
        %v2079 = vadd.f32 %v2047, 1.1920929e-07
        %v2080 = vadd.f32 %v2048, 1.1920929e-07
        %v2081 = vadd.f32 %v2049, 1.1920929e-07
        %v2082 = vadd.f32 %v2050, 1.1920929e-07
        %v2083 = vadd.f32 %v2051, 1.1920929e-07
        %v2084 = vadd.f32 %v2052, 1.1920929e-07
        %v2085 = vadd.f32 %v2053, 1.1920929e-07
        %v2086 = vadd.f32 %v2054, 1.1920929e-07
        %v2087 = vadd.f32 %v2055, 1.1920929e-07
        %v2088 = vadd.f32 %v2056, 1.1920929e-07
        %v2089 = vadd.f32 %v2057, 1.1920929e-07
        %v2090 = vadd.f32 %v2058, 1.1920929e-07
        %v2091 = vadd.f32 %v2059, 1.1920929e-07
        %v2092 = vadd.f32 %v2060, 1.1920929e-07
        %v2093 = vrsqrt.pop %v2061
        %v2094 = vrsqrt.pop %v2062
        %v2095 = vrsqrt.pop %v2063
        %v2096 = vrsqrt.pop %v2064
        %v2097 = vrsqrt.pop %v2065
        %v2098 = vrsqrt.pop %v2066
        %v2099 = vrsqrt.pop %v2067
        %v2100 = vrsqrt.pop %v2068
        %v2101 = vrsqrt.pop %v2069
        %v2102 = vrsqrt.pop %v2070
        %v2103 = vrsqrt.pop %v2071
        %v2104 = vrsqrt.pop %v2072
        %v2105 = vrsqrt.pop %v2073
        %v2106 = vrsqrt.pop %v2074
        %v2107 = vrsqrt.pop %v2075
        %v2108 = vrsqrt.pop %v2076
        %v2109 = vrsqrt.pop %v2077
        %v2110 = vrsqrt.pop %v2078
        %v2111 = vrsqrt.pop %v2079
        %v2112 = vrsqrt.pop %v2080
        %v2113 = vrsqrt.pop %v2081
        %v2114 = vrsqrt.pop %v2082
        %v2115 = vrsqrt.pop %v2083
        %v2116 = vrsqrt.pop %v2084
        %v2117 = vrsqrt.pop %v2085
        %v2118 = vrsqrt.pop %v2086
        %v2119 = vrsqrt.pop %v2087
        %v2120 = vrsqrt.pop %v2088
        %v2121 = vrsqrt.pop %v2089
        %v2122 = vrsqrt.pop %v2090
        %v2123 = vrsqrt.pop %v2091
        %v2124 = vrsqrt.pop %v2092
        %v2125 = vmul.f32 %v1325, %v2093
        %v2126 = vmul.f32 %v1329, %v2094
        %v2127 = vmul.f32 %v1335, %v2095
        %v2128 = vmul.f32 %v1339, %v2096
        %v2129 = vmul.f32 %v1345, %v2097
        %v2130 = vmul.f32 %v1349, %v2098
        %v2131 = vmul.f32 %v1355, %v2099
        %v2132 = vmul.f32 %v1359, %v2100
        %v2133 = vmul.f32 %v1365, %v2101
        %v2134 = vmul.f32 %v1369, %v2102
        %v2135 = vmul.f32 %v1375, %v2103
        %v2136 = vmul.f32 %v1379, %v2104
        %v2137 = vmul.f32 %v1385, %v2105
        %v2138 = vmul.f32 %v1389, %v2106
        %v2139 = vmul.f32 %v1395, %v2107
        %v2140 = vmul.f32 %v1399, %v2108
        %v2141 = vmul.f32 %v1405, %v2109
        %v2142 = vmul.f32 %v1409, %v2110
        %v2143 = vmul.f32 %v1415, %v2111
        %v2144 = vmul.f32 %v1419, %v2112
        %v2145 = vmul.f32 %v1425, %v2113
        %v2146 = vmul.f32 %v1429, %v2114
        %v2147 = vmul.f32 %v1435, %v2115
        %v2148 = vmul.f32 %v1439, %v2116
        %v2149 = vmul.f32 %v1445, %v2117
        %v2150 = vmul.f32 %v1449, %v2118
        %v2151 = vmul.f32 %v1455, %v2119
        %v2152 = vmul.f32 %v1459, %v2120
        %v2153 = vmul.f32 %v1465, %v2121
        %v2154 = vmul.f32 %v1469, %v2122
        %v2155 = vmul.f32 %v1475, %v2123
        %v2156 = vmul.f32 %v1479, %v2124
        %v2157 = vmul.f32 %v2125, %v1869
        %v2158 = vmul.f32 %v2126, %v1870
        %v2159 = vmul.f32 %v2127, %v1871
        %v2160 = vmul.f32 %v2128, %v1872
        %v2161 = vmul.f32 %v2129, %v1873
        %v2162 = vmul.f32 %v2130, %v1874
        %v2163 = vmul.f32 %v2131, %v1875
        %v2164 = vmul.f32 %v2132, %v1876
        %v2165 = vmul.f32 %v2133, %v1877
        %v2166 = vmul.f32 %v2134, %v1878
        %v2167 = vmul.f32 %v2135, %v1879
        %v2168 = vmul.f32 %v2136, %v1880
        %v2169 = vmul.f32 %v2137, %v1881
        %v2170 = vmul.f32 %v2138, %v1882
        %v2171 = vmul.f32 %v2139, %v1883
        %v2172 = vmul.f32 %v2140, %v1884
        %v2173 = vmul.f32 %v2141, %v1885
        %v2174 = vmul.f32 %v2142, %v1886
        %v2175 = vmul.f32 %v2143, %v1887
        %v2176 = vmul.f32 %v2144, %v1888
        %v2177 = vmul.f32 %v2145, %v1889
        %v2178 = vmul.f32 %v2146, %v1890
        %v2179 = vmul.f32 %v2147, %v1891
        %v2180 = vmul.f32 %v2148, %v1892
        %v2181 = vmul.f32 %v2149, %v1893
        %v2182 = vmul.f32 %v2150, %v1894
        %v2183 = vmul.f32 %v2151, %v1895
        %v2184 = vmul.f32 %v2152, %v1896
        %v2185 = vmul.f32 %v2153, %v1897
        %v2186 = vmul.f32 %v2154, %v1898
        %v2187 = vmul.f32 %v2155, %v1899
        %v2188 = vmul.f32 %v2156, %v1900
        %2221 = vrot.lane.b32.xlu0 %v2125, 64
        %v2222 = vpop.permute.xlu0 %2221
        %2223 = vrot.lane.b32.xlu0 %v2126, 64
        %v2224 = vpop.permute.xlu0 %2223
        %2225 = vrot.lane.b32.xlu0 %v2127, 64
        %v2226 = vpop.permute.xlu0 %2225
        %2227 = vrot.lane.b32.xlu0 %v2128, 64
        %v2228 = vpop.permute.xlu0 %2227
        %2229 = vrot.lane.b32.xlu0 %v2129, 64
        %v2230 = vpop.permute.xlu0 %2229
        %2231 = vrot.lane.b32.xlu0 %v2130, 64
        %v2232 = vpop.permute.xlu0 %2231
        %2233 = vrot.lane.b32.xlu0 %v2131, 64
        %v2234 = vpop.permute.xlu0 %2233
        %2235 = vrot.lane.b32.xlu0 %v2132, 64
        %v2236 = vpop.permute.xlu0 %2235
        %2237 = vrot.lane.b32.xlu0 %v2133, 64
        %v2238 = vpop.permute.xlu0 %2237
        %2239 = vrot.lane.b32.xlu0 %v2134, 64
        %v2240 = vpop.permute.xlu0 %2239
        %2241 = vrot.lane.b32.xlu0 %v2135, 64
        %v2242 = vpop.permute.xlu0 %2241
        %2243 = vrot.lane.b32.xlu0 %v2136, 64
        %v2244 = vpop.permute.xlu0 %2243
        %2245 = vrot.lane.b32.xlu0 %v2137, 64
        %v2246 = vpop.permute.xlu0 %2245
        %2247 = vrot.lane.b32.xlu0 %v2138, 64
        %v2248 = vpop.permute.xlu0 %2247
        %2249 = vrot.lane.b32.xlu0 %v2139, 64
        %v2250 = vpop.permute.xlu0 %2249
        %2251 = vrot.lane.b32.xlu0 %v2140, 64
        %v2252 = vpop.permute.xlu0 %2251
        %2253 = vrot.lane.b32.xlu0 %v2141, 64
        %v2254 = vpop.permute.xlu0 %2253
        %2255 = vrot.lane.b32.xlu0 %v2142, 64
        %v2256 = vpop.permute.xlu0 %2255
        %2257 = vrot.lane.b32.xlu0 %v2143, 64
        %v2258 = vpop.permute.xlu0 %2257
        %2259 = vrot.lane.b32.xlu0 %v2144, 64
        %v2260 = vpop.permute.xlu0 %2259
        %2261 = vrot.lane.b32.xlu0 %v2145, 64
        %v2262 = vpop.permute.xlu0 %2261
        %2263 = vrot.lane.b32.xlu0 %v2146, 64
        %v2264 = vpop.permute.xlu0 %2263
        %2265 = vrot.lane.b32.xlu0 %v2147, 64
        %v2266 = vpop.permute.xlu0 %2265
        %2267 = vrot.lane.b32.xlu0 %v2148, 64
        %v2268 = vpop.permute.xlu0 %2267
        %2269 = vrot.lane.b32.xlu0 %v2149, 64
        %v2270 = vpop.permute.xlu0 %2269
        %2271 = vrot.lane.b32.xlu0 %v2150, 64
        %v2272 = vpop.permute.xlu0 %2271
        %2273 = vrot.lane.b32.xlu0 %v2151, 64
        %v2274 = vpop.permute.xlu0 %2273
        %2275 = vrot.lane.b32.xlu0 %v2152, 64
        %v2276 = vpop.permute.xlu0 %2275
        %2277 = vrot.lane.b32.xlu0 %v2153, 64
        %v2278 = vpop.permute.xlu0 %2277
        %2279 = vrot.lane.b32.xlu0 %v2154, 64
        %v2280 = vpop.permute.xlu0 %2279
        %2281 = vrot.lane.b32.xlu0 %v2155, 64
        %v2282 = vpop.permute.xlu0 %2281
        %2283 = vrot.lane.b32.xlu0 %v2156, 64
        %v2284 = vpop.permute.xlu0 %2283
        %v2317 = vmul.f32 %v2222, %v1901
        %v2318 = vmul.f32 %v2224, %v1902
        %v2319 = vmul.f32 %v2226, %v1903
        %v2320 = vmul.f32 %v2228, %v1904
        %v2321 = vmul.f32 %v2230, %v1905
        %v2322 = vmul.f32 %v2232, %v1906
        %v2323 = vmul.f32 %v2234, %v1907
        %v2324 = vmul.f32 %v2236, %v1908
        %v2325 = vmul.f32 %v2238, %v1909
        %v2326 = vmul.f32 %v2240, %v1910
        %v2327 = vmul.f32 %v2242, %v1911
        %v2328 = vmul.f32 %v2244, %v1912
        %v2329 = vmul.f32 %v2246, %v1913
        %v2330 = vmul.f32 %v2248, %v1914
        %v2331 = vmul.f32 %v2250, %v1915
        %v2332 = vmul.f32 %v2252, %v1916
        %v2333 = vmul.f32 %v2254, %v1917
        %v2334 = vmul.f32 %v2256, %v1918
        %v2335 = vmul.f32 %v2258, %v1919
        %v2336 = vmul.f32 %v2260, %v1920
        %v2337 = vmul.f32 %v2262, %v1921
        %v2338 = vmul.f32 %v2264, %v1922
        %v2339 = vmul.f32 %v2266, %v1923
        %v2340 = vmul.f32 %v2268, %v1924
        %v2341 = vmul.f32 %v2270, %v1925
        %v2342 = vmul.f32 %v2272, %v1926
        %v2343 = vmul.f32 %v2274, %v1927
        %v2344 = vmul.f32 %v2276, %v1928
        %v2345 = vmul.f32 %v2278, %v1929
        %v2346 = vmul.f32 %v2280, %v1930
        %v2347 = vmul.f32 %v2282, %v1931
        %v2348 = vmul.f32 %v2284, %v1932
        %v2349 = vadd.f32 %v2157, %v2317
        %v2350 = vadd.f32 %v2158, %v2318
        %v2351 = vadd.f32 %v2159, %v2319
        %v2352 = vadd.f32 %v2160, %v2320
        %v2353 = vadd.f32 %v2161, %v2321
        %v2354 = vadd.f32 %v2162, %v2322
        %v2355 = vadd.f32 %v2163, %v2323
        %v2356 = vadd.f32 %v2164, %v2324
        %v2357 = vadd.f32 %v2165, %v2325
        %v2358 = vadd.f32 %v2166, %v2326
        %v2359 = vadd.f32 %v2167, %v2327
        %v2360 = vadd.f32 %v2168, %v2328
        %v2361 = vadd.f32 %v2169, %v2329
        %v2362 = vadd.f32 %v2170, %v2330
        %v2363 = vadd.f32 %v2171, %v2331
        %v2364 = vadd.f32 %v2172, %v2332
        %v2365 = vadd.f32 %v2173, %v2333
        %v2366 = vadd.f32 %v2174, %v2334
        %v2367 = vadd.f32 %v2175, %v2335
        %v2368 = vadd.f32 %v2176, %v2336
        %v2369 = vadd.f32 %v2177, %v2337
        %v2370 = vadd.f32 %v2178, %v2338
        %v2371 = vadd.f32 %v2179, %v2339
        %v2372 = vadd.f32 %v2180, %v2340
        %v2373 = vadd.f32 %v2181, %v2341
        %v2374 = vadd.f32 %v2182, %v2342
        %v2375 = vadd.f32 %v2183, %v2343
        %v2376 = vadd.f32 %v2184, %v2344
        %v2377 = vadd.f32 %v2185, %v2345
        %v2378 = vadd.f32 %v2186, %v2346
        %v2379 = vadd.f32 %v2187, %v2347
        %v2380 = vadd.f32 %v2188, %v2348
        %v2381 = vmul.f32 %v1518, %v1518
        %v2382 = vmul.f32 %v1522, %v1522
        %v2383 = vmul.f32 %v1528, %v1528
        %v2384 = vmul.f32 %v1532, %v1532
        %v2385 = vmul.f32 %v1538, %v1538
        %v2386 = vmul.f32 %v1542, %v1542
        %v2387 = vmul.f32 %v1548, %v1548
        %v2388 = vmul.f32 %v1552, %v1552
        %v2389 = vmul.f32 %v1558, %v1558
        %v2390 = vmul.f32 %v1562, %v1562
        %v2391 = vmul.f32 %v1568, %v1568
        %v2392 = vmul.f32 %v1572, %v1572
        %v2393 = vmul.f32 %v1578, %v1578
        %v2394 = vmul.f32 %v1582, %v1582
        %v2395 = vmul.f32 %v1588, %v1588
        %v2396 = vmul.f32 %v1592, %v1592
        %v2397 = vmul.f32 %v1598, %v1598
        %v2398 = vmul.f32 %v1602, %v1602
        %v2399 = vmul.f32 %v1608, %v1608
        %v2400 = vmul.f32 %v1612, %v1612
        %v2401 = vmul.f32 %v1618, %v1618
        %v2402 = vmul.f32 %v1622, %v1622
        %v2403 = vmul.f32 %v1628, %v1628
        %v2404 = vmul.f32 %v1632, %v1632
        %v2405 = vmul.f32 %v1638, %v1638
        %v2406 = vmul.f32 %v1642, %v1642
        %v2407 = vmul.f32 %v1648, %v1648
        %v2408 = vmul.f32 %v1652, %v1652
        %v2409 = vmul.f32 %v1658, %v1658
        %v2410 = vmul.f32 %v1662, %v1662
        %v2411 = vmul.f32 %v1668, %v1668
        %v2412 = vmul.f32 %v1672, %v1672
        %2413 = vadd.xlane.f32.xlu0 %v2381
        %v2414 = vpop.xlane.xlu0 %2413
        %2415 = vadd.xlane.f32.xlu0 %v2382
        %v2416 = vpop.xlane.xlu0 %2415
        %2417 = vadd.xlane.f32.xlu0 %v2383
        %v2418 = vpop.xlane.xlu0 %2417
        %2419 = vadd.xlane.f32.xlu0 %v2384
        %v2420 = vpop.xlane.xlu0 %2419
        %2421 = vadd.xlane.f32.xlu0 %v2385
        %v2422 = vpop.xlane.xlu0 %2421
        %2423 = vadd.xlane.f32.xlu0 %v2386
        %v2424 = vpop.xlane.xlu0 %2423
        %2425 = vadd.xlane.f32.xlu0 %v2387
        %v2426 = vpop.xlane.xlu0 %2425
        %2427 = vadd.xlane.f32.xlu0 %v2388
        %v2428 = vpop.xlane.xlu0 %2427
        %2429 = vadd.xlane.f32.xlu0 %v2389
        %v2430 = vpop.xlane.xlu0 %2429
        %2431 = vadd.xlane.f32.xlu0 %v2390
        %v2432 = vpop.xlane.xlu0 %2431
        %2433 = vadd.xlane.f32.xlu0 %v2391
        %v2434 = vpop.xlane.xlu0 %2433
        %2435 = vadd.xlane.f32.xlu0 %v2392
        %v2436 = vpop.xlane.xlu0 %2435
        %2437 = vadd.xlane.f32.xlu0 %v2393
        %v2438 = vpop.xlane.xlu0 %2437
        %2439 = vadd.xlane.f32.xlu0 %v2394
        %v2440 = vpop.xlane.xlu0 %2439
        %2441 = vadd.xlane.f32.xlu0 %v2395
        %v2442 = vpop.xlane.xlu0 %2441
        %2443 = vadd.xlane.f32.xlu0 %v2396
        %v2444 = vpop.xlane.xlu0 %2443
        %2445 = vadd.xlane.f32.xlu0 %v2397
        %v2446 = vpop.xlane.xlu0 %2445
        %2447 = vadd.xlane.f32.xlu0 %v2398
        %v2448 = vpop.xlane.xlu0 %2447
        %2449 = vadd.xlane.f32.xlu0 %v2399
        %v2450 = vpop.xlane.xlu0 %2449
        %2451 = vadd.xlane.f32.xlu0 %v2400
        %v2452 = vpop.xlane.xlu0 %2451
        %2453 = vadd.xlane.f32.xlu0 %v2401
        %v2454 = vpop.xlane.xlu0 %2453
        %2455 = vadd.xlane.f32.xlu0 %v2402
        %v2456 = vpop.xlane.xlu0 %2455
        %2457 = vadd.xlane.f32.xlu0 %v2403
        %v2458 = vpop.xlane.xlu0 %2457
        %2459 = vadd.xlane.f32.xlu0 %v2404
        %v2460 = vpop.xlane.xlu0 %2459
        %2461 = vadd.xlane.f32.xlu0 %v2405
        %v2462 = vpop.xlane.xlu0 %2461
        %2463 = vadd.xlane.f32.xlu0 %v2406
        %v2464 = vpop.xlane.xlu0 %2463
        %2465 = vadd.xlane.f32.xlu0 %v2407
        %v2466 = vpop.xlane.xlu0 %2465
        %2467 = vadd.xlane.f32.xlu0 %v2408
        %v2468 = vpop.xlane.xlu0 %2467
        %2469 = vadd.xlane.f32.xlu0 %v2409
        %v2470 = vpop.xlane.xlu0 %2469
        %2471 = vadd.xlane.f32.xlu0 %v2410
        %v2472 = vpop.xlane.xlu0 %2471
        %2473 = vadd.xlane.f32.xlu0 %v2411
        %v2474 = vpop.xlane.xlu0 %2473
        %2475 = vadd.xlane.f32.xlu0 %v2412
        %v2476 = vpop.xlane.xlu0 %2475
        %v2477 = vmul.f32 %v2414, %v857
        %v2478 = vmul.f32 %v2416, %v857
        %v2479 = vmul.f32 %v2418, %v857
        %v2480 = vmul.f32 %v2420, %v857
        %v2481 = vmul.f32 %v2422, %v857
        %v2482 = vmul.f32 %v2424, %v857
        %v2483 = vmul.f32 %v2426, %v857
        %v2484 = vmul.f32 %v2428, %v857
        %v2485 = vmul.f32 %v2430, %v857
        %v2486 = vmul.f32 %v2432, %v857
        %v2487 = vmul.f32 %v2434, %v857
        %v2488 = vmul.f32 %v2436, %v857
        %v2489 = vmul.f32 %v2438, %v857
        %v2490 = vmul.f32 %v2440, %v857
        %v2491 = vmul.f32 %v2442, %v857
        %v2492 = vmul.f32 %v2444, %v857
        %v2493 = vmul.f32 %v2446, %v857
        %v2494 = vmul.f32 %v2448, %v857
        %v2495 = vmul.f32 %v2450, %v857
        %v2496 = vmul.f32 %v2452, %v857
        %v2497 = vmul.f32 %v2454, %v857
        %v2498 = vmul.f32 %v2456, %v857
        %v2499 = vmul.f32 %v2458, %v857
        %v2500 = vmul.f32 %v2460, %v857
        %v2501 = vmul.f32 %v2462, %v857
        %v2502 = vmul.f32 %v2464, %v857
        %v2503 = vmul.f32 %v2466, %v857
        %v2504 = vmul.f32 %v2468, %v857
        %v2505 = vmul.f32 %v2470, %v857
        %v2506 = vmul.f32 %v2472, %v857
        %v2507 = vmul.f32 %v2474, %v857
        %v2508 = vmul.f32 %v2476, %v857
        %v2509 = vadd.f32 %v2477, 1.1920929e-07
        %v2510 = vadd.f32 %v2478, 1.1920929e-07
        %v2511 = vadd.f32 %v2479, 1.1920929e-07
        %v2512 = vadd.f32 %v2480, 1.1920929e-07
        %v2513 = vadd.f32 %v2481, 1.1920929e-07
        %v2514 = vadd.f32 %v2482, 1.1920929e-07
        %v2515 = vadd.f32 %v2483, 1.1920929e-07
        %v2516 = vadd.f32 %v2484, 1.1920929e-07
        %v2517 = vadd.f32 %v2485, 1.1920929e-07
        %v2518 = vadd.f32 %v2486, 1.1920929e-07
        %v2519 = vadd.f32 %v2487, 1.1920929e-07
        %v2520 = vadd.f32 %v2488, 1.1920929e-07
        %v2521 = vadd.f32 %v2489, 1.1920929e-07
        %v2522 = vadd.f32 %v2490, 1.1920929e-07
        %v2523 = vadd.f32 %v2491, 1.1920929e-07
        %v2524 = vadd.f32 %v2492, 1.1920929e-07
        %v2525 = vadd.f32 %v2493, 1.1920929e-07
        %v2526 = vadd.f32 %v2494, 1.1920929e-07
        %v2527 = vadd.f32 %v2495, 1.1920929e-07
        %v2528 = vadd.f32 %v2496, 1.1920929e-07
        %v2529 = vadd.f32 %v2497, 1.1920929e-07
        %v2530 = vadd.f32 %v2498, 1.1920929e-07
        %v2531 = vadd.f32 %v2499, 1.1920929e-07
        %v2532 = vadd.f32 %v2500, 1.1920929e-07
        %v2533 = vadd.f32 %v2501, 1.1920929e-07
        %v2534 = vadd.f32 %v2502, 1.1920929e-07
        %v2535 = vadd.f32 %v2503, 1.1920929e-07
        %v2536 = vadd.f32 %v2504, 1.1920929e-07
        %v2537 = vadd.f32 %v2505, 1.1920929e-07
        %v2538 = vadd.f32 %v2506, 1.1920929e-07
        %v2539 = vadd.f32 %v2507, 1.1920929e-07
        %v2540 = vadd.f32 %v2508, 1.1920929e-07
        %v2541 = vrsqrt.pop %v2509
        %v2542 = vrsqrt.pop %v2510
        %v2543 = vrsqrt.pop %v2511
        %v2544 = vrsqrt.pop %v2512
        %v2545 = vrsqrt.pop %v2513
        %v2546 = vrsqrt.pop %v2514
        %v2547 = vrsqrt.pop %v2515
        %v2548 = vrsqrt.pop %v2516
        %v2549 = vrsqrt.pop %v2517
        %v2550 = vrsqrt.pop %v2518
        %v2551 = vrsqrt.pop %v2519
        %v2552 = vrsqrt.pop %v2520
        %v2553 = vrsqrt.pop %v2521
        %v2554 = vrsqrt.pop %v2522
        %v2555 = vrsqrt.pop %v2523
        %v2556 = vrsqrt.pop %v2524
        %v2557 = vrsqrt.pop %v2525
        %v2558 = vrsqrt.pop %v2526
        %v2559 = vrsqrt.pop %v2527
        %v2560 = vrsqrt.pop %v2528
        %v2561 = vrsqrt.pop %v2529
        %v2562 = vrsqrt.pop %v2530
        %v2563 = vrsqrt.pop %v2531
        %v2564 = vrsqrt.pop %v2532
        %v2565 = vrsqrt.pop %v2533
        %v2566 = vrsqrt.pop %v2534
        %v2567 = vrsqrt.pop %v2535
        %v2568 = vrsqrt.pop %v2536
        %v2569 = vrsqrt.pop %v2537
        %v2570 = vrsqrt.pop %v2538
        %v2571 = vrsqrt.pop %v2539
        %v2572 = vrsqrt.pop %v2540
        %v2573 = vmul.f32 %v1518, %v2541
        %v2574 = vmul.f32 %v1522, %v2542
        %v2575 = vmul.f32 %v1528, %v2543
        %v2576 = vmul.f32 %v1532, %v2544
        %v2577 = vmul.f32 %v1538, %v2545
        %v2578 = vmul.f32 %v1542, %v2546
        %v2579 = vmul.f32 %v1548, %v2547
        %v2580 = vmul.f32 %v1552, %v2548
        %v2581 = vmul.f32 %v1558, %v2549
        %v2582 = vmul.f32 %v1562, %v2550
        %v2583 = vmul.f32 %v1568, %v2551
        %v2584 = vmul.f32 %v1572, %v2552
        %v2585 = vmul.f32 %v1578, %v2553
        %v2586 = vmul.f32 %v1582, %v2554
        %v2587 = vmul.f32 %v1588, %v2555
        %v2588 = vmul.f32 %v1592, %v2556
        %v2589 = vmul.f32 %v1598, %v2557
        %v2590 = vmul.f32 %v1602, %v2558
        %v2591 = vmul.f32 %v1608, %v2559
        %v2592 = vmul.f32 %v1612, %v2560
        %v2593 = vmul.f32 %v1618, %v2561
        %v2594 = vmul.f32 %v1622, %v2562
        %v2595 = vmul.f32 %v1628, %v2563
        %v2596 = vmul.f32 %v1632, %v2564
        %v2597 = vmul.f32 %v1638, %v2565
        %v2598 = vmul.f32 %v1642, %v2566
        %v2599 = vmul.f32 %v1648, %v2567
        %v2600 = vmul.f32 %v1652, %v2568
        %v2601 = vmul.f32 %v1658, %v2569
        %v2602 = vmul.f32 %v1662, %v2570
        %v2603 = vmul.f32 %v1668, %v2571
        %v2604 = vmul.f32 %v1672, %v2572
        %v2605 = vmul.f32 %v2573, %v1869
        %v2606 = vmul.f32 %v2574, %v1870
        %v2607 = vmul.f32 %v2575, %v1871
        %v2608 = vmul.f32 %v2576, %v1872
        %v2609 = vmul.f32 %v2577, %v1873
        %v2610 = vmul.f32 %v2578, %v1874
        %v2611 = vmul.f32 %v2579, %v1875
        %v2612 = vmul.f32 %v2580, %v1876
        %v2613 = vmul.f32 %v2581, %v1877
        %v2614 = vmul.f32 %v2582, %v1878
        %v2615 = vmul.f32 %v2583, %v1879
        %v2616 = vmul.f32 %v2584, %v1880
        %v2617 = vmul.f32 %v2585, %v1881
        %v2618 = vmul.f32 %v2586, %v1882
        %v2619 = vmul.f32 %v2587, %v1883
        %v2620 = vmul.f32 %v2588, %v1884
        %v2621 = vmul.f32 %v2589, %v1885
        %v2622 = vmul.f32 %v2590, %v1886
        %v2623 = vmul.f32 %v2591, %v1887
        %v2624 = vmul.f32 %v2592, %v1888
        %v2625 = vmul.f32 %v2593, %v1889
        %v2626 = vmul.f32 %v2594, %v1890
        %v2627 = vmul.f32 %v2595, %v1891
        %v2628 = vmul.f32 %v2596, %v1892
        %v2629 = vmul.f32 %v2597, %v1893
        %v2630 = vmul.f32 %v2598, %v1894
        %v2631 = vmul.f32 %v2599, %v1895
        %v2632 = vmul.f32 %v2600, %v1896
        %v2633 = vmul.f32 %v2601, %v1897
        %v2634 = vmul.f32 %v2602, %v1898
        %v2635 = vmul.f32 %v2603, %v1899
        %v2636 = vmul.f32 %v2604, %v1900
        %2669 = vrot.lane.b32.xlu0 %v2573, 64
        %v2670 = vpop.permute.xlu0 %2669
        %2671 = vrot.lane.b32.xlu0 %v2574, 64
        %v2672 = vpop.permute.xlu0 %2671
        %2673 = vrot.lane.b32.xlu0 %v2575, 64
        %v2674 = vpop.permute.xlu0 %2673
        %2675 = vrot.lane.b32.xlu0 %v2576, 64
        %v2676 = vpop.permute.xlu0 %2675
        %2677 = vrot.lane.b32.xlu0 %v2577, 64
        %v2678 = vpop.permute.xlu0 %2677
        %2679 = vrot.lane.b32.xlu0 %v2578, 64
        %v2680 = vpop.permute.xlu0 %2679
        %2681 = vrot.lane.b32.xlu0 %v2579, 64
        %v2682 = vpop.permute.xlu0 %2681
        %2683 = vrot.lane.b32.xlu0 %v2580, 64
        %v2684 = vpop.permute.xlu0 %2683
        %2685 = vrot.lane.b32.xlu0 %v2581, 64
        %v2686 = vpop.permute.xlu0 %2685
        %2687 = vrot.lane.b32.xlu0 %v2582, 64
        %v2688 = vpop.permute.xlu0 %2687
        %2689 = vrot.lane.b32.xlu0 %v2583, 64
        %v2690 = vpop.permute.xlu0 %2689
        %2691 = vrot.lane.b32.xlu0 %v2584, 64
        %v2692 = vpop.permute.xlu0 %2691
        %2693 = vrot.lane.b32.xlu0 %v2585, 64
        %v2694 = vpop.permute.xlu0 %2693
        %2695 = vrot.lane.b32.xlu0 %v2586, 64
        %v2696 = vpop.permute.xlu0 %2695
        %2697 = vrot.lane.b32.xlu0 %v2587, 64
        %v2698 = vpop.permute.xlu0 %2697
        %2699 = vrot.lane.b32.xlu0 %v2588, 64
        %v2700 = vpop.permute.xlu0 %2699
        %2701 = vrot.lane.b32.xlu0 %v2589, 64
        %v2702 = vpop.permute.xlu0 %2701
        %2703 = vrot.lane.b32.xlu0 %v2590, 64
        %v2704 = vpop.permute.xlu0 %2703
        %2705 = vrot.lane.b32.xlu0 %v2591, 64
        %v2706 = vpop.permute.xlu0 %2705
        %2707 = vrot.lane.b32.xlu0 %v2592, 64
        %v2708 = vpop.permute.xlu0 %2707
        %2709 = vrot.lane.b32.xlu0 %v2593, 64
        %v2710 = vpop.permute.xlu0 %2709
        %2711 = vrot.lane.b32.xlu0 %v2594, 64
        %v2712 = vpop.permute.xlu0 %2711
        %2713 = vrot.lane.b32.xlu0 %v2595, 64
        %v2714 = vpop.permute.xlu0 %2713
        %2715 = vrot.lane.b32.xlu0 %v2596, 64
        %v2716 = vpop.permute.xlu0 %2715
        %2717 = vrot.lane.b32.xlu0 %v2597, 64
        %v2718 = vpop.permute.xlu0 %2717
        %2719 = vrot.lane.b32.xlu0 %v2598, 64
        %v2720 = vpop.permute.xlu0 %2719
        %2721 = vrot.lane.b32.xlu0 %v2599, 64
        %v2722 = vpop.permute.xlu0 %2721
        %2723 = vrot.lane.b32.xlu0 %v2600, 64
        %v2724 = vpop.permute.xlu0 %2723
        %2725 = vrot.lane.b32.xlu0 %v2601, 64
        %v2726 = vpop.permute.xlu0 %2725
        %2727 = vrot.lane.b32.xlu0 %v2602, 64
        %v2728 = vpop.permute.xlu0 %2727
        %2729 = vrot.lane.b32.xlu0 %v2603, 64
        %v2730 = vpop.permute.xlu0 %2729
        %2731 = vrot.lane.b32.xlu0 %v2604, 64
        %v2732 = vpop.permute.xlu0 %2731
        %v2765 = vmul.f32 %v2670, %v1901
        %v2766 = vmul.f32 %v2672, %v1902
        %v2767 = vmul.f32 %v2674, %v1903
        %v2768 = vmul.f32 %v2676, %v1904
        %v2769 = vmul.f32 %v2678, %v1905
        %v2770 = vmul.f32 %v2680, %v1906
        %v2771 = vmul.f32 %v2682, %v1907
        %v2772 = vmul.f32 %v2684, %v1908
        %v2773 = vmul.f32 %v2686, %v1909
        %v2774 = vmul.f32 %v2688, %v1910
        %v2775 = vmul.f32 %v2690, %v1911
        %v2776 = vmul.f32 %v2692, %v1912
        %v2777 = vmul.f32 %v2694, %v1913
        %v2778 = vmul.f32 %v2696, %v1914
        %v2779 = vmul.f32 %v2698, %v1915
        %v2780 = vmul.f32 %v2700, %v1916
        %v2781 = vmul.f32 %v2702, %v1917
        %v2782 = vmul.f32 %v2704, %v1918
        %v2783 = vmul.f32 %v2706, %v1919
        %v2784 = vmul.f32 %v2708, %v1920
        %v2785 = vmul.f32 %v2710, %v1921
        %v2786 = vmul.f32 %v2712, %v1922
        %v2787 = vmul.f32 %v2714, %v1923
        %v2788 = vmul.f32 %v2716, %v1924
        %v2789 = vmul.f32 %v2718, %v1925
        %v2790 = vmul.f32 %v2720, %v1926
        %v2791 = vmul.f32 %v2722, %v1927
        %v2792 = vmul.f32 %v2724, %v1928
        %v2793 = vmul.f32 %v2726, %v1929
        %v2794 = vmul.f32 %v2728, %v1930
        %v2795 = vmul.f32 %v2730, %v1931
        %v2796 = vmul.f32 %v2732, %v1932
        %v2797 = vadd.f32 %v2605, %v2765
        %v2798 = vadd.f32 %v2606, %v2766
        %v2799 = vadd.f32 %v2607, %v2767
        %v2800 = vadd.f32 %v2608, %v2768
        %v2801 = vadd.f32 %v2609, %v2769
        %v2802 = vadd.f32 %v2610, %v2770
        %v2803 = vadd.f32 %v2611, %v2771
        %v2804 = vadd.f32 %v2612, %v2772
        %v2805 = vadd.f32 %v2613, %v2773
        %v2806 = vadd.f32 %v2614, %v2774
        %v2807 = vadd.f32 %v2615, %v2775
        %v2808 = vadd.f32 %v2616, %v2776
        %v2809 = vadd.f32 %v2617, %v2777
        %v2810 = vadd.f32 %v2618, %v2778
        %v2811 = vadd.f32 %v2619, %v2779
        %v2812 = vadd.f32 %v2620, %v2780
        %v2813 = vadd.f32 %v2621, %v2781
        %v2814 = vadd.f32 %v2622, %v2782
        %v2815 = vadd.f32 %v2623, %v2783
        %v2816 = vadd.f32 %v2624, %v2784
        %v2817 = vadd.f32 %v2625, %v2785
        %v2818 = vadd.f32 %v2626, %v2786
        %v2819 = vadd.f32 %v2627, %v2787
        %v2820 = vadd.f32 %v2628, %v2788
        %v2821 = vadd.f32 %v2629, %v2789
        %v2822 = vadd.f32 %v2630, %v2790
        %v2823 = vadd.f32 %v2631, %v2791
        %v2824 = vadd.f32 %v2632, %v2792
        %v2825 = vadd.f32 %v2633, %v2793
        %v2826 = vadd.f32 %v2634, %v2794
        %v2827 = vadd.f32 %v2635, %v2795
        %v2828 = vadd.f32 %v2636, %v2796
        %v2829 = vpack.c.bf16 %v2350, %v2349
        %v2830 = vpack.c.bf16 %v2352, %v2351
        %v2831 = vpack.c.bf16 %v2354, %v2353
        %v2832 = vpack.c.bf16 %v2356, %v2355
        %v2833 = vpack.c.bf16 %v2358, %v2357
        %v2834 = vpack.c.bf16 %v2360, %v2359
        %v2835 = vpack.c.bf16 %v2362, %v2361
        %v2836 = vpack.c.bf16 %v2364, %v2363
        %v2837 = vpack.c.bf16 %v2366, %v2365
        %v2838 = vpack.c.bf16 %v2368, %v2367
        %v2839 = vpack.c.bf16 %v2370, %v2369
        %v2840 = vpack.c.bf16 %v2372, %v2371
        %v2841 = vpack.c.bf16 %v2374, %v2373
        %v2842 = vpack.c.bf16 %v2376, %v2375
        %v2843 = vpack.c.bf16 %v2378, %v2377
        %v2844 = vpack.c.bf16 %v2380, %v2379
        %v2861 = vunpack.c.l.b16 %v2829
        %v2862 = vunpack.c.h.b16 %v2829
        %v2863 = vunpack.c.l.b16 %v2830
        %v2864 = vunpack.c.h.b16 %v2830
        %v2865 = vunpack.c.l.b16 %v2831
        %v2866 = vunpack.c.h.b16 %v2831
        %v2867 = vunpack.c.l.b16 %v2832
        %v2868 = vunpack.c.h.b16 %v2832
        %v2869 = vunpack.c.l.b16 %v2833
        %v2870 = vunpack.c.h.b16 %v2833
        %v2871 = vunpack.c.l.b16 %v2834
        %v2872 = vunpack.c.h.b16 %v2834
        %v2873 = vunpack.c.l.b16 %v2835
        %v2874 = vunpack.c.h.b16 %v2835
        %v2875 = vunpack.c.l.b16 %v2836
        %v2876 = vunpack.c.h.b16 %v2836
        %v2877 = vunpack.c.l.b16 %v2837
        %v2878 = vunpack.c.h.b16 %v2837
        %v2879 = vunpack.c.l.b16 %v2838
        %v2880 = vunpack.c.h.b16 %v2838
        %v2881 = vunpack.c.l.b16 %v2839
        %v2882 = vunpack.c.h.b16 %v2839
        %v2883 = vunpack.c.l.b16 %v2840
        %v2884 = vunpack.c.h.b16 %v2840
        %v2885 = vunpack.c.l.b16 %v2841
        %v2886 = vunpack.c.h.b16 %v2841
        %v2887 = vunpack.c.l.b16 %v2842
        %v2888 = vunpack.c.h.b16 %v2842
        %v2889 = vunpack.c.l.b16 %v2843
        %v2890 = vunpack.c.h.b16 %v2843
        %v2891 = vunpack.c.l.b16 %v2844
        %v2892 = vunpack.c.h.b16 %v2844
        %v2893 = vpack.c.b16 %v2861, %v2861
        %v2894 = vpack.c.b16 %v2862, %v2862
        %v2895 = vpack.c.b16 %v2863, %v2863
        %v2896 = vpack.c.b16 %v2864, %v2864
        %v2897 = vpack.c.b16 %v2865, %v2865
        %v2898 = vpack.c.b16 %v2866, %v2866
        %v2899 = vpack.c.b16 %v2867, %v2867
        %v2900 = vpack.c.b16 %v2868, %v2868
        %v2901 = vpack.c.b16 %v2869, %v2869
        %v2902 = vpack.c.b16 %v2870, %v2870
        %v2903 = vpack.c.b16 %v2871, %v2871
        %v2904 = vpack.c.b16 %v2872, %v2872
        %v2905 = vpack.c.b16 %v2873, %v2873
        %v2906 = vpack.c.b16 %v2874, %v2874
        %v2907 = vpack.c.b16 %v2875, %v2875
        %v2908 = vpack.c.b16 %v2876, %v2876
        %v2909 = vpack.c.b16 %v2877, %v2877
        %v2910 = vpack.c.b16 %v2878, %v2878
        %v2911 = vpack.c.b16 %v2879, %v2879
        %v2912 = vpack.c.b16 %v2880, %v2880
        %v2913 = vpack.c.b16 %v2881, %v2881
        %v2914 = vpack.c.b16 %v2882, %v2882
        %v2915 = vpack.c.b16 %v2883, %v2883
        %v2916 = vpack.c.b16 %v2884, %v2884
        %v2917 = vpack.c.b16 %v2885, %v2885
        %v2918 = vpack.c.b16 %v2886, %v2886
        %v2919 = vpack.c.b16 %v2887, %v2887
        %v2920 = vpack.c.b16 %v2888, %v2888
        %v2921 = vpack.c.b16 %v2889, %v2889
        %v2922 = vpack.c.b16 %v2890, %v2890
        %v2923 = vpack.c.b16 %v2891, %v2891
        %v2924 = vpack.c.b16 %v2892, %v2892
        %2957 = vst [vmem:[%s539] sm:$0xf] %v2893
        %2958 = vst [vmem:[%s539 + $0x4] sm:$0xf] %v2894
        %2959 = vst [vmem:[%s539 + $0x8] sm:$0xf] %v2895
        %2960 = vst [vmem:[%s539 + $0xc] sm:$0xf] %v2896
        %2961 = vst [vmem:[%s539 + $0x10] sm:$0xf] %v2897
        %2962 = vst [vmem:[%s539 + $0x14] sm:$0xf] %v2898
        %2963 = vst [vmem:[%s539 + $0x18] sm:$0xf] %v2899
        %2964 = vst [vmem:[%s539 + $0x1c] sm:$0xf] %v2900
        %2965 = vst [vmem:[%s539 + $0x20] sm:$0xf] %v2901
        %2966 = vst [vmem:[%s539 + $0x24] sm:$0xf] %v2902
        %2967 = vst [vmem:[%s539 + $0x28] sm:$0xf] %v2903
        %2968 = vst [vmem:[%s539 + $0x2c] sm:$0xf] %v2904
        %2969 = vst [vmem:[%s539 + $0x30] sm:$0xf] %v2905
        %2970 = vst [vmem:[%s539 + $0x34] sm:$0xf] %v2906
        %2971 = vst [vmem:[%s539 + $0x38] sm:$0xf] %v2907
        %2972 = vst [vmem:[%s539 + $0x3c] sm:$0xf] %v2908
        %2973 = vst [vmem:[%s539 + $0x40] sm:$0xf] %v2909
        %2974 = vst [vmem:[%s539 + $0x44] sm:$0xf] %v2910
        %2975 = vst [vmem:[%s539 + $0x48] sm:$0xf] %v2911
        %2976 = vst [vmem:[%s539 + $0x4c] sm:$0xf] %v2912
        %2977 = vst [vmem:[%s539 + $0x50] sm:$0xf] %v2913
        %2978 = vst [vmem:[%s539 + $0x54] sm:$0xf] %v2914
        %2979 = vst [vmem:[%s539 + $0x58] sm:$0xf] %v2915
        %2980 = vst [vmem:[%s539 + $0x5c] sm:$0xf] %v2916
        %2981 = vst [vmem:[%s539 + $0x60] sm:$0xf] %v2917
        %2982 = vst [vmem:[%s539 + $0x64] sm:$0xf] %v2918
        %2983 = vst [vmem:[%s539 + $0x68] sm:$0xf] %v2919
        %2984 = vst [vmem:[%s539 + $0x6c] sm:$0xf] %v2920
        %2985 = vst [vmem:[%s539 + $0x70] sm:$0xf] %v2921
        %2986 = vst [vmem:[%s539 + $0x74] sm:$0xf] %v2922
        %2987 = vst [vmem:[%s539 + $0x78] sm:$0xf] %v2923
        %2988 = vst [vmem:[%s539 + $0x7c] sm:$0xf] %v2924
        %v2989 = vpack.c.bf16 %v2798, %v2797
        %v2990 = vpack.c.bf16 %v2800, %v2799
        %v2991 = vpack.c.bf16 %v2802, %v2801
        %v2992 = vpack.c.bf16 %v2804, %v2803
        %v2993 = vpack.c.bf16 %v2806, %v2805
        %v2994 = vpack.c.bf16 %v2808, %v2807
        %v2995 = vpack.c.bf16 %v2810, %v2809
        %v2996 = vpack.c.bf16 %v2812, %v2811
        %v2997 = vpack.c.bf16 %v2814, %v2813
        %v2998 = vpack.c.bf16 %v2816, %v2815
        %v2999 = vpack.c.bf16 %v2818, %v2817
        %v3000 = vpack.c.bf16 %v2820, %v2819
        %v3001 = vpack.c.bf16 %v2822, %v2821
        %v3002 = vpack.c.bf16 %v2824, %v2823
        %v3003 = vpack.c.bf16 %v2826, %v2825
        %v3004 = vpack.c.bf16 %v2828, %v2827
        %v3021 = vunpack.c.l.b16 %v2989
        %v3022 = vunpack.c.h.b16 %v2989
        %v3023 = vunpack.c.l.b16 %v2990
        %v3024 = vunpack.c.h.b16 %v2990
        %v3025 = vunpack.c.l.b16 %v2991
        %v3026 = vunpack.c.h.b16 %v2991
        %v3027 = vunpack.c.l.b16 %v2992
        %v3028 = vunpack.c.h.b16 %v2992
        %v3029 = vunpack.c.l.b16 %v2993
        %v3030 = vunpack.c.h.b16 %v2993
        %v3031 = vunpack.c.l.b16 %v2994
        %v3032 = vunpack.c.h.b16 %v2994
        %v3033 = vunpack.c.l.b16 %v2995
        %v3034 = vunpack.c.h.b16 %v2995
        %v3035 = vunpack.c.l.b16 %v2996
        %v3036 = vunpack.c.h.b16 %v2996
        %v3037 = vunpack.c.l.b16 %v2997
        %v3038 = vunpack.c.h.b16 %v2997
        %v3039 = vunpack.c.l.b16 %v2998
        %v3040 = vunpack.c.h.b16 %v2998
        %v3041 = vunpack.c.l.b16 %v2999
        %v3042 = vunpack.c.h.b16 %v2999
        %v3043 = vunpack.c.l.b16 %v3000
        %v3044 = vunpack.c.h.b16 %v3000
        %v3045 = vunpack.c.l.b16 %v3001
        %v3046 = vunpack.c.h.b16 %v3001
        %v3047 = vunpack.c.l.b16 %v3002
        %v3048 = vunpack.c.h.b16 %v3002
        %v3049 = vunpack.c.l.b16 %v3003
        %v3050 = vunpack.c.h.b16 %v3003
        %v3051 = vunpack.c.l.b16 %v3004
        %v3052 = vunpack.c.h.b16 %v3004
        %v3053 = vpack.c.b16 %v3021, %v3021
        %v3054 = vpack.c.b16 %v3022, %v3022
        %v3055 = vpack.c.b16 %v3023, %v3023
        %v3056 = vpack.c.b16 %v3024, %v3024
        %v3057 = vpack.c.b16 %v3025, %v3025
        %v3058 = vpack.c.b16 %v3026, %v3026
        %v3059 = vpack.c.b16 %v3027, %v3027
        %v3060 = vpack.c.b16 %v3028, %v3028
        %v3061 = vpack.c.b16 %v3029, %v3029
        %v3062 = vpack.c.b16 %v3030, %v3030
        %v3063 = vpack.c.b16 %v3031, %v3031
        %v3064 = vpack.c.b16 %v3032, %v3032
        %v3065 = vpack.c.b16 %v3033, %v3033
        %v3066 = vpack.c.b16 %v3034, %v3034
        %v3067 = vpack.c.b16 %v3035, %v3035
        %v3068 = vpack.c.b16 %v3036, %v3036
        %v3069 = vpack.c.b16 %v3037, %v3037
        %v3070 = vpack.c.b16 %v3038, %v3038
        %v3071 = vpack.c.b16 %v3039, %v3039
        %v3072 = vpack.c.b16 %v3040, %v3040
        %v3073 = vpack.c.b16 %v3041, %v3041
        %v3074 = vpack.c.b16 %v3042, %v3042
        %v3075 = vpack.c.b16 %v3043, %v3043
        %v3076 = vpack.c.b16 %v3044, %v3044
        %v3077 = vpack.c.b16 %v3045, %v3045
        %v3078 = vpack.c.b16 %v3046, %v3046
        %v3079 = vpack.c.b16 %v3047, %v3047
        %v3080 = vpack.c.b16 %v3048, %v3048
        %v3081 = vpack.c.b16 %v3049, %v3049
        %v3082 = vpack.c.b16 %v3050, %v3050
        %v3083 = vpack.c.b16 %v3051, %v3051
        %v3084 = vpack.c.b16 %v3052, %v3052
        %3117 = vst [vmem:[%s546] sm:$0xf] %v3053
        %3118 = vst [vmem:[%s546 + $0x4] sm:$0xf] %v3054
        %3119 = vst [vmem:[%s546 + $0x8] sm:$0xf] %v3055
        %3120 = vst [vmem:[%s546 + $0xc] sm:$0xf] %v3056
        %3121 = vst [vmem:[%s546 + $0x10] sm:$0xf] %v3057
        %3122 = vst [vmem:[%s546 + $0x14] sm:$0xf] %v3058
        %3123 = vst [vmem:[%s546 + $0x18] sm:$0xf] %v3059
        %3124 = vst [vmem:[%s546 + $0x1c] sm:$0xf] %v3060
        %3125 = vst [vmem:[%s546 + $0x20] sm:$0xf] %v3061
        %3126 = vst [vmem:[%s546 + $0x24] sm:$0xf] %v3062
        %3127 = vst [vmem:[%s546 + $0x28] sm:$0xf] %v3063
        %3128 = vst [vmem:[%s546 + $0x2c] sm:$0xf] %v3064
        %3129 = vst [vmem:[%s546 + $0x30] sm:$0xf] %v3065
        %3130 = vst [vmem:[%s546 + $0x34] sm:$0xf] %v3066
        %3131 = vst [vmem:[%s546 + $0x38] sm:$0xf] %v3067
        %3132 = vst [vmem:[%s546 + $0x3c] sm:$0xf] %v3068
        %3133 = vst [vmem:[%s546 + $0x40] sm:$0xf] %v3069
        %3134 = vst [vmem:[%s546 + $0x44] sm:$0xf] %v3070
        %3135 = vst [vmem:[%s546 + $0x48] sm:$0xf] %v3071
        %3136 = vst [vmem:[%s546 + $0x4c] sm:$0xf] %v3072
        %3137 = vst [vmem:[%s546 + $0x50] sm:$0xf] %v3073
        %3138 = vst [vmem:[%s546 + $0x54] sm:$0xf] %v3074
        %3139 = vst [vmem:[%s546 + $0x58] sm:$0xf] %v3075
        %3140 = vst [vmem:[%s546 + $0x5c] sm:$0xf] %v3076
        %3141 = vst [vmem:[%s546 + $0x60] sm:$0xf] %v3077
        %3142 = vst [vmem:[%s546 + $0x64] sm:$0xf] %v3078
        %3143 = vst [vmem:[%s546 + $0x68] sm:$0xf] %v3079
        %3144 = vst [vmem:[%s546 + $0x6c] sm:$0xf] %v3080
        %3145 = vst [vmem:[%s546 + $0x70] sm:$0xf] %v3081
        %3146 = vst [vmem:[%s546 + $0x74] sm:$0xf] %v3082
        %3147 = vst [vmem:[%s546 + $0x78] sm:$0xf] %v3083
        %3148 = vst [vmem:[%s546 + $0x7c] sm:$0xf] %v3084
        %s3149 = ssub.f32 1.0, %s566
        %v3150 = vstv %s3149
        %v3151 = vmul.f32 %v3150, %v1711
        %v3152 = vmul.f32 %v3150, %v1715
        %v3153 = vmul.f32 %v3150, %v1721
        %v3154 = vmul.f32 %v3150, %v1725
        %v3155 = vmul.f32 %v3150, %v1731
        %v3156 = vmul.f32 %v3150, %v1735
        %v3157 = vmul.f32 %v3150, %v1741
        %v3158 = vmul.f32 %v3150, %v1745
        %v3159 = vmul.f32 %v3150, %v1751
        %v3160 = vmul.f32 %v3150, %v1755
        %v3161 = vmul.f32 %v3150, %v1761
        %v3162 = vmul.f32 %v3150, %v1765
        %v3163 = vmul.f32 %v3150, %v1771
        %v3164 = vmul.f32 %v3150, %v1775
        %v3165 = vmul.f32 %v3150, %v1781
        %v3166 = vmul.f32 %v3150, %v1785
        %v3167 = vmul.f32 %v3150, %v1791
        %v3168 = vmul.f32 %v3150, %v1795
        %v3169 = vmul.f32 %v3150, %v1801
        %v3170 = vmul.f32 %v3150, %v1805
        %v3171 = vmul.f32 %v3150, %v1811
        %v3172 = vmul.f32 %v3150, %v1815
        %v3173 = vmul.f32 %v3150, %v1821
        %v3174 = vmul.f32 %v3150, %v1825
        %v3175 = vmul.f32 %v3150, %v1831
        %v3176 = vmul.f32 %v3150, %v1835
        %v3177 = vmul.f32 %v3150, %v1841
        %v3178 = vmul.f32 %v3150, %v1845
        %v3179 = vmul.f32 %v3150, %v1851
        %v3180 = vmul.f32 %v3150, %v1855
        %v3181 = vmul.f32 %v3150, %v1861
        %v3182 = vmul.f32 %v3150, %v1865
        %v3183 = vld [vmem:[%s462] sm:$0xff]
        %v3184 = vld [vmem:[%s462 + $0x10] sm:$0xff]
        %v3185 = vld [vmem:[%s462 + $0x20] sm:$0xff]
        %v3186 = vld [vmem:[%s462 + $0x30] sm:$0xff]
        %v3187 = vld [vmem:[%s462 + $0x40] sm:$0xff]
        %v3188 = vld [vmem:[%s462 + $0x50] sm:$0xff]
        %v3189 = vld [vmem:[%s462 + $0x60] sm:$0xff]
        %v3190 = vld [vmem:[%s462 + $0x70] sm:$0xff]
        %v3191 = vld [vmem:[%s462 + $0x80] sm:$0xff]
        %v3192 = vld [vmem:[%s462 + $0x90] sm:$0xff]
        %v3193 = vld [vmem:[%s462 + $0xa0] sm:$0xff]
        %v3194 = vld [vmem:[%s462 + $0xb0] sm:$0xff]
        %v3195 = vld [vmem:[%s462 + $0xc0] sm:$0xff]
        %v3196 = vld [vmem:[%s462 + $0xd0] sm:$0xff]
        %v3197 = vld [vmem:[%s462 + $0xe0] sm:$0xff]
        %v3198 = vld [vmem:[%s462 + $0xf0] sm:$0xff]
        %v3199 = vld [vmem:[%s462 + $0x100] sm:$0xff]
        %v3200 = vld [vmem:[%s462 + $0x110] sm:$0xff]
        %v3201 = vld [vmem:[%s462 + $0x120] sm:$0xff]
        %v3202 = vld [vmem:[%s462 + $0x130] sm:$0xff]
        %v3203 = vld [vmem:[%s462 + $0x140] sm:$0xff]
        %v3204 = vld [vmem:[%s462 + $0x150] sm:$0xff]
        %v3205 = vld [vmem:[%s462 + $0x160] sm:$0xff]
        %v3206 = vld [vmem:[%s462 + $0x170] sm:$0xff]
        %v3207 = vld [vmem:[%s462 + $0x180] sm:$0xff]
        %v3208 = vld [vmem:[%s462 + $0x190] sm:$0xff]
        %v3209 = vld [vmem:[%s462 + $0x1a0] sm:$0xff]
        %v3210 = vld [vmem:[%s462 + $0x1b0] sm:$0xff]
        %v3211 = vld [vmem:[%s462 + $0x1c0] sm:$0xff]
        %v3212 = vld [vmem:[%s462 + $0x1d0] sm:$0xff]
        %v3213 = vld [vmem:[%s462 + $0x1e0] sm:$0xff]
        %v3214 = vld [vmem:[%s462 + $0x1f0] sm:$0xff]
        %v3215 = vstv %s566
        %v3216 = vmul.f32 %v3215, %v3183
        %v3217 = vmul.f32 %v3215, %v3184
        %v3218 = vmul.f32 %v3215, %v3185
        %v3219 = vmul.f32 %v3215, %v3186
        %v3220 = vmul.f32 %v3215, %v3187
        %v3221 = vmul.f32 %v3215, %v3188
        %v3222 = vmul.f32 %v3215, %v3189
        %v3223 = vmul.f32 %v3215, %v3190
        %v3224 = vmul.f32 %v3215, %v3191
        %v3225 = vmul.f32 %v3215, %v3192
        %v3226 = vmul.f32 %v3215, %v3193
        %v3227 = vmul.f32 %v3215, %v3194
        %v3228 = vmul.f32 %v3215, %v3195
        %v3229 = vmul.f32 %v3215, %v3196
        %v3230 = vmul.f32 %v3215, %v3197
        %v3231 = vmul.f32 %v3215, %v3198
        %v3232 = vmul.f32 %v3215, %v3199
        %v3233 = vmul.f32 %v3215, %v3200
        %v3234 = vmul.f32 %v3215, %v3201
        %v3235 = vmul.f32 %v3215, %v3202
        %v3236 = vmul.f32 %v3215, %v3203
        %v3237 = vmul.f32 %v3215, %v3204
        %v3238 = vmul.f32 %v3215, %v3205
        %v3239 = vmul.f32 %v3215, %v3206
        %v3240 = vmul.f32 %v3215, %v3207
        %v3241 = vmul.f32 %v3215, %v3208
        %v3242 = vmul.f32 %v3215, %v3209
        %v3243 = vmul.f32 %v3215, %v3210
        %v3244 = vmul.f32 %v3215, %v3211
        %v3245 = vmul.f32 %v3215, %v3212
        %v3246 = vmul.f32 %v3215, %v3213
        %v3247 = vmul.f32 %v3215, %v3214
        %v3248 = vadd.f32 %v3151, %v3216
        %v3249 = vadd.f32 %v3152, %v3217
        %v3250 = vadd.f32 %v3153, %v3218
        %v3251 = vadd.f32 %v3154, %v3219
        %v3252 = vadd.f32 %v3155, %v3220
        %v3253 = vadd.f32 %v3156, %v3221
        %v3254 = vadd.f32 %v3157, %v3222
        %v3255 = vadd.f32 %v3158, %v3223
        %v3256 = vadd.f32 %v3159, %v3224
        %v3257 = vadd.f32 %v3160, %v3225
        %v3258 = vadd.f32 %v3161, %v3226
        %v3259 = vadd.f32 %v3162, %v3227
        %v3260 = vadd.f32 %v3163, %v3228
        %v3261 = vadd.f32 %v3164, %v3229
        %v3262 = vadd.f32 %v3165, %v3230
        %v3263 = vadd.f32 %v3166, %v3231
        %v3264 = vadd.f32 %v3167, %v3232
        %v3265 = vadd.f32 %v3168, %v3233
        %v3266 = vadd.f32 %v3169, %v3234
        %v3267 = vadd.f32 %v3170, %v3235
        %v3268 = vadd.f32 %v3171, %v3236
        %v3269 = vadd.f32 %v3172, %v3237
        %v3270 = vadd.f32 %v3173, %v3238
        %v3271 = vadd.f32 %v3174, %v3239
        %v3272 = vadd.f32 %v3175, %v3240
        %v3273 = vadd.f32 %v3176, %v3241
        %v3274 = vadd.f32 %v3177, %v3242
        %v3275 = vadd.f32 %v3178, %v3243
        %v3276 = vadd.f32 %v3179, %v3244
        %v3277 = vadd.f32 %v3180, %v3245
        %v3278 = vadd.f32 %v3181, %v3246
        %v3279 = vadd.f32 %v3182, %v3247
        %v3280 = vpack.c.bf16 %v3249, %v3248
        %v3281 = vpack.c.bf16 %v3251, %v3250
        %v3282 = vpack.c.bf16 %v3253, %v3252
        %v3283 = vpack.c.bf16 %v3255, %v3254
        %v3284 = vpack.c.bf16 %v3257, %v3256
        %v3285 = vpack.c.bf16 %v3259, %v3258
        %v3286 = vpack.c.bf16 %v3261, %v3260
        %v3287 = vpack.c.bf16 %v3263, %v3262
        %v3288 = vpack.c.bf16 %v3265, %v3264
        %v3289 = vpack.c.bf16 %v3267, %v3266
        %v3290 = vpack.c.bf16 %v3269, %v3268
        %v3291 = vpack.c.bf16 %v3271, %v3270
        %v3292 = vpack.c.bf16 %v3273, %v3272
        %v3293 = vpack.c.bf16 %v3275, %v3274
        %v3294 = vpack.c.bf16 %v3277, %v3276
        %v3295 = vpack.c.bf16 %v3279, %v3278
        %v3312 = vunpack.c.l.b16 %v3280
        %v3313 = vunpack.c.h.b16 %v3280
        %v3314 = vunpack.c.l.b16 %v3281
        %v3315 = vunpack.c.h.b16 %v3281
        %v3316 = vunpack.c.l.b16 %v3282
        %v3317 = vunpack.c.h.b16 %v3282
        %v3318 = vunpack.c.l.b16 %v3283
        %v3319 = vunpack.c.h.b16 %v3283
        %v3320 = vunpack.c.l.b16 %v3284
        %v3321 = vunpack.c.h.b16 %v3284
        %v3322 = vunpack.c.l.b16 %v3285
        %v3323 = vunpack.c.h.b16 %v3285
        %v3324 = vunpack.c.l.b16 %v3286
        %v3325 = vunpack.c.h.b16 %v3286
        %v3326 = vunpack.c.l.b16 %v3287
        %v3327 = vunpack.c.h.b16 %v3287
        %v3328 = vunpack.c.l.b16 %v3288
        %v3329 = vunpack.c.h.b16 %v3288
        %v3330 = vunpack.c.l.b16 %v3289
        %v3331 = vunpack.c.h.b16 %v3289
        %v3332 = vunpack.c.l.b16 %v3290
        %v3333 = vunpack.c.h.b16 %v3290
        %v3334 = vunpack.c.l.b16 %v3291
        %v3335 = vunpack.c.h.b16 %v3291
        %v3336 = vunpack.c.l.b16 %v3292
        %v3337 = vunpack.c.h.b16 %v3292
        %v3338 = vunpack.c.l.b16 %v3293
        %v3339 = vunpack.c.h.b16 %v3293
        %v3340 = vunpack.c.l.b16 %v3294
        %v3341 = vunpack.c.h.b16 %v3294
        %v3342 = vunpack.c.l.b16 %v3295
        %v3343 = vunpack.c.h.b16 %v3295
        %v3344 = vpack.c.b16 %v3312, %v3312
        %v3345 = vpack.c.b16 %v3313, %v3313
        %v3346 = vpack.c.b16 %v3314, %v3314
        %v3347 = vpack.c.b16 %v3315, %v3315
        %v3348 = vpack.c.b16 %v3316, %v3316
        %v3349 = vpack.c.b16 %v3317, %v3317
        %v3350 = vpack.c.b16 %v3318, %v3318
        %v3351 = vpack.c.b16 %v3319, %v3319
        %v3352 = vpack.c.b16 %v3320, %v3320
        %v3353 = vpack.c.b16 %v3321, %v3321
        %v3354 = vpack.c.b16 %v3322, %v3322
        %v3355 = vpack.c.b16 %v3323, %v3323
        %v3356 = vpack.c.b16 %v3324, %v3324
        %v3357 = vpack.c.b16 %v3325, %v3325
        %v3358 = vpack.c.b16 %v3326, %v3326
        %v3359 = vpack.c.b16 %v3327, %v3327
        %v3360 = vpack.c.b16 %v3328, %v3328
        %v3361 = vpack.c.b16 %v3329, %v3329
        %v3362 = vpack.c.b16 %v3330, %v3330
        %v3363 = vpack.c.b16 %v3331, %v3331
        %v3364 = vpack.c.b16 %v3332, %v3332
        %v3365 = vpack.c.b16 %v3333, %v3333
        %v3366 = vpack.c.b16 %v3334, %v3334
        %v3367 = vpack.c.b16 %v3335, %v3335
        %v3368 = vpack.c.b16 %v3336, %v3336
        %v3369 = vpack.c.b16 %v3337, %v3337
        %v3370 = vpack.c.b16 %v3338, %v3338
        %v3371 = vpack.c.b16 %v3339, %v3339
        %v3372 = vpack.c.b16 %v3340, %v3340
        %v3373 = vpack.c.b16 %v3341, %v3341
        %v3374 = vpack.c.b16 %v3342, %v3342
        %v3375 = vpack.c.b16 %v3343, %v3343
        %3408 = vst [vmem:[%s553] sm:$0xf] %v3344
        %3409 = vst [vmem:[%s553 + $0x4] sm:$0xf] %v3345
        %3410 = vst [vmem:[%s553 + $0x8] sm:$0xf] %v3346
        %3411 = vst [vmem:[%s553 + $0xc] sm:$0xf] %v3347
        %3412 = vst [vmem:[%s553 + $0x10] sm:$0xf] %v3348
        %3413 = vst [vmem:[%s553 + $0x14] sm:$0xf] %v3349
        %3414 = vst [vmem:[%s553 + $0x18] sm:$0xf] %v3350
        %3415 = vst [vmem:[%s553 + $0x1c] sm:$0xf] %v3351
        %3416 = vst [vmem:[%s553 + $0x20] sm:$0xf] %v3352
        %3417 = vst [vmem:[%s553 + $0x24] sm:$0xf] %v3353
        %3418 = vst [vmem:[%s553 + $0x28] sm:$0xf] %v3354
        %3419 = vst [vmem:[%s553 + $0x2c] sm:$0xf] %v3355
        %3420 = vst [vmem:[%s553 + $0x30] sm:$0xf] %v3356
        %3421 = vst [vmem:[%s553 + $0x34] sm:$0xf] %v3357
        %3422 = vst [vmem:[%s553 + $0x38] sm:$0xf] %v3358
        %3423 = vst [vmem:[%s553 + $0x3c] sm:$0xf] %v3359
        %3424 = vst [vmem:[%s553 + $0x40] sm:$0xf] %v3360
        %3425 = vst [vmem:[%s553 + $0x44] sm:$0xf] %v3361
        %3426 = vst [vmem:[%s553 + $0x48] sm:$0xf] %v3362
        %3427 = vst [vmem:[%s553 + $0x4c] sm:$0xf] %v3363
        %3428 = vst [vmem:[%s553 + $0x50] sm:$0xf] %v3364
        %3429 = vst [vmem:[%s553 + $0x54] sm:$0xf] %v3365
        %3430 = vst [vmem:[%s553 + $0x58] sm:$0xf] %v3366
        %3431 = vst [vmem:[%s553 + $0x5c] sm:$0xf] %v3367
        %3432 = vst [vmem:[%s553 + $0x60] sm:$0xf] %v3368
        %3433 = vst [vmem:[%s553 + $0x64] sm:$0xf] %v3369
        %3434 = vst [vmem:[%s553 + $0x68] sm:$0xf] %v3370
        %3435 = vst [vmem:[%s553 + $0x6c] sm:$0xf] %v3371
        %3436 = vst [vmem:[%s553 + $0x70] sm:$0xf] %v3372
        %3437 = vst [vmem:[%s553 + $0x74] sm:$0xf] %v3373
        %3438 = vst [vmem:[%s553 + $0x78] sm:$0xf] %v3374
        %3439 = vst [vmem:[%s553 + $0x7c] sm:$0xf] %v3375
        %v3440 = vmul.f32 %v1327, %v1327
        %v3441 = vmul.f32 %v1331, %v1331
        %v3442 = vmul.f32 %v1337, %v1337
        %v3443 = vmul.f32 %v1341, %v1341
        %v3444 = vmul.f32 %v1347, %v1347
        %v3445 = vmul.f32 %v1351, %v1351
        %v3446 = vmul.f32 %v1357, %v1357
        %v3447 = vmul.f32 %v1361, %v1361
        %v3448 = vmul.f32 %v1367, %v1367
        %v3449 = vmul.f32 %v1371, %v1371
        %v3450 = vmul.f32 %v1377, %v1377
        %v3451 = vmul.f32 %v1381, %v1381
        %v3452 = vmul.f32 %v1387, %v1387
        %v3453 = vmul.f32 %v1391, %v1391
        %v3454 = vmul.f32 %v1397, %v1397
        %v3455 = vmul.f32 %v1401, %v1401
        %v3456 = vmul.f32 %v1407, %v1407
        %v3457 = vmul.f32 %v1411, %v1411
        %v3458 = vmul.f32 %v1417, %v1417
        %v3459 = vmul.f32 %v1421, %v1421
        %v3460 = vmul.f32 %v1427, %v1427
        %v3461 = vmul.f32 %v1431, %v1431
        %v3462 = vmul.f32 %v1437, %v1437
        %v3463 = vmul.f32 %v1441, %v1441
        %v3464 = vmul.f32 %v1447, %v1447
        %v3465 = vmul.f32 %v1451, %v1451
        %v3466 = vmul.f32 %v1457, %v1457
        %v3467 = vmul.f32 %v1461, %v1461
        %v3468 = vmul.f32 %v1467, %v1467
        %v3469 = vmul.f32 %v1471, %v1471
        %v3470 = vmul.f32 %v1477, %v1477
        %v3471 = vmul.f32 %v1481, %v1481
        %3472 = vadd.xlane.f32.xlu0 %v3440
        %v3473 = vpop.xlane.xlu0 %3472
        %3474 = vadd.xlane.f32.xlu0 %v3441
        %v3475 = vpop.xlane.xlu0 %3474
        %3476 = vadd.xlane.f32.xlu0 %v3442
        %v3477 = vpop.xlane.xlu0 %3476
        %3478 = vadd.xlane.f32.xlu0 %v3443
        %v3479 = vpop.xlane.xlu0 %3478
        %3480 = vadd.xlane.f32.xlu0 %v3444
        %v3481 = vpop.xlane.xlu0 %3480
        %3482 = vadd.xlane.f32.xlu0 %v3445
        %v3483 = vpop.xlane.xlu0 %3482
        %3484 = vadd.xlane.f32.xlu0 %v3446
        %v3485 = vpop.xlane.xlu0 %3484
        %3486 = vadd.xlane.f32.xlu0 %v3447
        %v3487 = vpop.xlane.xlu0 %3486
        %3488 = vadd.xlane.f32.xlu0 %v3448
        %v3489 = vpop.xlane.xlu0 %3488
        %3490 = vadd.xlane.f32.xlu0 %v3449
        %v3491 = vpop.xlane.xlu0 %3490
        %3492 = vadd.xlane.f32.xlu0 %v3450
        %v3493 = vpop.xlane.xlu0 %3492
        %3494 = vadd.xlane.f32.xlu0 %v3451
        %v3495 = vpop.xlane.xlu0 %3494
        %3496 = vadd.xlane.f32.xlu0 %v3452
        %v3497 = vpop.xlane.xlu0 %3496
        %3498 = vadd.xlane.f32.xlu0 %v3453
        %v3499 = vpop.xlane.xlu0 %3498
        %3500 = vadd.xlane.f32.xlu0 %v3454
        %v3501 = vpop.xlane.xlu0 %3500
        %3502 = vadd.xlane.f32.xlu0 %v3455
        %v3503 = vpop.xlane.xlu0 %3502
        %3504 = vadd.xlane.f32.xlu0 %v3456
        %v3505 = vpop.xlane.xlu0 %3504
        %3506 = vadd.xlane.f32.xlu0 %v3457
        %v3507 = vpop.xlane.xlu0 %3506
        %3508 = vadd.xlane.f32.xlu0 %v3458
        %v3509 = vpop.xlane.xlu0 %3508
        %3510 = vadd.xlane.f32.xlu0 %v3459
        %v3511 = vpop.xlane.xlu0 %3510
        %3512 = vadd.xlane.f32.xlu0 %v3460
        %v3513 = vpop.xlane.xlu0 %3512
        %3514 = vadd.xlane.f32.xlu0 %v3461
        %v3515 = vpop.xlane.xlu0 %3514
        %3516 = vadd.xlane.f32.xlu0 %v3462
        %v3517 = vpop.xlane.xlu0 %3516
        %3518 = vadd.xlane.f32.xlu0 %v3463
        %v3519 = vpop.xlane.xlu0 %3518
        %3520 = vadd.xlane.f32.xlu0 %v3464
        %v3521 = vpop.xlane.xlu0 %3520
        %3522 = vadd.xlane.f32.xlu0 %v3465
        %v3523 = vpop.xlane.xlu0 %3522
        %3524 = vadd.xlane.f32.xlu0 %v3466
        %v3525 = vpop.xlane.xlu0 %3524
        %3526 = vadd.xlane.f32.xlu0 %v3467
        %v3527 = vpop.xlane.xlu0 %3526
        %3528 = vadd.xlane.f32.xlu0 %v3468
        %v3529 = vpop.xlane.xlu0 %3528
        %3530 = vadd.xlane.f32.xlu0 %v3469
        %v3531 = vpop.xlane.xlu0 %3530
        %3532 = vadd.xlane.f32.xlu0 %v3470
        %v3533 = vpop.xlane.xlu0 %3532
        %3534 = vadd.xlane.f32.xlu0 %v3471
        %v3535 = vpop.xlane.xlu0 %3534
        %v3536 = vmul.f32 %v3473, %v857
        %v3537 = vmul.f32 %v3475, %v857
        %v3538 = vmul.f32 %v3477, %v857
        %v3539 = vmul.f32 %v3479, %v857
        %v3540 = vmul.f32 %v3481, %v857
        %v3541 = vmul.f32 %v3483, %v857
        %v3542 = vmul.f32 %v3485, %v857
        %v3543 = vmul.f32 %v3487, %v857
        %v3544 = vmul.f32 %v3489, %v857
        %v3545 = vmul.f32 %v3491, %v857
        %v3546 = vmul.f32 %v3493, %v857
        %v3547 = vmul.f32 %v3495, %v857
        %v3548 = vmul.f32 %v3497, %v857
        %v3549 = vmul.f32 %v3499, %v857
        %v3550 = vmul.f32 %v3501, %v857
        %v3551 = vmul.f32 %v3503, %v857
        %v3552 = vmul.f32 %v3505, %v857
        %v3553 = vmul.f32 %v3507, %v857
        %v3554 = vmul.f32 %v3509, %v857
        %v3555 = vmul.f32 %v3511, %v857
        %v3556 = vmul.f32 %v3513, %v857
        %v3557 = vmul.f32 %v3515, %v857
        %v3558 = vmul.f32 %v3517, %v857
        %v3559 = vmul.f32 %v3519, %v857
        %v3560 = vmul.f32 %v3521, %v857
        %v3561 = vmul.f32 %v3523, %v857
        %v3562 = vmul.f32 %v3525, %v857
        %v3563 = vmul.f32 %v3527, %v857
        %v3564 = vmul.f32 %v3529, %v857
        %v3565 = vmul.f32 %v3531, %v857
        %v3566 = vmul.f32 %v3533, %v857
        %v3567 = vmul.f32 %v3535, %v857
        %v3568 = vadd.f32 %v3536, 1.1920929e-07
        %v3569 = vadd.f32 %v3537, 1.1920929e-07
        %v3570 = vadd.f32 %v3538, 1.1920929e-07
        %v3571 = vadd.f32 %v3539, 1.1920929e-07
        %v3572 = vadd.f32 %v3540, 1.1920929e-07
        %v3573 = vadd.f32 %v3541, 1.1920929e-07
        %v3574 = vadd.f32 %v3542, 1.1920929e-07
        %v3575 = vadd.f32 %v3543, 1.1920929e-07
        %v3576 = vadd.f32 %v3544, 1.1920929e-07
        %v3577 = vadd.f32 %v3545, 1.1920929e-07
        %v3578 = vadd.f32 %v3546, 1.1920929e-07
        %v3579 = vadd.f32 %v3547, 1.1920929e-07
        %v3580 = vadd.f32 %v3548, 1.1920929e-07
        %v3581 = vadd.f32 %v3549, 1.1920929e-07
        %v3582 = vadd.f32 %v3550, 1.1920929e-07
        %v3583 = vadd.f32 %v3551, 1.1920929e-07
        %v3584 = vadd.f32 %v3552, 1.1920929e-07
        %v3585 = vadd.f32 %v3553, 1.1920929e-07
        %v3586 = vadd.f32 %v3554, 1.1920929e-07
        %v3587 = vadd.f32 %v3555, 1.1920929e-07
        %v3588 = vadd.f32 %v3556, 1.1920929e-07
        %v3589 = vadd.f32 %v3557, 1.1920929e-07
        %v3590 = vadd.f32 %v3558, 1.1920929e-07
        %v3591 = vadd.f32 %v3559, 1.1920929e-07
        %v3592 = vadd.f32 %v3560, 1.1920929e-07
        %v3593 = vadd.f32 %v3561, 1.1920929e-07
        %v3594 = vadd.f32 %v3562, 1.1920929e-07
        %v3595 = vadd.f32 %v3563, 1.1920929e-07
        %v3596 = vadd.f32 %v3564, 1.1920929e-07
        %v3597 = vadd.f32 %v3565, 1.1920929e-07
        %v3598 = vadd.f32 %v3566, 1.1920929e-07
        %v3599 = vadd.f32 %v3567, 1.1920929e-07
        %v3600 = vrsqrt.pop %v3568
        %v3601 = vrsqrt.pop %v3569
        %v3602 = vrsqrt.pop %v3570
        %v3603 = vrsqrt.pop %v3571
        %v3604 = vrsqrt.pop %v3572
        %v3605 = vrsqrt.pop %v3573
        %v3606 = vrsqrt.pop %v3574
        %v3607 = vrsqrt.pop %v3575
        %v3608 = vrsqrt.pop %v3576
        %v3609 = vrsqrt.pop %v3577
        %v3610 = vrsqrt.pop %v3578
        %v3611 = vrsqrt.pop %v3579
        %v3612 = vrsqrt.pop %v3580
        %v3613 = vrsqrt.pop %v3581
        %v3614 = vrsqrt.pop %v3582
        %v3615 = vrsqrt.pop %v3583
        %v3616 = vrsqrt.pop %v3584
        %v3617 = vrsqrt.pop %v3585
        %v3618 = vrsqrt.pop %v3586
        %v3619 = vrsqrt.pop %v3587
        %v3620 = vrsqrt.pop %v3588
        %v3621 = vrsqrt.pop %v3589
        %v3622 = vrsqrt.pop %v3590
        %v3623 = vrsqrt.pop %v3591
        %v3624 = vrsqrt.pop %v3592
        %v3625 = vrsqrt.pop %v3593
        %v3626 = vrsqrt.pop %v3594
        %v3627 = vrsqrt.pop %v3595
        %v3628 = vrsqrt.pop %v3596
        %v3629 = vrsqrt.pop %v3597
        %v3630 = vrsqrt.pop %v3598
        %v3631 = vrsqrt.pop %v3599
        %v3632 = vmul.f32 %v1327, %v3600
        %v3633 = vmul.f32 %v1331, %v3601
        %v3634 = vmul.f32 %v1337, %v3602
        %v3635 = vmul.f32 %v1341, %v3603
        %v3636 = vmul.f32 %v1347, %v3604
        %v3637 = vmul.f32 %v1351, %v3605
        %v3638 = vmul.f32 %v1357, %v3606
        %v3639 = vmul.f32 %v1361, %v3607
        %v3640 = vmul.f32 %v1367, %v3608
        %v3641 = vmul.f32 %v1371, %v3609
        %v3642 = vmul.f32 %v1377, %v3610
        %v3643 = vmul.f32 %v1381, %v3611
        %v3644 = vmul.f32 %v1387, %v3612
        %v3645 = vmul.f32 %v1391, %v3613
        %v3646 = vmul.f32 %v1397, %v3614
        %v3647 = vmul.f32 %v1401, %v3615
        %v3648 = vmul.f32 %v1407, %v3616
        %v3649 = vmul.f32 %v1411, %v3617
        %v3650 = vmul.f32 %v1417, %v3618
        %v3651 = vmul.f32 %v1421, %v3619
        %v3652 = vmul.f32 %v1427, %v3620
        %v3653 = vmul.f32 %v1431, %v3621
        %v3654 = vmul.f32 %v1437, %v3622
        %v3655 = vmul.f32 %v1441, %v3623
        %v3656 = vmul.f32 %v1447, %v3624
        %v3657 = vmul.f32 %v1451, %v3625
        %v3658 = vmul.f32 %v1457, %v3626
        %v3659 = vmul.f32 %v1461, %v3627
        %v3660 = vmul.f32 %v1467, %v3628
        %v3661 = vmul.f32 %v1471, %v3629
        %v3662 = vmul.f32 %v1477, %v3630
        %v3663 = vmul.f32 %v1481, %v3631
        %v3664 = vmul.f32 %v3632, %v1869
        %v3665 = vmul.f32 %v3633, %v1870
        %v3666 = vmul.f32 %v3634, %v1871
        %v3667 = vmul.f32 %v3635, %v1872
        %v3668 = vmul.f32 %v3636, %v1873
        %v3669 = vmul.f32 %v3637, %v1874
        %v3670 = vmul.f32 %v3638, %v1875
        %v3671 = vmul.f32 %v3639, %v1876
        %v3672 = vmul.f32 %v3640, %v1877
        %v3673 = vmul.f32 %v3641, %v1878
        %v3674 = vmul.f32 %v3642, %v1879
        %v3675 = vmul.f32 %v3643, %v1880
        %v3676 = vmul.f32 %v3644, %v1881
        %v3677 = vmul.f32 %v3645, %v1882
        %v3678 = vmul.f32 %v3646, %v1883
        %v3679 = vmul.f32 %v3647, %v1884
        %v3680 = vmul.f32 %v3648, %v1885
        %v3681 = vmul.f32 %v3649, %v1886
        %v3682 = vmul.f32 %v3650, %v1887
        %v3683 = vmul.f32 %v3651, %v1888
        %v3684 = vmul.f32 %v3652, %v1889
        %v3685 = vmul.f32 %v3653, %v1890
        %v3686 = vmul.f32 %v3654, %v1891
        %v3687 = vmul.f32 %v3655, %v1892
        %v3688 = vmul.f32 %v3656, %v1893
        %v3689 = vmul.f32 %v3657, %v1894
        %v3690 = vmul.f32 %v3658, %v1895
        %v3691 = vmul.f32 %v3659, %v1896
        %v3692 = vmul.f32 %v3660, %v1897
        %v3693 = vmul.f32 %v3661, %v1898
        %v3694 = vmul.f32 %v3662, %v1899
        %v3695 = vmul.f32 %v3663, %v1900
        %3728 = vrot.lane.b32.xlu0 %v3632, 64
        %v3729 = vpop.permute.xlu0 %3728
        %3730 = vrot.lane.b32.xlu0 %v3633, 64
        %v3731 = vpop.permute.xlu0 %3730
        %3732 = vrot.lane.b32.xlu0 %v3634, 64
        %v3733 = vpop.permute.xlu0 %3732
        %3734 = vrot.lane.b32.xlu0 %v3635, 64
        %v3735 = vpop.permute.xlu0 %3734
        %3736 = vrot.lane.b32.xlu0 %v3636, 64
        %v3737 = vpop.permute.xlu0 %3736
        %3738 = vrot.lane.b32.xlu0 %v3637, 64
        %v3739 = vpop.permute.xlu0 %3738
        %3740 = vrot.lane.b32.xlu0 %v3638, 64
        %v3741 = vpop.permute.xlu0 %3740
        %3742 = vrot.lane.b32.xlu0 %v3639, 64
        %v3743 = vpop.permute.xlu0 %3742
        %3744 = vrot.lane.b32.xlu0 %v3640, 64
        %v3745 = vpop.permute.xlu0 %3744
        %3746 = vrot.lane.b32.xlu0 %v3641, 64
        %v3747 = vpop.permute.xlu0 %3746
        %3748 = vrot.lane.b32.xlu0 %v3642, 64
        %v3749 = vpop.permute.xlu0 %3748
        %3750 = vrot.lane.b32.xlu0 %v3643, 64
        %v3751 = vpop.permute.xlu0 %3750
        %3752 = vrot.lane.b32.xlu0 %v3644, 64
        %v3753 = vpop.permute.xlu0 %3752
        %3754 = vrot.lane.b32.xlu0 %v3645, 64
        %v3755 = vpop.permute.xlu0 %3754
        %3756 = vrot.lane.b32.xlu0 %v3646, 64
        %v3757 = vpop.permute.xlu0 %3756
        %3758 = vrot.lane.b32.xlu0 %v3647, 64
        %v3759 = vpop.permute.xlu0 %3758
        %3760 = vrot.lane.b32.xlu0 %v3648, 64
        %v3761 = vpop.permute.xlu0 %3760
        %3762 = vrot.lane.b32.xlu0 %v3649, 64
        %v3763 = vpop.permute.xlu0 %3762
        %3764 = vrot.lane.b32.xlu0 %v3650, 64
        %v3765 = vpop.permute.xlu0 %3764
        %3766 = vrot.lane.b32.xlu0 %v3651, 64
        %v3767 = vpop.permute.xlu0 %3766
        %3768 = vrot.lane.b32.xlu0 %v3652, 64
        %v3769 = vpop.permute.xlu0 %3768
        %3770 = vrot.lane.b32.xlu0 %v3653, 64
        %v3771 = vpop.permute.xlu0 %3770
        %3772 = vrot.lane.b32.xlu0 %v3654, 64
        %v3773 = vpop.permute.xlu0 %3772
        %3774 = vrot.lane.b32.xlu0 %v3655, 64
        %v3775 = vpop.permute.xlu0 %3774
        %3776 = vrot.lane.b32.xlu0 %v3656, 64
        %v3777 = vpop.permute.xlu0 %3776
        %3778 = vrot.lane.b32.xlu0 %v3657, 64
        %v3779 = vpop.permute.xlu0 %3778
        %3780 = vrot.lane.b32.xlu0 %v3658, 64
        %v3781 = vpop.permute.xlu0 %3780
        %3782 = vrot.lane.b32.xlu0 %v3659, 64
        %v3783 = vpop.permute.xlu0 %3782
        %3784 = vrot.lane.b32.xlu0 %v3660, 64
        %v3785 = vpop.permute.xlu0 %3784
        %3786 = vrot.lane.b32.xlu0 %v3661, 64
        %v3787 = vpop.permute.xlu0 %3786
        %3788 = vrot.lane.b32.xlu0 %v3662, 64
        %v3789 = vpop.permute.xlu0 %3788
        %3790 = vrot.lane.b32.xlu0 %v3663, 64
        %v3791 = vpop.permute.xlu0 %3790
        %v3824 = vmul.f32 %v3729, %v1901
        %v3825 = vmul.f32 %v3731, %v1902
        %v3826 = vmul.f32 %v3733, %v1903
        %v3827 = vmul.f32 %v3735, %v1904
        %v3828 = vmul.f32 %v3737, %v1905
        %v3829 = vmul.f32 %v3739, %v1906
        %v3830 = vmul.f32 %v3741, %v1907
        %v3831 = vmul.f32 %v3743, %v1908
        %v3832 = vmul.f32 %v3745, %v1909
        %v3833 = vmul.f32 %v3747, %v1910
        %v3834 = vmul.f32 %v3749, %v1911
        %v3835 = vmul.f32 %v3751, %v1912
        %v3836 = vmul.f32 %v3753, %v1913
        %v3837 = vmul.f32 %v3755, %v1914
        %v3838 = vmul.f32 %v3757, %v1915
        %v3839 = vmul.f32 %v3759, %v1916
        %v3840 = vmul.f32 %v3761, %v1917
        %v3841 = vmul.f32 %v3763, %v1918
        %v3842 = vmul.f32 %v3765, %v1919
        %v3843 = vmul.f32 %v3767, %v1920
        %v3844 = vmul.f32 %v3769, %v1921
        %v3845 = vmul.f32 %v3771, %v1922
        %v3846 = vmul.f32 %v3773, %v1923
        %v3847 = vmul.f32 %v3775, %v1924
        %v3848 = vmul.f32 %v3777, %v1925
        %v3849 = vmul.f32 %v3779, %v1926
        %v3850 = vmul.f32 %v3781, %v1927
        %v3851 = vmul.f32 %v3783, %v1928
        %v3852 = vmul.f32 %v3785, %v1929
        %v3853 = vmul.f32 %v3787, %v1930
        %v3854 = vmul.f32 %v3789, %v1931
        %v3855 = vmul.f32 %v3791, %v1932
        %v3856 = vadd.f32 %v3664, %v3824
        %v3857 = vadd.f32 %v3665, %v3825
        %v3858 = vadd.f32 %v3666, %v3826
        %v3859 = vadd.f32 %v3667, %v3827
        %v3860 = vadd.f32 %v3668, %v3828
        %v3861 = vadd.f32 %v3669, %v3829
        %v3862 = vadd.f32 %v3670, %v3830
        %v3863 = vadd.f32 %v3671, %v3831
        %v3864 = vadd.f32 %v3672, %v3832
        %v3865 = vadd.f32 %v3673, %v3833
        %v3866 = vadd.f32 %v3674, %v3834
        %v3867 = vadd.f32 %v3675, %v3835
        %v3868 = vadd.f32 %v3676, %v3836
        %v3869 = vadd.f32 %v3677, %v3837
        %v3870 = vadd.f32 %v3678, %v3838
        %v3871 = vadd.f32 %v3679, %v3839
        %v3872 = vadd.f32 %v3680, %v3840
        %v3873 = vadd.f32 %v3681, %v3841
        %v3874 = vadd.f32 %v3682, %v3842
        %v3875 = vadd.f32 %v3683, %v3843
        %v3876 = vadd.f32 %v3684, %v3844
        %v3877 = vadd.f32 %v3685, %v3845
        %v3878 = vadd.f32 %v3686, %v3846
        %v3879 = vadd.f32 %v3687, %v3847
        %v3880 = vadd.f32 %v3688, %v3848
        %v3881 = vadd.f32 %v3689, %v3849
        %v3882 = vadd.f32 %v3690, %v3850
        %v3883 = vadd.f32 %v3691, %v3851
        %v3884 = vadd.f32 %v3692, %v3852
        %v3885 = vadd.f32 %v3693, %v3853
        %v3886 = vadd.f32 %v3694, %v3854
        %v3887 = vadd.f32 %v3695, %v3855
        %v3888 = vmul.f32 %v1520, %v1520
        %v3889 = vmul.f32 %v1524, %v1524
        %v3890 = vmul.f32 %v1530, %v1530
        %v3891 = vmul.f32 %v1534, %v1534
        %v3892 = vmul.f32 %v1540, %v1540
        %v3893 = vmul.f32 %v1544, %v1544
        %v3894 = vmul.f32 %v1550, %v1550
        %v3895 = vmul.f32 %v1554, %v1554
        %v3896 = vmul.f32 %v1560, %v1560
        %v3897 = vmul.f32 %v1564, %v1564
        %v3898 = vmul.f32 %v1570, %v1570
        %v3899 = vmul.f32 %v1574, %v1574
        %v3900 = vmul.f32 %v1580, %v1580
        %v3901 = vmul.f32 %v1584, %v1584
        %v3902 = vmul.f32 %v1590, %v1590
        %v3903 = vmul.f32 %v1594, %v1594
        %v3904 = vmul.f32 %v1600, %v1600
        %v3905 = vmul.f32 %v1604, %v1604
        %v3906 = vmul.f32 %v1610, %v1610
        %v3907 = vmul.f32 %v1614, %v1614
        %v3908 = vmul.f32 %v1620, %v1620
        %v3909 = vmul.f32 %v1624, %v1624
        %v3910 = vmul.f32 %v1630, %v1630
        %v3911 = vmul.f32 %v1634, %v1634
        %v3912 = vmul.f32 %v1640, %v1640
        %v3913 = vmul.f32 %v1644, %v1644
        %v3914 = vmul.f32 %v1650, %v1650
        %v3915 = vmul.f32 %v1654, %v1654
        %v3916 = vmul.f32 %v1660, %v1660
        %v3917 = vmul.f32 %v1664, %v1664
        %v3918 = vmul.f32 %v1670, %v1670
        %v3919 = vmul.f32 %v1674, %v1674
        %3920 = vadd.xlane.f32.xlu0 %v3888
        %v3921 = vpop.xlane.xlu0 %3920
        %3922 = vadd.xlane.f32.xlu0 %v3889
        %v3923 = vpop.xlane.xlu0 %3922
        %3924 = vadd.xlane.f32.xlu0 %v3890
        %v3925 = vpop.xlane.xlu0 %3924
        %3926 = vadd.xlane.f32.xlu0 %v3891
        %v3927 = vpop.xlane.xlu0 %3926
        %3928 = vadd.xlane.f32.xlu0 %v3892
        %v3929 = vpop.xlane.xlu0 %3928
        %3930 = vadd.xlane.f32.xlu0 %v3893
        %v3931 = vpop.xlane.xlu0 %3930
        %3932 = vadd.xlane.f32.xlu0 %v3894
        %v3933 = vpop.xlane.xlu0 %3932
        %3934 = vadd.xlane.f32.xlu0 %v3895
        %v3935 = vpop.xlane.xlu0 %3934
        %3936 = vadd.xlane.f32.xlu0 %v3896
        %v3937 = vpop.xlane.xlu0 %3936
        %3938 = vadd.xlane.f32.xlu0 %v3897
        %v3939 = vpop.xlane.xlu0 %3938
        %3940 = vadd.xlane.f32.xlu0 %v3898
        %v3941 = vpop.xlane.xlu0 %3940
        %3942 = vadd.xlane.f32.xlu0 %v3899
        %v3943 = vpop.xlane.xlu0 %3942
        %3944 = vadd.xlane.f32.xlu0 %v3900
        %v3945 = vpop.xlane.xlu0 %3944
        %3946 = vadd.xlane.f32.xlu0 %v3901
        %v3947 = vpop.xlane.xlu0 %3946
        %3948 = vadd.xlane.f32.xlu0 %v3902
        %v3949 = vpop.xlane.xlu0 %3948
        %3950 = vadd.xlane.f32.xlu0 %v3903
        %v3951 = vpop.xlane.xlu0 %3950
        %3952 = vadd.xlane.f32.xlu0 %v3904
        %v3953 = vpop.xlane.xlu0 %3952
        %3954 = vadd.xlane.f32.xlu0 %v3905
        %v3955 = vpop.xlane.xlu0 %3954
        %3956 = vadd.xlane.f32.xlu0 %v3906
        %v3957 = vpop.xlane.xlu0 %3956
        %3958 = vadd.xlane.f32.xlu0 %v3907
        %v3959 = vpop.xlane.xlu0 %3958
        %3960 = vadd.xlane.f32.xlu0 %v3908
        %v3961 = vpop.xlane.xlu0 %3960
        %3962 = vadd.xlane.f32.xlu0 %v3909
        %v3963 = vpop.xlane.xlu0 %3962
        %3964 = vadd.xlane.f32.xlu0 %v3910
        %v3965 = vpop.xlane.xlu0 %3964
        %3966 = vadd.xlane.f32.xlu0 %v3911
        %v3967 = vpop.xlane.xlu0 %3966
        %3968 = vadd.xlane.f32.xlu0 %v3912
        %v3969 = vpop.xlane.xlu0 %3968
        %3970 = vadd.xlane.f32.xlu0 %v3913
        %v3971 = vpop.xlane.xlu0 %3970
        %3972 = vadd.xlane.f32.xlu0 %v3914
        %v3973 = vpop.xlane.xlu0 %3972
        %3974 = vadd.xlane.f32.xlu0 %v3915
        %v3975 = vpop.xlane.xlu0 %3974
        %3976 = vadd.xlane.f32.xlu0 %v3916
        %v3977 = vpop.xlane.xlu0 %3976
        %3978 = vadd.xlane.f32.xlu0 %v3917
        %v3979 = vpop.xlane.xlu0 %3978
        %3980 = vadd.xlane.f32.xlu0 %v3918
        %v3981 = vpop.xlane.xlu0 %3980
        %3982 = vadd.xlane.f32.xlu0 %v3919
        %v3983 = vpop.xlane.xlu0 %3982
        %v3984 = vmul.f32 %v3921, %v857
        %v3985 = vmul.f32 %v3923, %v857
        %v3986 = vmul.f32 %v3925, %v857
        %v3987 = vmul.f32 %v3927, %v857
        %v3988 = vmul.f32 %v3929, %v857
        %v3989 = vmul.f32 %v3931, %v857
        %v3990 = vmul.f32 %v3933, %v857
        %v3991 = vmul.f32 %v3935, %v857
        %v3992 = vmul.f32 %v3937, %v857
        %v3993 = vmul.f32 %v3939, %v857
        %v3994 = vmul.f32 %v3941, %v857
        %v3995 = vmul.f32 %v3943, %v857
        %v3996 = vmul.f32 %v3945, %v857
        %v3997 = vmul.f32 %v3947, %v857
        %v3998 = vmul.f32 %v3949, %v857
        %v3999 = vmul.f32 %v3951, %v857
        %v4000 = vmul.f32 %v3953, %v857
        %v4001 = vmul.f32 %v3955, %v857
        %v4002 = vmul.f32 %v3957, %v857
        %v4003 = vmul.f32 %v3959, %v857
        %v4004 = vmul.f32 %v3961, %v857
        %v4005 = vmul.f32 %v3963, %v857
        %v4006 = vmul.f32 %v3965, %v857
        %v4007 = vmul.f32 %v3967, %v857
        %v4008 = vmul.f32 %v3969, %v857
        %v4009 = vmul.f32 %v3971, %v857
        %v4010 = vmul.f32 %v3973, %v857
        %v4011 = vmul.f32 %v3975, %v857
        %v4012 = vmul.f32 %v3977, %v857
        %v4013 = vmul.f32 %v3979, %v857
        %v4014 = vmul.f32 %v3981, %v857
        %v4015 = vmul.f32 %v3983, %v857
        %v4016 = vadd.f32 %v3984, 1.1920929e-07
        %v4017 = vadd.f32 %v3985, 1.1920929e-07
        %v4018 = vadd.f32 %v3986, 1.1920929e-07
        %v4019 = vadd.f32 %v3987, 1.1920929e-07
        %v4020 = vadd.f32 %v3988, 1.1920929e-07
        %v4021 = vadd.f32 %v3989, 1.1920929e-07
        %v4022 = vadd.f32 %v3990, 1.1920929e-07
        %v4023 = vadd.f32 %v3991, 1.1920929e-07
        %v4024 = vadd.f32 %v3992, 1.1920929e-07
        %v4025 = vadd.f32 %v3993, 1.1920929e-07
        %v4026 = vadd.f32 %v3994, 1.1920929e-07
        %v4027 = vadd.f32 %v3995, 1.1920929e-07
        %v4028 = vadd.f32 %v3996, 1.1920929e-07
        %v4029 = vadd.f32 %v3997, 1.1920929e-07
        %v4030 = vadd.f32 %v3998, 1.1920929e-07
        %v4031 = vadd.f32 %v3999, 1.1920929e-07
        %v4032 = vadd.f32 %v4000, 1.1920929e-07
        %v4033 = vadd.f32 %v4001, 1.1920929e-07
        %v4034 = vadd.f32 %v4002, 1.1920929e-07
        %v4035 = vadd.f32 %v4003, 1.1920929e-07
        %v4036 = vadd.f32 %v4004, 1.1920929e-07
        %v4037 = vadd.f32 %v4005, 1.1920929e-07
        %v4038 = vadd.f32 %v4006, 1.1920929e-07
        %v4039 = vadd.f32 %v4007, 1.1920929e-07
        %v4040 = vadd.f32 %v4008, 1.1920929e-07
        %v4041 = vadd.f32 %v4009, 1.1920929e-07
        %v4042 = vadd.f32 %v4010, 1.1920929e-07
        %v4043 = vadd.f32 %v4011, 1.1920929e-07
        %v4044 = vadd.f32 %v4012, 1.1920929e-07
        %v4045 = vadd.f32 %v4013, 1.1920929e-07
        %v4046 = vadd.f32 %v4014, 1.1920929e-07
        %v4047 = vadd.f32 %v4015, 1.1920929e-07
        %v4048 = vrsqrt.pop %v4016
        %v4049 = vrsqrt.pop %v4017
        %v4050 = vrsqrt.pop %v4018
        %v4051 = vrsqrt.pop %v4019
        %v4052 = vrsqrt.pop %v4020
        %v4053 = vrsqrt.pop %v4021
        %v4054 = vrsqrt.pop %v4022
        %v4055 = vrsqrt.pop %v4023
        %v4056 = vrsqrt.pop %v4024
        %v4057 = vrsqrt.pop %v4025
        %v4058 = vrsqrt.pop %v4026
        %v4059 = vrsqrt.pop %v4027
        %v4060 = vrsqrt.pop %v4028
        %v4061 = vrsqrt.pop %v4029
        %v4062 = vrsqrt.pop %v4030
        %v4063 = vrsqrt.pop %v4031
        %v4064 = vrsqrt.pop %v4032
        %v4065 = vrsqrt.pop %v4033
        %v4066 = vrsqrt.pop %v4034
        %v4067 = vrsqrt.pop %v4035
        %v4068 = vrsqrt.pop %v4036
        %v4069 = vrsqrt.pop %v4037
        %v4070 = vrsqrt.pop %v4038
        %v4071 = vrsqrt.pop %v4039
        %v4072 = vrsqrt.pop %v4040
        %v4073 = vrsqrt.pop %v4041
        %v4074 = vrsqrt.pop %v4042
        %v4075 = vrsqrt.pop %v4043
        %v4076 = vrsqrt.pop %v4044
        %v4077 = vrsqrt.pop %v4045
        %v4078 = vrsqrt.pop %v4046
        %v4079 = vrsqrt.pop %v4047
        %v4080 = vmul.f32 %v1520, %v4048
        %v4081 = vmul.f32 %v1524, %v4049
        %v4082 = vmul.f32 %v1530, %v4050
        %v4083 = vmul.f32 %v1534, %v4051
        %v4084 = vmul.f32 %v1540, %v4052
        %v4085 = vmul.f32 %v1544, %v4053
        %v4086 = vmul.f32 %v1550, %v4054
        %v4087 = vmul.f32 %v1554, %v4055
        %v4088 = vmul.f32 %v1560, %v4056
        %v4089 = vmul.f32 %v1564, %v4057
        %v4090 = vmul.f32 %v1570, %v4058
        %v4091 = vmul.f32 %v1574, %v4059
        %v4092 = vmul.f32 %v1580, %v4060
        %v4093 = vmul.f32 %v1584, %v4061
        %v4094 = vmul.f32 %v1590, %v4062
        %v4095 = vmul.f32 %v1594, %v4063
        %v4096 = vmul.f32 %v1600, %v4064
        %v4097 = vmul.f32 %v1604, %v4065
        %v4098 = vmul.f32 %v1610, %v4066
        %v4099 = vmul.f32 %v1614, %v4067
        %v4100 = vmul.f32 %v1620, %v4068
        %v4101 = vmul.f32 %v1624, %v4069
        %v4102 = vmul.f32 %v1630, %v4070
        %v4103 = vmul.f32 %v1634, %v4071
        %v4104 = vmul.f32 %v1640, %v4072
        %v4105 = vmul.f32 %v1644, %v4073
        %v4106 = vmul.f32 %v1650, %v4074
        %v4107 = vmul.f32 %v1654, %v4075
        %v4108 = vmul.f32 %v1660, %v4076
        %v4109 = vmul.f32 %v1664, %v4077
        %v4110 = vmul.f32 %v1670, %v4078
        %v4111 = vmul.f32 %v1674, %v4079
        %v4112 = vmul.f32 %v4080, %v1869
        %v4113 = vmul.f32 %v4081, %v1870
        %v4114 = vmul.f32 %v4082, %v1871
        %v4115 = vmul.f32 %v4083, %v1872
        %v4116 = vmul.f32 %v4084, %v1873
        %v4117 = vmul.f32 %v4085, %v1874
        %v4118 = vmul.f32 %v4086, %v1875
        %v4119 = vmul.f32 %v4087, %v1876
        %v4120 = vmul.f32 %v4088, %v1877
        %v4121 = vmul.f32 %v4089, %v1878
        %v4122 = vmul.f32 %v4090, %v1879
        %v4123 = vmul.f32 %v4091, %v1880
        %v4124 = vmul.f32 %v4092, %v1881
        %v4125 = vmul.f32 %v4093, %v1882
        %v4126 = vmul.f32 %v4094, %v1883
        %v4127 = vmul.f32 %v4095, %v1884
        %v4128 = vmul.f32 %v4096, %v1885
        %v4129 = vmul.f32 %v4097, %v1886
        %v4130 = vmul.f32 %v4098, %v1887
        %v4131 = vmul.f32 %v4099, %v1888
        %v4132 = vmul.f32 %v4100, %v1889
        %v4133 = vmul.f32 %v4101, %v1890
        %v4134 = vmul.f32 %v4102, %v1891
        %v4135 = vmul.f32 %v4103, %v1892
        %v4136 = vmul.f32 %v4104, %v1893
        %v4137 = vmul.f32 %v4105, %v1894
        %v4138 = vmul.f32 %v4106, %v1895
        %v4139 = vmul.f32 %v4107, %v1896
        %v4140 = vmul.f32 %v4108, %v1897
        %v4141 = vmul.f32 %v4109, %v1898
        %v4142 = vmul.f32 %v4110, %v1899
        %v4143 = vmul.f32 %v4111, %v1900
        %4176 = vrot.lane.b32.xlu0 %v4080, 64
        %v4177 = vpop.permute.xlu0 %4176
        %4178 = vrot.lane.b32.xlu0 %v4081, 64
        %v4179 = vpop.permute.xlu0 %4178
        %4180 = vrot.lane.b32.xlu0 %v4082, 64
        %v4181 = vpop.permute.xlu0 %4180
        %4182 = vrot.lane.b32.xlu0 %v4083, 64
        %v4183 = vpop.permute.xlu0 %4182
        %4184 = vrot.lane.b32.xlu0 %v4084, 64
        %v4185 = vpop.permute.xlu0 %4184
        %4186 = vrot.lane.b32.xlu0 %v4085, 64
        %v4187 = vpop.permute.xlu0 %4186
        %4188 = vrot.lane.b32.xlu0 %v4086, 64
        %v4189 = vpop.permute.xlu0 %4188
        %4190 = vrot.lane.b32.xlu0 %v4087, 64
        %v4191 = vpop.permute.xlu0 %4190
        %4192 = vrot.lane.b32.xlu0 %v4088, 64
        %v4193 = vpop.permute.xlu0 %4192
        %4194 = vrot.lane.b32.xlu0 %v4089, 64
        %v4195 = vpop.permute.xlu0 %4194
        %4196 = vrot.lane.b32.xlu0 %v4090, 64
        %v4197 = vpop.permute.xlu0 %4196
        %4198 = vrot.lane.b32.xlu0 %v4091, 64
        %v4199 = vpop.permute.xlu0 %4198
        %4200 = vrot.lane.b32.xlu0 %v4092, 64
        %v4201 = vpop.permute.xlu0 %4200
        %4202 = vrot.lane.b32.xlu0 %v4093, 64
        %v4203 = vpop.permute.xlu0 %4202
        %4204 = vrot.lane.b32.xlu0 %v4094, 64
        %v4205 = vpop.permute.xlu0 %4204
        %4206 = vrot.lane.b32.xlu0 %v4095, 64
        %v4207 = vpop.permute.xlu0 %4206
        %4208 = vrot.lane.b32.xlu0 %v4096, 64
        %v4209 = vpop.permute.xlu0 %4208
        %4210 = vrot.lane.b32.xlu0 %v4097, 64
        %v4211 = vpop.permute.xlu0 %4210
        %4212 = vrot.lane.b32.xlu0 %v4098, 64
        %v4213 = vpop.permute.xlu0 %4212
        %4214 = vrot.lane.b32.xlu0 %v4099, 64
        %v4215 = vpop.permute.xlu0 %4214
        %4216 = vrot.lane.b32.xlu0 %v4100, 64
        %v4217 = vpop.permute.xlu0 %4216
        %4218 = vrot.lane.b32.xlu0 %v4101, 64
        %v4219 = vpop.permute.xlu0 %4218
        %4220 = vrot.lane.b32.xlu0 %v4102, 64
        %v4221 = vpop.permute.xlu0 %4220
        %4222 = vrot.lane.b32.xlu0 %v4103, 64
        %v4223 = vpop.permute.xlu0 %4222
        %4224 = vrot.lane.b32.xlu0 %v4104, 64
        %v4225 = vpop.permute.xlu0 %4224
        %4226 = vrot.lane.b32.xlu0 %v4105, 64
        %v4227 = vpop.permute.xlu0 %4226
        %4228 = vrot.lane.b32.xlu0 %v4106, 64
        %v4229 = vpop.permute.xlu0 %4228
        %4230 = vrot.lane.b32.xlu0 %v4107, 64
        %v4231 = vpop.permute.xlu0 %4230
        %4232 = vrot.lane.b32.xlu0 %v4108, 64
        %v4233 = vpop.permute.xlu0 %4232
        %4234 = vrot.lane.b32.xlu0 %v4109, 64
        %v4235 = vpop.permute.xlu0 %4234
        %4236 = vrot.lane.b32.xlu0 %v4110, 64
        %v4237 = vpop.permute.xlu0 %4236
        %4238 = vrot.lane.b32.xlu0 %v4111, 64
        %v4239 = vpop.permute.xlu0 %4238
        %v4272 = vmul.f32 %v4177, %v1901
        %v4273 = vmul.f32 %v4179, %v1902
        %v4274 = vmul.f32 %v4181, %v1903
        %v4275 = vmul.f32 %v4183, %v1904
        %v4276 = vmul.f32 %v4185, %v1905
        %v4277 = vmul.f32 %v4187, %v1906
        %v4278 = vmul.f32 %v4189, %v1907
        %v4279 = vmul.f32 %v4191, %v1908
        %v4280 = vmul.f32 %v4193, %v1909
        %v4281 = vmul.f32 %v4195, %v1910
        %v4282 = vmul.f32 %v4197, %v1911
        %v4283 = vmul.f32 %v4199, %v1912
        %v4284 = vmul.f32 %v4201, %v1913
        %v4285 = vmul.f32 %v4203, %v1914
        %v4286 = vmul.f32 %v4205, %v1915
        %v4287 = vmul.f32 %v4207, %v1916
        %v4288 = vmul.f32 %v4209, %v1917
        %v4289 = vmul.f32 %v4211, %v1918
        %v4290 = vmul.f32 %v4213, %v1919
        %v4291 = vmul.f32 %v4215, %v1920
        %v4292 = vmul.f32 %v4217, %v1921
        %v4293 = vmul.f32 %v4219, %v1922
        %v4294 = vmul.f32 %v4221, %v1923
        %v4295 = vmul.f32 %v4223, %v1924
        %v4296 = vmul.f32 %v4225, %v1925
        %v4297 = vmul.f32 %v4227, %v1926
        %v4298 = vmul.f32 %v4229, %v1927
        %v4299 = vmul.f32 %v4231, %v1928
        %v4300 = vmul.f32 %v4233, %v1929
        %v4301 = vmul.f32 %v4235, %v1930
        %v4302 = vmul.f32 %v4237, %v1931
        %v4303 = vmul.f32 %v4239, %v1932
        %v4304 = vadd.f32 %v4112, %v4272
        %v4305 = vadd.f32 %v4113, %v4273
        %v4306 = vadd.f32 %v4114, %v4274
        %v4307 = vadd.f32 %v4115, %v4275
        %v4308 = vadd.f32 %v4116, %v4276
        %v4309 = vadd.f32 %v4117, %v4277
        %v4310 = vadd.f32 %v4118, %v4278
        %v4311 = vadd.f32 %v4119, %v4279
        %v4312 = vadd.f32 %v4120, %v4280
        %v4313 = vadd.f32 %v4121, %v4281
        %v4314 = vadd.f32 %v4122, %v4282
        %v4315 = vadd.f32 %v4123, %v4283
        %v4316 = vadd.f32 %v4124, %v4284
        %v4317 = vadd.f32 %v4125, %v4285
        %v4318 = vadd.f32 %v4126, %v4286
        %v4319 = vadd.f32 %v4127, %v4287
        %v4320 = vadd.f32 %v4128, %v4288
        %v4321 = vadd.f32 %v4129, %v4289
        %v4322 = vadd.f32 %v4130, %v4290
        %v4323 = vadd.f32 %v4131, %v4291
        %v4324 = vadd.f32 %v4132, %v4292
        %v4325 = vadd.f32 %v4133, %v4293
        %v4326 = vadd.f32 %v4134, %v4294
        %v4327 = vadd.f32 %v4135, %v4295
        %v4328 = vadd.f32 %v4136, %v4296
        %v4329 = vadd.f32 %v4137, %v4297
        %v4330 = vadd.f32 %v4138, %v4298
        %v4331 = vadd.f32 %v4139, %v4299
        %v4332 = vadd.f32 %v4140, %v4300
        %v4333 = vadd.f32 %v4141, %v4301
        %v4334 = vadd.f32 %v4142, %v4302
        %v4335 = vadd.f32 %v4143, %v4303
        %v4336 = vpack.c.bf16 %v3857, %v3856
        %v4337 = vpack.c.bf16 %v3859, %v3858
        %v4338 = vpack.c.bf16 %v3861, %v3860
        %v4339 = vpack.c.bf16 %v3863, %v3862
        %v4340 = vpack.c.bf16 %v3865, %v3864
        %v4341 = vpack.c.bf16 %v3867, %v3866
        %v4342 = vpack.c.bf16 %v3869, %v3868
        %v4343 = vpack.c.bf16 %v3871, %v3870
        %v4344 = vpack.c.bf16 %v3873, %v3872
        %v4345 = vpack.c.bf16 %v3875, %v3874
        %v4346 = vpack.c.bf16 %v3877, %v3876
        %v4347 = vpack.c.bf16 %v3879, %v3878
        %v4348 = vpack.c.bf16 %v3881, %v3880
        %v4349 = vpack.c.bf16 %v3883, %v3882
        %v4350 = vpack.c.bf16 %v3885, %v3884
        %v4351 = vpack.c.bf16 %v3887, %v3886
        %v4368 = vunpack.c.l.b16 %v4336
        %v4369 = vunpack.c.h.b16 %v4336
        %v4370 = vunpack.c.l.b16 %v4337
        %v4371 = vunpack.c.h.b16 %v4337
        %v4372 = vunpack.c.l.b16 %v4338
        %v4373 = vunpack.c.h.b16 %v4338
        %v4374 = vunpack.c.l.b16 %v4339
        %v4375 = vunpack.c.h.b16 %v4339
        %v4376 = vunpack.c.l.b16 %v4340
        %v4377 = vunpack.c.h.b16 %v4340
        %v4378 = vunpack.c.l.b16 %v4341
        %v4379 = vunpack.c.h.b16 %v4341
        %v4380 = vunpack.c.l.b16 %v4342
        %v4381 = vunpack.c.h.b16 %v4342
        %v4382 = vunpack.c.l.b16 %v4343
        %v4383 = vunpack.c.h.b16 %v4343
        %v4384 = vunpack.c.l.b16 %v4344
        %v4385 = vunpack.c.h.b16 %v4344
        %v4386 = vunpack.c.l.b16 %v4345
        %v4387 = vunpack.c.h.b16 %v4345
        %v4388 = vunpack.c.l.b16 %v4346
        %v4389 = vunpack.c.h.b16 %v4346
        %v4390 = vunpack.c.l.b16 %v4347
        %v4391 = vunpack.c.h.b16 %v4347
        %v4392 = vunpack.c.l.b16 %v4348
        %v4393 = vunpack.c.h.b16 %v4348
        %v4394 = vunpack.c.l.b16 %v4349
        %v4395 = vunpack.c.h.b16 %v4349
        %v4396 = vunpack.c.l.b16 %v4350
        %v4397 = vunpack.c.h.b16 %v4350
        %v4398 = vunpack.c.l.b16 %v4351
        %v4399 = vunpack.c.h.b16 %v4351
        %v4400 = vpack.c.b16 %v4368, %v4368
        %v4401 = vpack.c.b16 %v4369, %v4369
        %v4402 = vpack.c.b16 %v4370, %v4370
        %v4403 = vpack.c.b16 %v4371, %v4371
        %v4404 = vpack.c.b16 %v4372, %v4372
        %v4405 = vpack.c.b16 %v4373, %v4373
        %v4406 = vpack.c.b16 %v4374, %v4374
        %v4407 = vpack.c.b16 %v4375, %v4375
        %v4408 = vpack.c.b16 %v4376, %v4376
        %v4409 = vpack.c.b16 %v4377, %v4377
        %v4410 = vpack.c.b16 %v4378, %v4378
        %v4411 = vpack.c.b16 %v4379, %v4379
        %v4412 = vpack.c.b16 %v4380, %v4380
        %v4413 = vpack.c.b16 %v4381, %v4381
        %v4414 = vpack.c.b16 %v4382, %v4382
        %v4415 = vpack.c.b16 %v4383, %v4383
        %v4416 = vpack.c.b16 %v4384, %v4384
        %v4417 = vpack.c.b16 %v4385, %v4385
        %v4418 = vpack.c.b16 %v4386, %v4386
        %v4419 = vpack.c.b16 %v4387, %v4387
        %v4420 = vpack.c.b16 %v4388, %v4388
        %v4421 = vpack.c.b16 %v4389, %v4389
        %v4422 = vpack.c.b16 %v4390, %v4390
        %v4423 = vpack.c.b16 %v4391, %v4391
        %v4424 = vpack.c.b16 %v4392, %v4392
        %v4425 = vpack.c.b16 %v4393, %v4393
        %v4426 = vpack.c.b16 %v4394, %v4394
        %v4427 = vpack.c.b16 %v4395, %v4395
        %v4428 = vpack.c.b16 %v4396, %v4396
        %v4429 = vpack.c.b16 %v4397, %v4397
        %v4430 = vpack.c.b16 %v4398, %v4398
        %v4431 = vpack.c.b16 %v4399, %v4399
        %s4464 = scalar_lea.vmem %s539, 128 [#allocation16]
        %4465 = vst [vmem:[%s4464] sm:$0xf] %v4400
        %4466 = vst [vmem:[%s4464 + $0x4] sm:$0xf] %v4401
        %4467 = vst [vmem:[%s4464 + $0x8] sm:$0xf] %v4402
        %4468 = vst [vmem:[%s4464 + $0xc] sm:$0xf] %v4403
        %4469 = vst [vmem:[%s4464 + $0x10] sm:$0xf] %v4404
        %4470 = vst [vmem:[%s4464 + $0x14] sm:$0xf] %v4405
        %4471 = vst [vmem:[%s4464 + $0x18] sm:$0xf] %v4406
        %4472 = vst [vmem:[%s4464 + $0x1c] sm:$0xf] %v4407
        %4473 = vst [vmem:[%s4464 + $0x20] sm:$0xf] %v4408
        %4474 = vst [vmem:[%s4464 + $0x24] sm:$0xf] %v4409
        %4475 = vst [vmem:[%s4464 + $0x28] sm:$0xf] %v4410
        %4476 = vst [vmem:[%s4464 + $0x2c] sm:$0xf] %v4411
        %4477 = vst [vmem:[%s4464 + $0x30] sm:$0xf] %v4412
        %4478 = vst [vmem:[%s4464 + $0x34] sm:$0xf] %v4413
        %4479 = vst [vmem:[%s4464 + $0x38] sm:$0xf] %v4414
        %4480 = vst [vmem:[%s4464 + $0x3c] sm:$0xf] %v4415
        %4481 = vst [vmem:[%s4464 + $0x40] sm:$0xf] %v4416
        %4482 = vst [vmem:[%s4464 + $0x44] sm:$0xf] %v4417
        %4483 = vst [vmem:[%s4464 + $0x48] sm:$0xf] %v4418
        %4484 = vst [vmem:[%s4464 + $0x4c] sm:$0xf] %v4419
        %4485 = vst [vmem:[%s4464 + $0x50] sm:$0xf] %v4420
        %4486 = vst [vmem:[%s4464 + $0x54] sm:$0xf] %v4421
        %4487 = vst [vmem:[%s4464 + $0x58] sm:$0xf] %v4422
        %4488 = vst [vmem:[%s4464 + $0x5c] sm:$0xf] %v4423
        %4489 = vst [vmem:[%s4464 + $0x60] sm:$0xf] %v4424
        %4490 = vst [vmem:[%s4464 + $0x64] sm:$0xf] %v4425
        %4491 = vst [vmem:[%s4464 + $0x68] sm:$0xf] %v4426
        %4492 = vst [vmem:[%s4464 + $0x6c] sm:$0xf] %v4427
        %4493 = vst [vmem:[%s4464 + $0x70] sm:$0xf] %v4428
        %4494 = vst [vmem:[%s4464 + $0x74] sm:$0xf] %v4429
        %4495 = vst [vmem:[%s4464 + $0x78] sm:$0xf] %v4430
        %4496 = vst [vmem:[%s4464 + $0x7c] sm:$0xf] %v4431
        %v4497 = vpack.c.bf16 %v4305, %v4304
        %v4498 = vpack.c.bf16 %v4307, %v4306
        %v4499 = vpack.c.bf16 %v4309, %v4308
        %v4500 = vpack.c.bf16 %v4311, %v4310
        %v4501 = vpack.c.bf16 %v4313, %v4312
        %v4502 = vpack.c.bf16 %v4315, %v4314
        %v4503 = vpack.c.bf16 %v4317, %v4316
        %v4504 = vpack.c.bf16 %v4319, %v4318
        %v4505 = vpack.c.bf16 %v4321, %v4320
        %v4506 = vpack.c.bf16 %v4323, %v4322
        %v4507 = vpack.c.bf16 %v4325, %v4324
        %v4508 = vpack.c.bf16 %v4327, %v4326
        %v4509 = vpack.c.bf16 %v4329, %v4328
        %v4510 = vpack.c.bf16 %v4331, %v4330
        %v4511 = vpack.c.bf16 %v4333, %v4332
        %v4512 = vpack.c.bf16 %v4335, %v4334
        %v4529 = vunpack.c.l.b16 %v4497
        %v4530 = vunpack.c.h.b16 %v4497
        %v4531 = vunpack.c.l.b16 %v4498
        %v4532 = vunpack.c.h.b16 %v4498
        %v4533 = vunpack.c.l.b16 %v4499
        %v4534 = vunpack.c.h.b16 %v4499
        %v4535 = vunpack.c.l.b16 %v4500
        %v4536 = vunpack.c.h.b16 %v4500
        %v4537 = vunpack.c.l.b16 %v4501
        %v4538 = vunpack.c.h.b16 %v4501
        %v4539 = vunpack.c.l.b16 %v4502
        %v4540 = vunpack.c.h.b16 %v4502
        %v4541 = vunpack.c.l.b16 %v4503
        %v4542 = vunpack.c.h.b16 %v4503
        %v4543 = vunpack.c.l.b16 %v4504
        %v4544 = vunpack.c.h.b16 %v4504
        %v4545 = vunpack.c.l.b16 %v4505
        %v4546 = vunpack.c.h.b16 %v4505
        %v4547 = vunpack.c.l.b16 %v4506
        %v4548 = vunpack.c.h.b16 %v4506
        %v4549 = vunpack.c.l.b16 %v4507
        %v4550 = vunpack.c.h.b16 %v4507
        %v4551 = vunpack.c.l.b16 %v4508
        %v4552 = vunpack.c.h.b16 %v4508
        %v4553 = vunpack.c.l.b16 %v4509
        %v4554 = vunpack.c.h.b16 %v4509
        %v4555 = vunpack.c.l.b16 %v4510
        %v4556 = vunpack.c.h.b16 %v4510
        %v4557 = vunpack.c.l.b16 %v4511
        %v4558 = vunpack.c.h.b16 %v4511
        %v4559 = vunpack.c.l.b16 %v4512
        %v4560 = vunpack.c.h.b16 %v4512
        %v4561 = vpack.c.b16 %v4529, %v4529
        %v4562 = vpack.c.b16 %v4530, %v4530
        %v4563 = vpack.c.b16 %v4531, %v4531
        %v4564 = vpack.c.b16 %v4532, %v4532
        %v4565 = vpack.c.b16 %v4533, %v4533
        %v4566 = vpack.c.b16 %v4534, %v4534
        %v4567 = vpack.c.b16 %v4535, %v4535
        %v4568 = vpack.c.b16 %v4536, %v4536
        %v4569 = vpack.c.b16 %v4537, %v4537
        %v4570 = vpack.c.b16 %v4538, %v4538
        %v4571 = vpack.c.b16 %v4539, %v4539
        %v4572 = vpack.c.b16 %v4540, %v4540
        %v4573 = vpack.c.b16 %v4541, %v4541
        %v4574 = vpack.c.b16 %v4542, %v4542
        %v4575 = vpack.c.b16 %v4543, %v4543
        %v4576 = vpack.c.b16 %v4544, %v4544
        %v4577 = vpack.c.b16 %v4545, %v4545
        %v4578 = vpack.c.b16 %v4546, %v4546
        %v4579 = vpack.c.b16 %v4547, %v4547
        %v4580 = vpack.c.b16 %v4548, %v4548
        %v4581 = vpack.c.b16 %v4549, %v4549
        %v4582 = vpack.c.b16 %v4550, %v4550
        %v4583 = vpack.c.b16 %v4551, %v4551
        %v4584 = vpack.c.b16 %v4552, %v4552
        %v4585 = vpack.c.b16 %v4553, %v4553
        %v4586 = vpack.c.b16 %v4554, %v4554
        %v4587 = vpack.c.b16 %v4555, %v4555
        %v4588 = vpack.c.b16 %v4556, %v4556
        %v4589 = vpack.c.b16 %v4557, %v4557
        %v4590 = vpack.c.b16 %v4558, %v4558
        %v4591 = vpack.c.b16 %v4559, %v4559
        %v4592 = vpack.c.b16 %v4560, %v4560
        %s4625 = scalar_lea.vmem %s546, 128 [#allocation18]
        %4626 = vst [vmem:[%s4625] sm:$0xf] %v4561
        %4627 = vst [vmem:[%s4625 + $0x4] sm:$0xf] %v4562
        %4628 = vst [vmem:[%s4625 + $0x8] sm:$0xf] %v4563
        %4629 = vst [vmem:[%s4625 + $0xc] sm:$0xf] %v4564
        %4630 = vst [vmem:[%s4625 + $0x10] sm:$0xf] %v4565
        %4631 = vst [vmem:[%s4625 + $0x14] sm:$0xf] %v4566
        %4632 = vst [vmem:[%s4625 + $0x18] sm:$0xf] %v4567
        %4633 = vst [vmem:[%s4625 + $0x1c] sm:$0xf] %v4568
        %4634 = vst [vmem:[%s4625 + $0x20] sm:$0xf] %v4569
        %4635 = vst [vmem:[%s4625 + $0x24] sm:$0xf] %v4570
        %4636 = vst [vmem:[%s4625 + $0x28] sm:$0xf] %v4571
        %4637 = vst [vmem:[%s4625 + $0x2c] sm:$0xf] %v4572
        %4638 = vst [vmem:[%s4625 + $0x30] sm:$0xf] %v4573
        %4639 = vst [vmem:[%s4625 + $0x34] sm:$0xf] %v4574
        %4640 = vst [vmem:[%s4625 + $0x38] sm:$0xf] %v4575
        %4641 = vst [vmem:[%s4625 + $0x3c] sm:$0xf] %v4576
        %4642 = vst [vmem:[%s4625 + $0x40] sm:$0xf] %v4577
        %4643 = vst [vmem:[%s4625 + $0x44] sm:$0xf] %v4578
        %4644 = vst [vmem:[%s4625 + $0x48] sm:$0xf] %v4579
        %4645 = vst [vmem:[%s4625 + $0x4c] sm:$0xf] %v4580
        %4646 = vst [vmem:[%s4625 + $0x50] sm:$0xf] %v4581
        %4647 = vst [vmem:[%s4625 + $0x54] sm:$0xf] %v4582
        %4648 = vst [vmem:[%s4625 + $0x58] sm:$0xf] %v4583
        %4649 = vst [vmem:[%s4625 + $0x5c] sm:$0xf] %v4584
        %4650 = vst [vmem:[%s4625 + $0x60] sm:$0xf] %v4585
        %4651 = vst [vmem:[%s4625 + $0x64] sm:$0xf] %v4586
        %4652 = vst [vmem:[%s4625 + $0x68] sm:$0xf] %v4587
        %4653 = vst [vmem:[%s4625 + $0x6c] sm:$0xf] %v4588
        %4654 = vst [vmem:[%s4625 + $0x70] sm:$0xf] %v4589
        %4655 = vst [vmem:[%s4625 + $0x74] sm:$0xf] %v4590
        %4656 = vst [vmem:[%s4625 + $0x78] sm:$0xf] %v4591
        %4657 = vst [vmem:[%s4625 + $0x7c] sm:$0xf] %v4592
        %v4658 = vmul.f32 %v3150, %v1713
        %v4659 = vmul.f32 %v3150, %v1717
        %v4660 = vmul.f32 %v3150, %v1723
        %v4661 = vmul.f32 %v3150, %v1727
        %v4662 = vmul.f32 %v3150, %v1733
        %v4663 = vmul.f32 %v3150, %v1737
        %v4664 = vmul.f32 %v3150, %v1743
        %v4665 = vmul.f32 %v3150, %v1747
        %v4666 = vmul.f32 %v3150, %v1753
        %v4667 = vmul.f32 %v3150, %v1757
        %v4668 = vmul.f32 %v3150, %v1763
        %v4669 = vmul.f32 %v3150, %v1767
        %v4670 = vmul.f32 %v3150, %v1773
        %v4671 = vmul.f32 %v3150, %v1777
        %v4672 = vmul.f32 %v3150, %v1783
        %v4673 = vmul.f32 %v3150, %v1787
        %v4674 = vmul.f32 %v3150, %v1793
        %v4675 = vmul.f32 %v3150, %v1797
        %v4676 = vmul.f32 %v3150, %v1803
        %v4677 = vmul.f32 %v3150, %v1807
        %v4678 = vmul.f32 %v3150, %v1813
        %v4679 = vmul.f32 %v3150, %v1817
        %v4680 = vmul.f32 %v3150, %v1823
        %v4681 = vmul.f32 %v3150, %v1827
        %v4682 = vmul.f32 %v3150, %v1833
        %v4683 = vmul.f32 %v3150, %v1837
        %v4684 = vmul.f32 %v3150, %v1843
        %v4685 = vmul.f32 %v3150, %v1847
        %v4686 = vmul.f32 %v3150, %v1853
        %v4687 = vmul.f32 %v3150, %v1857
        %v4688 = vmul.f32 %v3150, %v1863
        %v4689 = vmul.f32 %v3150, %v1867
        %v4690 = vld [vmem:[%s462 + $0x8] sm:$0xff]
        %v4691 = vld [vmem:[%s462 + $0x18] sm:$0xff]
        %v4692 = vld [vmem:[%s462 + $0x28] sm:$0xff]
        %v4693 = vld [vmem:[%s462 + $0x38] sm:$0xff]
        %v4694 = vld [vmem:[%s462 + $0x48] sm:$0xff]
        %v4695 = vld [vmem:[%s462 + $0x58] sm:$0xff]
        %v4696 = vld [vmem:[%s462 + $0x68] sm:$0xff]
        %v4697 = vld [vmem:[%s462 + $0x78] sm:$0xff]
        %v4698 = vld [vmem:[%s462 + $0x88] sm:$0xff]
        %v4699 = vld [vmem:[%s462 + $0x98] sm:$0xff]
        %v4700 = vld [vmem:[%s462 + $0xa8] sm:$0xff]
        %v4701 = vld [vmem:[%s462 + $0xb8] sm:$0xff]
        %v4702 = vld [vmem:[%s462 + $0xc8] sm:$0xff]
        %v4703 = vld [vmem:[%s462 + $0xd8] sm:$0xff]
        %v4704 = vld [vmem:[%s462 + $0xe8] sm:$0xff]
        %v4705 = vld [vmem:[%s462 + $0xf8] sm:$0xff]
        %v4706 = vld [vmem:[%s462 + $0x108] sm:$0xff]
        %v4707 = vld [vmem:[%s462 + $0x118] sm:$0xff]
        %v4708 = vld [vmem:[%s462 + $0x128] sm:$0xff]
        %v4709 = vld [vmem:[%s462 + $0x138] sm:$0xff]
        %v4710 = vld [vmem:[%s462 + $0x148] sm:$0xff]
        %v4711 = vld [vmem:[%s462 + $0x158] sm:$0xff]
        %v4712 = vld [vmem:[%s462 + $0x168] sm:$0xff]
        %v4713 = vld [vmem:[%s462 + $0x178] sm:$0xff]
        %v4714 = vld [vmem:[%s462 + $0x188] sm:$0xff]
        %v4715 = vld [vmem:[%s462 + $0x198] sm:$0xff]
        %v4716 = vld [vmem:[%s462 + $0x1a8] sm:$0xff]
        %v4717 = vld [vmem:[%s462 + $0x1b8] sm:$0xff]
        %v4718 = vld [vmem:[%s462 + $0x1c8] sm:$0xff]
        %v4719 = vld [vmem:[%s462 + $0x1d8] sm:$0xff]
        %v4720 = vld [vmem:[%s462 + $0x1e8] sm:$0xff]
        %v4721 = vld [vmem:[%s462 + $0x1f8] sm:$0xff]
        %v4722 = vmul.f32 %v3215, %v4690
        %v4723 = vmul.f32 %v3215, %v4691
        %v4724 = vmul.f32 %v3215, %v4692
        %v4725 = vmul.f32 %v3215, %v4693
        %v4726 = vmul.f32 %v3215, %v4694
        %v4727 = vmul.f32 %v3215, %v4695
        %v4728 = vmul.f32 %v3215, %v4696
        %v4729 = vmul.f32 %v3215, %v4697
        %v4730 = vmul.f32 %v3215, %v4698
        %v4731 = vmul.f32 %v3215, %v4699
        %v4732 = vmul.f32 %v3215, %v4700
        %v4733 = vmul.f32 %v3215, %v4701
        %v4734 = vmul.f32 %v3215, %v4702
        %v4735 = vmul.f32 %v3215, %v4703
        %v4736 = vmul.f32 %v3215, %v4704
        %v4737 = vmul.f32 %v3215, %v4705
        %v4738 = vmul.f32 %v3215, %v4706
        %v4739 = vmul.f32 %v3215, %v4707
        %v4740 = vmul.f32 %v3215, %v4708
        %v4741 = vmul.f32 %v3215, %v4709
        %v4742 = vmul.f32 %v3215, %v4710
        %v4743 = vmul.f32 %v3215, %v4711
        %v4744 = vmul.f32 %v3215, %v4712
        %v4745 = vmul.f32 %v3215, %v4713
        %v4746 = vmul.f32 %v3215, %v4714
        %v4747 = vmul.f32 %v3215, %v4715
        %v4748 = vmul.f32 %v3215, %v4716
        %v4749 = vmul.f32 %v3215, %v4717
        %v4750 = vmul.f32 %v3215, %v4718
        %v4751 = vmul.f32 %v3215, %v4719
        %v4752 = vmul.f32 %v3215, %v4720
        %v4753 = vmul.f32 %v3215, %v4721
        %v4754 = vadd.f32 %v4658, %v4722
        %v4755 = vadd.f32 %v4659, %v4723
        %v4756 = vadd.f32 %v4660, %v4724
        %v4757 = vadd.f32 %v4661, %v4725
        %v4758 = vadd.f32 %v4662, %v4726
        %v4759 = vadd.f32 %v4663, %v4727
        %v4760 = vadd.f32 %v4664, %v4728
        %v4761 = vadd.f32 %v4665, %v4729
        %v4762 = vadd.f32 %v4666, %v4730
        %v4763 = vadd.f32 %v4667, %v4731
        %v4764 = vadd.f32 %v4668, %v4732
        %v4765 = vadd.f32 %v4669, %v4733
        %v4766 = vadd.f32 %v4670, %v4734
        %v4767 = vadd.f32 %v4671, %v4735
        %v4768 = vadd.f32 %v4672, %v4736
        %v4769 = vadd.f32 %v4673, %v4737
        %v4770 = vadd.f32 %v4674, %v4738
        %v4771 = vadd.f32 %v4675, %v4739
        %v4772 = vadd.f32 %v4676, %v4740
        %v4773 = vadd.f32 %v4677, %v4741
        %v4774 = vadd.f32 %v4678, %v4742
        %v4775 = vadd.f32 %v4679, %v4743
        %v4776 = vadd.f32 %v4680, %v4744
        %v4777 = vadd.f32 %v4681, %v4745
        %v4778 = vadd.f32 %v4682, %v4746
        %v4779 = vadd.f32 %v4683, %v4747
        %v4780 = vadd.f32 %v4684, %v4748
        %v4781 = vadd.f32 %v4685, %v4749
        %v4782 = vadd.f32 %v4686, %v4750
        %v4783 = vadd.f32 %v4687, %v4751
        %v4784 = vadd.f32 %v4688, %v4752
        %v4785 = vadd.f32 %v4689, %v4753
        %v4786 = vpack.c.bf16 %v4755, %v4754
        %v4787 = vpack.c.bf16 %v4757, %v4756
        %v4788 = vpack.c.bf16 %v4759, %v4758
        %v4789 = vpack.c.bf16 %v4761, %v4760
        %v4790 = vpack.c.bf16 %v4763, %v4762
        %v4791 = vpack.c.bf16 %v4765, %v4764
        %v4792 = vpack.c.bf16 %v4767, %v4766
        %v4793 = vpack.c.bf16 %v4769, %v4768
        %v4794 = vpack.c.bf16 %v4771, %v4770
        %v4795 = vpack.c.bf16 %v4773, %v4772
        %v4796 = vpack.c.bf16 %v4775, %v4774
        %v4797 = vpack.c.bf16 %v4777, %v4776
        %v4798 = vpack.c.bf16 %v4779, %v4778
        %v4799 = vpack.c.bf16 %v4781, %v4780
        %v4800 = vpack.c.bf16 %v4783, %v4782
        %v4801 = vpack.c.bf16 %v4785, %v4784
        %v4818 = vunpack.c.l.b16 %v4786
        %v4819 = vunpack.c.h.b16 %v4786
        %v4820 = vunpack.c.l.b16 %v4787
        %v4821 = vunpack.c.h.b16 %v4787
        %v4822 = vunpack.c.l.b16 %v4788
        %v4823 = vunpack.c.h.b16 %v4788
        %v4824 = vunpack.c.l.b16 %v4789
        %v4825 = vunpack.c.h.b16 %v4789
        %v4826 = vunpack.c.l.b16 %v4790
        %v4827 = vunpack.c.h.b16 %v4790
        %v4828 = vunpack.c.l.b16 %v4791
        %v4829 = vunpack.c.h.b16 %v4791
        %v4830 = vunpack.c.l.b16 %v4792
        %v4831 = vunpack.c.h.b16 %v4792
        %v4832 = vunpack.c.l.b16 %v4793
        %v4833 = vunpack.c.h.b16 %v4793
        %v4834 = vunpack.c.l.b16 %v4794
        %v4835 = vunpack.c.h.b16 %v4794
        %v4836 = vunpack.c.l.b16 %v4795
        %v4837 = vunpack.c.h.b16 %v4795
        %v4838 = vunpack.c.l.b16 %v4796
        %v4839 = vunpack.c.h.b16 %v4796
        %v4840 = vunpack.c.l.b16 %v4797
        %v4841 = vunpack.c.h.b16 %v4797
        %v4842 = vunpack.c.l.b16 %v4798
        %v4843 = vunpack.c.h.b16 %v4798
        %v4844 = vunpack.c.l.b16 %v4799
        %v4845 = vunpack.c.h.b16 %v4799
        %v4846 = vunpack.c.l.b16 %v4800
        %v4847 = vunpack.c.h.b16 %v4800
        %v4848 = vunpack.c.l.b16 %v4801
        %v4849 = vunpack.c.h.b16 %v4801
        %v4850 = vpack.c.b16 %v4818, %v4818
        %v4851 = vpack.c.b16 %v4819, %v4819
        %v4852 = vpack.c.b16 %v4820, %v4820
        %v4853 = vpack.c.b16 %v4821, %v4821
        %v4854 = vpack.c.b16 %v4822, %v4822
        %v4855 = vpack.c.b16 %v4823, %v4823
        %v4856 = vpack.c.b16 %v4824, %v4824
        %v4857 = vpack.c.b16 %v4825, %v4825
        %v4858 = vpack.c.b16 %v4826, %v4826
        %v4859 = vpack.c.b16 %v4827, %v4827
        %v4860 = vpack.c.b16 %v4828, %v4828
        %v4861 = vpack.c.b16 %v4829, %v4829
        %v4862 = vpack.c.b16 %v4830, %v4830
        %v4863 = vpack.c.b16 %v4831, %v4831
        %v4864 = vpack.c.b16 %v4832, %v4832
        %v4865 = vpack.c.b16 %v4833, %v4833
        %v4866 = vpack.c.b16 %v4834, %v4834
        %v4867 = vpack.c.b16 %v4835, %v4835
        %v4868 = vpack.c.b16 %v4836, %v4836
        %v4869 = vpack.c.b16 %v4837, %v4837
        %v4870 = vpack.c.b16 %v4838, %v4838
        %v4871 = vpack.c.b16 %v4839, %v4839
        %v4872 = vpack.c.b16 %v4840, %v4840
        %v4873 = vpack.c.b16 %v4841, %v4841
        %v4874 = vpack.c.b16 %v4842, %v4842
        %v4875 = vpack.c.b16 %v4843, %v4843
        %v4876 = vpack.c.b16 %v4844, %v4844
        %v4877 = vpack.c.b16 %v4845, %v4845
        %v4878 = vpack.c.b16 %v4846, %v4846
        %v4879 = vpack.c.b16 %v4847, %v4847
        %v4880 = vpack.c.b16 %v4848, %v4848
        %v4881 = vpack.c.b16 %v4849, %v4849
        %s4914 = scalar_lea.vmem %s553, 128 [#allocation19]
        %4915 = vst [vmem:[%s4914] sm:$0xf] %v4850
        %4916 = vst [vmem:[%s4914 + $0x4] sm:$0xf] %v4851
        %4917 = vst [vmem:[%s4914 + $0x8] sm:$0xf] %v4852
        %4918 = vst [vmem:[%s4914 + $0xc] sm:$0xf] %v4853
        %4919 = vst [vmem:[%s4914 + $0x10] sm:$0xf] %v4854
        %4920 = vst [vmem:[%s4914 + $0x14] sm:$0xf] %v4855
        %4921 = vst [vmem:[%s4914 + $0x18] sm:$0xf] %v4856
        %4922 = vst [vmem:[%s4914 + $0x1c] sm:$0xf] %v4857
        %4923 = vst [vmem:[%s4914 + $0x20] sm:$0xf] %v4858
        %4924 = vst [vmem:[%s4914 + $0x24] sm:$0xf] %v4859
        %4925 = vst [vmem:[%s4914 + $0x28] sm:$0xf] %v4860
        %4926 = vst [vmem:[%s4914 + $0x2c] sm:$0xf] %v4861
        %4927 = vst [vmem:[%s4914 + $0x30] sm:$0xf] %v4862
        %4928 = vst [vmem:[%s4914 + $0x34] sm:$0xf] %v4863
        %4929 = vst [vmem:[%s4914 + $0x38] sm:$0xf] %v4864
        %4930 = vst [vmem:[%s4914 + $0x3c] sm:$0xf] %v4865
        %4931 = vst [vmem:[%s4914 + $0x40] sm:$0xf] %v4866
        %4932 = vst [vmem:[%s4914 + $0x44] sm:$0xf] %v4867
        %4933 = vst [vmem:[%s4914 + $0x48] sm:$0xf] %v4868
        %4934 = vst [vmem:[%s4914 + $0x4c] sm:$0xf] %v4869
        %4935 = vst [vmem:[%s4914 + $0x50] sm:$0xf] %v4870
        %4936 = vst [vmem:[%s4914 + $0x54] sm:$0xf] %v4871
        %4937 = vst [vmem:[%s4914 + $0x58] sm:$0xf] %v4872
        %4938 = vst [vmem:[%s4914 + $0x5c] sm:$0xf] %v4873
        %4939 = vst [vmem:[%s4914 + $0x60] sm:$0xf] %v4874
        %4940 = vst [vmem:[%s4914 + $0x64] sm:$0xf] %v4875
        %4941 = vst [vmem:[%s4914 + $0x68] sm:$0xf] %v4876
        %4942 = vst [vmem:[%s4914 + $0x6c] sm:$0xf] %v4877
        %4943 = vst [vmem:[%s4914 + $0x70] sm:$0xf] %v4878
        %4944 = vst [vmem:[%s4914 + $0x74] sm:$0xf] %v4879
        %4945 = vst [vmem:[%s4914 + $0x78] sm:$0xf] %v4880
        %4946 = vst [vmem:[%s4914 + $0x7c] sm:$0xf] %v4881
        %s4947 = sand.u32 %s204, 1
        %s4948 = scalar_lea.sflag [#allocation6], %s4947
        %s4949 = sand.u32 %s204, 1
        %s4950 = smul.addr %s4949, 256
        %s4951 = scalar_lea.vmem [#allocation15], %s4950
        %s4952 = sand.u32 %s45, 1
        %s4953 = scalar_lea.sflag [#allocation17], %s4952
        %s4954 = sand.u32 %s230, 1
        %s4955 = smul.addr %s4954, 256
        %s4956 = scalar_lea.vmem [#allocation16], %s4955
        %s4957 = sand.u32 %s45, 1
        %s4958 = scalar_lea.sflag [#allocation17], %s4957
        %s4959 = sand.u32 %s256, 1
        %s4960 = smul.addr %s4959, 256
        %s4961 = scalar_lea.vmem [#allocation18], %s4960
        %s4962 = sand.u32 %s282, 1
        %s4963 = scalar_lea.sflag [#allocation20], %s4962
        %s4964 = sand.u32 %s282, 1
        %s4965 = smul.addr %s4964, 256
        %s4966 = scalar_lea.vmem [#allocation19], %s4965
        // Predicated region
        $region69: #{tpu_custom_call.1} parent=43 // pred_check
          %p4967 = pneg %p214
        $region70: #{tpu_custom_call.1} parent=43 // pred_check_branch
          %4969 = sbr.rel (%p4967) target = $region72
        $region71: #{tpu_custom_call.1} parent=43 // pred_region
          %s4970 = smul.u32 32, %s45
          %s4972 = ssub.s32 4096, 4096
          %4973 = vsyncadd %s4948, %s4972
          %s4974 = smul.addr %s4970, 128
          %s4975 = scalar_lea.hbm %s7, %s4974
          %s4976 = sshll.u32 %s4951, 4
          %s4977 = int_to_ptr.vmem [resolvable:$true] %s4976
          %4982 = dma.vmem_to_hbm [thread:$0]  %s4977, 4096, %s4975, %s4948, 128, 128, 8
        $region72: #{tpu_custom_call.1} parent=43 // pred_fallthru
          _
        // Predicated region
        $region73: #{tpu_custom_call.1} parent=43 // pred_check
          %p4983 = pneg %p240
        $region74: #{tpu_custom_call.1} parent=43 // pred_check_branch
          %4985 = sbr.rel (%p4983) target = $region76
        $region75: #{tpu_custom_call.1} parent=43 // pred_region
          #allocation22 [shape = 'u32[6]{0}', space=smem, size = 0x18, scoped, tag = 'DMA stride descriptor']
          %s4986 = smul.u32 32, %s45
          %s4988 = ssub.s32 4096, 4096
          %4989 = vsyncadd %s4953, %s4988
          %s4990 = smul.addr %s4986, 64
          %s4991 = scalar_lea.hbm %s8, %s4990
          %s4993 = sshll.u32 1, 14
          %s4994 = sxor.u32 4294967295, %s4993
          %s4997 = sshll.u32 7, 18
          %s4998 = sxor.u32 4294967295, %s4997
          %s4999 = sand.u32 0, %s4998
          %s5001 = sor.u32 %s4999, 0
          %s5002 = sshll.u32 %s4956, 4
          %s5003 = int_to_ptr.vmem [resolvable:$true] %s5002
          %5009 = sst [smem:[#allocation22]] 2048
          %s5010 = scalar_lea.smem [#allocation22], 1
          %5011 = sst [smem:[%s5010]] 4096
          %s5012 = scalar_lea.smem [#allocation22], 2
          %5013 = sst [smem:[%s5012]] 32
          %s5014 = scalar_lea.smem [#allocation22], 3
          %5015 = sst [smem:[%s5014]] 64
          %s5016 = scalar_lea.smem [#allocation22], 4
          %5017 = sst [smem:[%s5016]] 64
          %s5018 = scalar_lea.smem [#allocation22], 5
          %5019 = sst [smem:[%s5018]] 4
          %5021 = dma.general %s5003, 4096, %s4991, %s4953, 131072, [#allocation22], %s5001, 0
        $region76: #{tpu_custom_call.1} parent=43 // pred_fallthru
          _
        // Predicated region
        $region77: #{tpu_custom_call.1} parent=43 // pred_check
          %p5022 = pneg %p266
        $region78: #{tpu_custom_call.1} parent=43 // pred_check_branch
          %5024 = sbr.rel (%p5022) target = $region80
        $region79: #{tpu_custom_call.1} parent=43 // pred_region
          #allocation24 [shape = 'u32[6]{0}', space=smem, size = 0x18, scoped, tag = 'DMA stride descriptor']
          %s5025 = smul.u32 32, %s45
          %s5027 = ssub.s32 4096, 4096
          %5028 = vsyncadd %s4958, %s5027
          %s5029 = smul.addr %s5025, 64
          %s5030 = scalar_lea.hbm %s9, %s5029
          %s5032 = sshll.u32 1, 14
          %s5033 = sxor.u32 4294967295, %s5032
          %s5036 = sshll.u32 7, 18
          %s5037 = sxor.u32 4294967295, %s5036
          %s5038 = sand.u32 0, %s5037
          %s5040 = sor.u32 %s5038, 0
          %s5041 = sshll.u32 %s4961, 4
          %s5042 = int_to_ptr.vmem [resolvable:$true] %s5041
          %5048 = sst [smem:[#allocation24]] 2048
          %s5049 = scalar_lea.smem [#allocation24], 1
          %5050 = sst [smem:[%s5049]] 4096
          %s5051 = scalar_lea.smem [#allocation24], 2
          %5052 = sst [smem:[%s5051]] 32
          %s5053 = scalar_lea.smem [#allocation24], 3
          %5054 = sst [smem:[%s5053]] 64
          %s5055 = scalar_lea.smem [#allocation24], 4
          %5056 = sst [smem:[%s5055]] 64
          %s5057 = scalar_lea.smem [#allocation24], 5
          %5058 = sst [smem:[%s5057]] 4
          %5060 = dma.general %s5042, 4096, %s5030, %s4958, 131072, [#allocation24], %s5040, 0
        $region80: #{tpu_custom_call.1} parent=43 // pred_fallthru
          _
        // Predicated region
        $region81: #{tpu_custom_call.1} parent=43 // pred_check
          %p5061 = pneg %p292
        $region82: #{tpu_custom_call.1} parent=43 // pred_check_branch
          %5063 = sbr.rel (%p5061) target = $region84
        $region83: #{tpu_custom_call.1} parent=43 // pred_region
          #allocation26 [shape = 'u32[6]{0}', space=smem, size = 0x18, scoped, tag = 'DMA stride descriptor']
          %s5064 = smul.u32 32, %s45
          %s5066 = ssub.s32 4096, 4096
          %5067 = vsyncadd %s4963, %s5066
          %s5068 = smul.addr %s5064, 64
          %s5069 = scalar_lea.hbm %s10, %s5068
          %s5071 = sshll.u32 1, 14
          %s5072 = sxor.u32 4294967295, %s5071
          %s5075 = sshll.u32 7, 18
          %s5076 = sxor.u32 4294967295, %s5075
          %s5077 = sand.u32 0, %s5076
          %s5079 = sor.u32 %s5077, 0
          %s5080 = sshll.u32 %s4966, 4
          %s5081 = int_to_ptr.vmem [resolvable:$true] %s5080
          %5087 = sst [smem:[#allocation26]] 2048
          %s5088 = scalar_lea.smem [#allocation26], 1
          %5089 = sst [smem:[%s5088]] 4096
          %s5090 = scalar_lea.smem [#allocation26], 2
          %5091 = sst [smem:[%s5090]] 32
          %s5092 = scalar_lea.smem [#allocation26], 3
          %5093 = sst [smem:[%s5092]] 64
          %s5094 = scalar_lea.smem [#allocation26], 4
          %5095 = sst [smem:[%s5094]] 64
          %s5096 = scalar_lea.smem [#allocation26], 5
          %5097 = sst [smem:[%s5096]] 4
          %5099 = dma.general %s5081, 4096, %s5069, %s4963, 131072, [#allocation26], %s5079, 0
        $region84: #{tpu_custom_call.1} parent=43 // pred_fallthru
          _
      $region44: #{tpu_custom_call.1} parent=5 // pred_fallthru
        _
      %p5100 = scmp.le.s32.totalorder 2, %s40
      // Predicated region
      $region85: #{tpu_custom_call.1} parent=5 // pred_check
        %p5101 = pneg %p5100
      $region86: #{tpu_custom_call.1} parent=5 // pred_check_branch
        %5103 = sbr.rel (%p5101) target = $region88
      $region87: #{tpu_custom_call.1} parent=5 // pred_region
        %s5104 = ssub.s32 %s40, 2
        // Predicated region
        $region89: #{tpu_custom_call.1} parent=87 // pred_check
          %p5105 = pneg %p220
        $region90: #{tpu_custom_call.1} parent=87 // pred_check_branch
          %5107 = sbr.rel (%p5105) target = $region92
        $region91: #{tpu_custom_call.1} parent=87 // pred_region
          %s5108 = sand.u32 %s205, 1
          %s5109 = scalar_lea.sflag [#allocation6], %s5108
          %s5110 = sand.u32 %s205, 1
          %s5111 = smul.addr %s5110, 256
          %s5112 = scalar_lea.vmem [#allocation15], %s5111
          %5113 = dma.done %s5109, 4096
        $region92: #{tpu_custom_call.1} parent=87 // pred_fallthru
          _
        // Predicated region
        $region93: #{tpu_custom_call.1} parent=87 // pred_check
          %p5114 = pneg %p246
        $region94: #{tpu_custom_call.1} parent=87 // pred_check_branch
          %5116 = sbr.rel (%p5114) target = $region96
        $region95: #{tpu_custom_call.1} parent=87 // pred_region
          %s5117 = sand.u32 %s46, 1
          %s5118 = scalar_lea.sflag [#allocation17], %s5117
          %s5119 = sand.u32 %s231, 1
          %s5120 = smul.addr %s5119, 256
          %s5121 = scalar_lea.vmem [#allocation16], %s5120
          %5122 = dma.done %s5118, 4096
        $region96: #{tpu_custom_call.1} parent=87 // pred_fallthru
          _
        // Predicated region
        $region97: #{tpu_custom_call.1} parent=87 // pred_check
          %p5123 = pneg %p272
        $region98: #{tpu_custom_call.1} parent=87 // pred_check_branch
          %5125 = sbr.rel (%p5123) target = $region100
        $region99: #{tpu_custom_call.1} parent=87 // pred_region
          %s5126 = sand.u32 %s46, 1
          %s5127 = scalar_lea.sflag [#allocation17], %s5126
          %s5128 = sand.u32 %s257, 1
          %s5129 = smul.addr %s5128, 256
          %s5130 = scalar_lea.vmem [#allocation18], %s5129
          %5131 = dma.done %s5127, 4096
        $region100: #{tpu_custom_call.1} parent=87 // pred_fallthru
          _
        // Predicated region
        $region101: #{tpu_custom_call.1} parent=87 // pred_check
          %p5132 = pneg %p298
        $region102: #{tpu_custom_call.1} parent=87 // pred_check_branch
          %5134 = sbr.rel (%p5132) target = $region104
        $region103: #{tpu_custom_call.1} parent=87 // pred_region
          %s5135 = sand.u32 %s283, 1
          %s5136 = scalar_lea.sflag [#allocation20], %s5135
          %s5137 = sand.u32 %s283, 1
          %s5138 = smul.addr %s5137, 256
          %s5139 = scalar_lea.vmem [#allocation19], %s5138
          %5140 = dma.done %s5136, 4096
        $region104: #{tpu_custom_call.1} parent=87 // pred_fallthru
          _
      $region88: #{tpu_custom_call.1} parent=5 // pred_fallthru
        _
    $region6: #{tpu_custom_call.1} parent=1 // loop_footer
      %s44 = sadd.s32 1, %s40
    $region7: #{tpu_custom_call.1} parent=1 // loop_footer_branch
      %39 = sbr.rel target = $region3
    $region8: #{tpu_custom_call.1} parent=1 // loop_exit
      _
    %5141 = vsyncpa [#allocation5], 1
    %s5142 = scalar_lea.sflag [#allocation5], 1
    %5143 = vsyncpa %s5142, 1
    %5144 = vsyncpa [#allocation8], 1
    %s5145 = scalar_lea.sflag [#allocation8], 1
    %5146 = vsyncpa %s5145, 1
    %5147 = vsyncpa [#allocation11], 1
    %s5148 = scalar_lea.sflag [#allocation11], 1
    %5149 = vsyncpa %s5148, 1
    %5150 = vsyncpa [#allocation14], 1
    %5151 = vsyncpa [#allocation6], 1
    %s5152 = scalar_lea.sflag [#allocation6], 1
    %5153 = vsyncpa %s5152, 1
    %5154 = vsyncpa [#allocation17], 1
    %s5155 = scalar_lea.sflag [#allocation17], 1
    %5156 = vsyncpa %s5155, 1
    %5157 = vsyncpa [#allocation20], 1
    %s5158 = scalar_lea.sflag [#allocation20], 1
    %5159 = vsyncpa %s5158, 1

</llo_original>
